<compile_context>
chip_gen: v7x
topology: tpu7x:2x2x1
jax: 0.10.0
libtpu: 0.0.40
codegen_flags: <defaults>
</compile_context>

<pallas_src>
import jax
import jax.numpy as jnp
from jax import lax
from jax.experimental import pallas as pl
from jax.experimental.pallas import tpu as pltpu  # noqa: F401  (kept for TPU-specific tuning hooks)

LANE = 128
NEG = -1e30


def _round_up(x, m=LANE):
    return ((x + m - 1) // m) * m


def attn_decoder_kernel(emb_ref,                     # (T, 1, Hp)  bf16  pre-gathered embedding rows
                        h0_ref,                      # (1, Hp)     f32   initial hidden
                        enc_ref,                     # (Lp, Hp)    bf16  encoder outputs
                        w_attn_ref, b_attn_ref,      # (2Hp, Lp) bf16, (1, Lp) f32 (pad lanes -1e30)
                        w_comb_ref, b_comb_ref,      # (2Hp, Hp) bf16, (1, Hp) f32
                        w_rz_ref, b_rz_ref,          # (2Hp, 2Hp) bf16, (1, 2Hp) f32  fused r|z gates
                        w_ihn_ref, b_ihn_ref,        # (Hp, Hp) bf16, (1, Hp) f32     n gate (input)
                        w_hhn_ref, b_hhn_ref,        # (Hp, Hp) bf16, (1, Hp) f32     n gate (hidden)
                        w_out_ref, b_out_ref,        # (Hp, Vp) bf16, (1, Vp) f32 (pad lanes -1e30)
                        logp_ref,                    # out (T, 1, Vp) f32
                        h_out_ref,                   # out (1, Hp)    f32
                        attn_ref):                   # out (T, 1, Lp) f32
    T = emb_ref.shape[0]
    Hp = h0_ref.shape[1]

    # TODO(synk): nn.Dropout(p=0.1) is identity in eval mode; training-mode mask not implemented.

    def step(t, h):                                  # h: (1, Hp) f32 loop carry
        embedded = emb_ref[t]                        # (1, Hp) bf16
        h_bf = h.astype(jnp.bfloat16)

        # attn_weights = softmax(Linear([embedded | hidden]))  -- fused K = 2Hp matmul.
        eh = jnp.concatenate([embedded, h_bf], axis=1)                        # (1, 2Hp) lane-aligned
        attn_logits = (jnp.dot(eh, w_attn_ref[...], preferred_element_type=jnp.float32)
                       + b_attn_ref[...])                                     # (1, Lp); pad lanes ~ -1e30
        m = jnp.max(attn_logits, axis=1, keepdims=True)
        e = jnp.exp(attn_logits - m)
        attn_w = e * pl.reciprocal(jnp.sum(e, axis=1, keepdims=True), approx=True)
        attn_ref[t] = attn_w

        # attn_applied = attn_weights @ encoder_outputs
        attn_applied = jnp.dot(attn_w.astype(jnp.bfloat16), enc_ref[...],
                               preferred_element_type=jnp.float32)            # (1, Hp) f32

        # attn_combine + relu  -- fused K = 2Hp matmul.
        ea = jnp.concatenate([embedded, attn_applied.astype(jnp.bfloat16)], axis=1)
        x = (jnp.dot(ea, w_comb_ref[...], preferred_element_type=jnp.float32)
             + b_comb_ref[...])
        x = jnp.maximum(x, 0.0)
        x_bf = x.astype(jnp.bfloat16)

        # GRU cell (PyTorch gate order r|z|n).  r,z only ever need gi+gh -> one
        # [x | h] (1,2Hp) @ (2Hp,2Hp) matmul with pre-summed biases.
        xh = jnp.concatenate([x_bf, h_bf], axis=1)                            # (1, 2Hp)
        grz = (jnp.dot(xh, w_rz_ref[...], preferred_element_type=jnp.float32)
               + b_rz_ref[...])                                               # (1, 2Hp)
        r = jax.nn.sigmoid(grz[:, :Hp])
        z = jax.nn.sigmoid(grz[:, Hp:])
        gi_n = (jnp.dot(x_bf, w_ihn_ref[...], preferred_element_type=jnp.float32)
                + b_ihn_ref[...])
        gh_n = (jnp.dot(h_bf, w_hhn_ref[...], preferred_element_type=jnp.float32)
                + b_hhn_ref[...])
        n = jnp.tanh(gi_n + r * gh_n)
        h_new = (1.0 - z) * n + z * h

        # output projection + log_softmax (padded vocab lanes carry -1e30 bias).
        logits = (jnp.dot(h_new.astype(jnp.bfloat16), w_out_ref[...],
                          preferred_element_type=jnp.float32) + b_out_ref[...])
        m2 = jnp.max(logits, axis=1, keepdims=True)
        shifted = logits - m2
        lse = jnp.log(jnp.sum(jnp.exp(shifted), axis=1, keepdims=True))
        logp_ref[t] = shifted - lse
        return h_new

    h_final = lax.fori_loop(0, T, step, h0_ref[...], unroll=True)
    h_out_ref[...] = h_final


# ---------------- host-side packing helpers (one-time, tiny) ----------------

def _pad2d(w, rows, cols, dtype=jnp.bfloat16):
    out = jnp.zeros((rows, cols), jnp.float32)
    out = out.at[:w.shape[0], :w.shape[1]].set(w.astype(jnp.float32))
    return out.astype(dtype)


def _pad_bias(b, cols, fill=0.0):
    out = jnp.full((1, cols), fill, jnp.float32)
    return out.at[0, :b.shape[0]].set(b.astype(jnp.float32))


def _pack_cat_weight(w, H, Hp, out_cols, out_cols_p):
    """PyTorch Linear weight (out, 2H) acting on cat([a, b]) -> (2Hp, out_cols_p) bf16.

    Rows [0:H] multiply the a-half (lanes [0:Hp) of the concatenated LHS);
    rows [Hp:Hp+H] multiply the b-half (lanes [Hp:2Hp))."""
    wt = w.T.astype(jnp.float32)                     # (2H, out_cols)
    wp = jnp.zeros((2 * Hp, out_cols_p), jnp.float32)
    wp = wp.at[:H, :out_cols].set(wt[:H])
    wp = wp.at[Hp:Hp + H, :out_cols].set(wt[H:])
    return wp.astype(jnp.bfloat16)


def _pack_gru_fused(w_ih, b_ih, w_hh, b_hh, H, Hp):
    """PyTorch GRU weights (3H, H), gate order [r|z|n].

    Returns:
      w_rz (2Hp, 2Hp) bf16 : rows [0:H]=x-half, [Hp:Hp+H]=h-half;
                             cols [0:Hp)=r gate, [Hp:2Hp)=z gate
      b_rz (1, 2Hp) f32    : b_ih + b_hh for r,z
      w_ihn, w_hhn (Hp, Hp) bf16 and b_ihn, b_hhn (1, Hp) f32 for the n gate.
    """
    wi = w_ih.T.astype(jnp.float32)                  # (H, 3H)
    wh = w_hh.T.astype(jnp.float32)                  # (H, 3H)
    w_rz = jnp.zeros((2 * Hp, 2 * Hp), jnp.float32)
    b_rz = jnp.zeros((1, 2 * Hp), jnp.float32)
    for g, col0 in ((0, 0), (1, Hp)):                # r -> lanes [0:Hp), z -> lanes [Hp:2Hp)
        w_rz = w_rz.at[:H, col0:col0 + H].set(wi[:, g * H:(g + 1) * H])
        w_rz = w_rz.at[Hp:Hp + H, col0:col0 + H].set(wh[:, g * H:(g + 1) * H])
        b_rz = b_rz.at[0, col0:col0 + H].set(
            (b_ih[g * H:(g + 1) * H] + b_hh[g * H:(g + 1) * H]).astype(jnp.float32))
    w_ihn = _pad2d(wi[:, 2 * H:3 * H], Hp, Hp)
    w_hhn = _pad2d(wh[:, 2 * H:3 * H], Hp, Hp)
    b_ihn = _pad_bias(b_ih[2 * H:3 * H], Hp)
    b_hhn = _pad_bias(b_hh[2 * H:3 * H], Hp)
    return w_rz.astype(jnp.bfloat16), b_rz, w_ihn, w_hhn, b_ihn, b_hhn


def attn_decoder_forward(tokens, hidden, encoder_outputs, params):
    """Run T teacher-forced AttnDecoderRNN steps in one Pallas kernel call.

    tokens: (T,) int32 decoder input ids (T=1 == one forward() of the module)
    hidden: (1, 1, H) f32, encoder_outputs: (L, H) f32.
    Returns (log_probs (T, V), hidden (1, 1, H), attn_weights (T, L)).
    """
    H = hidden.shape[-1]
    L = encoder_outputs.shape[0]
    V = params["emb"].shape[0]
    T = int(tokens.shape[0])
    Hp, Lp, Vp = _round_up(H), _round_up(L), _round_up(V)

    # Embedding: pre-gather the T rows host-side (tiny), pad lanes, cast to bf16.
    # TODO(synk): nn.Embedding raises on out-of-range ids; we clamp instead.
    toks = jnp.clip(tokens.astype(jnp.int32), 0, V - 1)
    emb_rows = (jnp.zeros((T, 1, Hp), jnp.float32)
                .at[:, 0, :H].set(params["emb"].astype(jnp.float32)[toks])
                .astype(jnp.bfloat16))

    h0 = _pad2d(hidden.reshape(1, H), 1, Hp, dtype=jnp.float32)
    enc = _pad2d(encoder_outputs, Lp, Hp)                         # bf16

    w_attn = _pack_cat_weight(params["w_attn"], H, Hp, L, Lp)     # (2Hp, Lp) bf16
    b_attn = _pad_bias(params["b_attn"], Lp, fill=NEG)
    w_comb = _pack_cat_weight(params["w_comb"], H, Hp, H, Hp)     # (2Hp, Hp) bf16
    b_comb = _pad_bias(params["b_comb"], Hp)

    w_rz, b_rz, w_ihn, w_hhn, b_ihn, b_hhn = _pack_gru_fused(
        params["w_ih"], params["b_ih"], params["w_hh"], params["b_hh"], H, Hp)

    w_out = _pad2d(params["w_out"].T, Hp, Vp)                     # bf16
    b_out = _pad_bias(params["b_out"], Vp, fill=NEG)

    # Single kernel invocation; all operands are tiny (<1 MB total) and live in
    # VMEM for the whole T-step recurrence; outputs write back once.
    logp3, h_fin, attn3 = pl.pallas_call(
        attn_decoder_kernel,
        out_shape=(
            jax.ShapeDtypeStruct((T, 1, Vp), jnp.float32),
            jax.ShapeDtypeStruct((1, Hp), jnp.float32),
            jax.ShapeDtypeStruct((T, 1, Lp), jnp.float32),
        ),
    )(emb_rows, h0, enc,
      w_attn, b_attn, w_comb, b_comb,
      w_rz, b_rz, w_ihn, b_ihn, w_hhn, b_hhn,
      w_out, b_out)

    return logp3[:, 0, :V], h_fin[:, :H].reshape(1, 1, H), attn3[:, 0, :L]


def init_params(key, hidden_size, output_size, max_length):
    """Parameters in PyTorch layout (Linear.weight = (out, in); GRU gates [r|z|n])."""
    H, V, L = hidden_size, output_size, max_length
    keys = jax.random.split(key, 11)
    s = 0.1
    return {
        "emb":    jax.random.normal(keys[0], (V, H), jnp.float32) * s,       # nn.Embedding
        "w_attn": jax.random.normal(keys[1], (L, 2 * H), jnp.float32) * s,   # Linear(2H->L)
        "b_attn": jax.random.normal(keys[2], (L,), jnp.float32) * s,
        "w_comb": jax.random.normal(keys[3], (H, 2 * H), jnp.float32) * s,   # Linear(2H->H)
        "b_comb": jax.random.normal(keys[4], (H,), jnp.float32) * s,
        "w_ih":   jax.random.normal(keys[5], (3 * H, H), jnp.float32) * s,   # GRU weight_ih_l0
        "b_ih":   jax.random.normal(keys[6], (3 * H,), jnp.float32) * s,
        "w_hh":   jax.random.normal(keys[7], (3 * H, H), jnp.float32) * s,   # GRU weight_hh_l0
        "b_hh":   jax.random.normal(keys[8], (3 * H,), jnp.float32) * s,
        "w_out":  jax.random.normal(keys[9], (V, H), jnp.float32) * s,       # Linear(H->V)
        "b_out":  jax.random.normal(keys[10], (V,), jnp.float32) * s,
    }


def reference_forward(tokens, hidden, encoder_outputs, p):
    """Pure-JAX f32 reference matching the PyTorch module step-by-step."""
    H = hidden.shape[-1]
    h = hidden.reshape(1, H)
    logps, attns = [], []
    for t in range(int(tokens.shape[0])):
        emb = p["emb"][tokens[t]][None, :]
        aw = jax.nn.softmax(
            jnp.concatenate([emb, h], axis=1) @ p["w_attn"].T + p["b_attn"][None, :], axis=1)
        applied = aw @ encoder_outputs
        x = jax.nn.relu(
            jnp.concatenate([emb, applied], axis=1) @ p["w_comb"].T + p["b_comb"][None, :])
        gi = x @ p["w_ih"].T + p["b_ih"][None, :]
        gh = h @ p["w_hh"].T + p["b_hh"][None, :]
        r = jax.nn.sigmoid(gi[:, :H] + gh[:, :H])
        z = jax.nn.sigmoid(gi[:, H:2 * H] + gh[:, H:2 * H])
        n = jnp.tanh(gi[:, 2 * H:] + r * gh[:, 2 * H:])
        h = (1.0 - z) * n + z * h
        logps.append(jax.nn.log_softmax(h @ p["w_out"].T + p["b_out"][None, :], axis=1))
        attns.append(aw)
    return jnp.concatenate(logps, 0), h.reshape(1, 1, H), jnp.concatenate(attns, 0)


if __name__ == "__main__":
    hidden_size, output_size, max_length = 32, 64, 64

    key = jax.random.PRNGKey(0)
    k_param, k_enc = jax.random.split(key)
    params = init_params(k_param, hidden_size, output_size, max_length)

    tokens = jnp.array([3, 7, 0, 11], dtype=jnp.int32)            # teacher-forced decoder inputs
    T = int(tokens.shape[0])
    hidden = jnp.zeros((1, 1, hidden_size), dtype=jnp.float32)    # initHidden()
    encoder_outputs = jax.random.normal(k_enc, (max_length, hidden_size), jnp.float32)

    logp, new_hidden, attn_w = attn_decoder_forward(tokens, hidden, encoder_outputs, params)
    jax.block_until_ready((logp, new_hidden, attn_w))

    assert logp.shape == (T, output_size)
    assert new_hidden.shape == (1, 1, hidden_size)
    assert attn_w.shape == (T, max_length)

    logp_r, hidden_r, attn_r = reference_forward(tokens, hidden, encoder_outputs, params)
    assert jnp.allclose(logp, logp_r, atol=1e-2, rtol=1e-2)
    assert jnp.allclose(new_hidden, hidden_r, atol=1e-2, rtol=1e-2)
    assert jnp.allclose(attn_w, attn_r, atol=1e-2, rtol=1e-2)

    print("KERNEL_OK")
</pallas_src>

<mosaic_0001>
module attributes {stable_mosaic.version = 11 : i64} {
  func.func @attn_decoder_kernel(%arg0: memref<4x1x128xbf16, #tpu.memory_space<vmem>>, %arg1: memref<1x128xf32, #tpu.memory_space<vmem>>, %arg2: memref<128x128xbf16, #tpu.memory_space<vmem>>, %arg3: memref<256x128xbf16, #tpu.memory_space<vmem>>, %arg4: memref<1x128xf32, #tpu.memory_space<vmem>>, %arg5: memref<256x128xbf16, #tpu.memory_space<vmem>>, %arg6: memref<1x128xf32, #tpu.memory_space<vmem>>, %arg7: memref<256x256xbf16, #tpu.memory_space<vmem>>, %arg8: memref<1x256xf32, #tpu.memory_space<vmem>>, %arg9: memref<128x128xbf16, #tpu.memory_space<vmem>>, %arg10: memref<1x128xf32, #tpu.memory_space<vmem>>, %arg11: memref<128x128xbf16, #tpu.memory_space<vmem>>, %arg12: memref<1x128xf32, #tpu.memory_space<vmem>>, %arg13: memref<128x128xbf16, #tpu.memory_space<vmem>>, %arg14: memref<1x128xf32, #tpu.memory_space<vmem>>, %arg15: memref<4x1x128xf32, #tpu.memory_space<vmem>>, %arg16: memref<1x128xf32, #tpu.memory_space<vmem>>, %arg17: memref<4x1x128xf32, #tpu.memory_space<vmem>>) attributes {dimension_semantics = [], scalar_prefetch = 0 : i64, scratch_operands = 0 : i64, tpu.core_type = #tpu.core_type<tc>} {
    %c0 = arith.constant 0 : index
    %c0_0 = arith.constant 0 : index
    %0 = vector.load %arg1[%c0, %c0_0] : memref<1x128xf32, #tpu.memory_space<vmem>>, vector<1x128xf32>
    %c0_i32 = arith.constant 0 : i32
    %1 = arith.index_cast %c0_i32 : i32 to index
    %c0_1 = arith.constant 0 : index
    %c0_2 = arith.constant 0 : index
    %2 = vector.load %arg0[%1, %c0_1, %c0_2] : memref<4x1x128xbf16, #tpu.memory_space<vmem>>, vector<1x1x128xbf16>
    %3 = vector.shape_cast %2 : vector<1x1x128xbf16> to vector<1x128xbf16>
    %4 = arith.truncf %0 : vector<1x128xf32> to vector<1x128xbf16>
    %5 = tpu.concatenate %3, %4 in 1 : vector<1x128xbf16>, vector<1x128xbf16> -> vector<1x256xbf16>
    %c0_3 = arith.constant 0 : index
    %c0_4 = arith.constant 0 : index
    %6 = vector.load %arg3[%c0_3, %c0_4] : memref<256x128xbf16, #tpu.memory_space<vmem>>, vector<256x128xbf16>
    %cst = arith.constant dense<0.000000e+00> : vector<1x128xf32>
    %7 = tpu.matmul %5, %6, %cst {dimension_numbers = #tpu.dot_dimension_numbers<[1], [0], [0], [1], [0, 0, 1, 1], [], []>} : vector<1x256xbf16>, vector<256x128xbf16>, vector<1x128xf32> -> vector<1x128xf32>
    %c0_5 = arith.constant 0 : index
    %c0_6 = arith.constant 0 : index
    %8 = vector.load %arg4[%c0_5, %c0_6] : memref<1x128xf32, #tpu.memory_space<vmem>>, vector<1x128xf32>
    %9 = arith.addf %7, %8 : vector<1x128xf32>
    %cst_7 = arith.constant dense<0xFF800000> : vector<1xf32>
    %10 = vector.multi_reduction <maximumf>, %9, %cst_7 [1] : vector<1x128xf32> to vector<1xf32>
    %11 = vector.shape_cast %10 : vector<1xf32> to vector<1x1xf32>
    %12 = vector.broadcast %11 : vector<1x1xf32> to vector<1x128xf32>
    %13 = arith.subf %9, %12 : vector<1x128xf32>
    %14 = math.exp %13 : vector<1x128xf32>
    %cst_8 = arith.constant dense<0.000000e+00> : vector<1xf32>
    %15 = vector.multi_reduction <add>, %14, %cst_8 [1] : vector<1x128xf32> to vector<1xf32>
    %16 = vector.shape_cast %15 : vector<1xf32> to vector<1x1xf32>
    %17 = tpu.reciprocal %16 {approx = true} : vector<1x1xf32> -> vector<1x1xf32>
    %18 = vector.broadcast %17 : vector<1x1xf32> to vector<1x128xf32>
    %19 = arith.mulf %14, %18 : vector<1x128xf32>
    %20 = arith.index_cast %c0_i32 : i32 to index
    %c0_9 = arith.constant 0 : index
    %c0_10 = arith.constant 0 : index
    %21 = vector.load %arg17[%20, %c0_9, %c0_10] : memref<4x1x128xf32, #tpu.memory_space<vmem>>, vector<1x1x128xf32>
    %22 = vector.shape_cast %21 : vector<1x1x128xf32> to vector<1x128xf32>
    %23 = vector.shape_cast %19 : vector<1x128xf32> to vector<1x1x128xf32>
    tpu.vector_store %arg17[%20, %c0_9, %c0_10], %23 {strides = array<i32>} : memref<4x1x128xf32, #tpu.memory_space<vmem>>, vector<1x1x128xf32>,
    %24 = arith.truncf %19 : vector<1x128xf32> to vector<1x128xbf16>
    %c0_11 = arith.constant 0 : index
    %c0_12 = arith.constant 0 : index
    %25 = vector.load %arg2[%c0_11, %c0_12] : memref<128x128xbf16, #tpu.memory_space<vmem>>, vector<128x128xbf16>
    %cst_13 = arith.constant dense<0.000000e+00> : vector<1x128xf32>
    %26 = tpu.matmul %24, %25, %cst_13 {dimension_numbers = #tpu.dot_dimension_numbers<[1], [0], [0], [1], [0, 0, 1, 1], [], []>} : vector<1x128xbf16>, vector<128x128xbf16>, vector<1x128xf32> -> vector<1x128xf32>
    %27 = arith.truncf %26 : vector<1x128xf32> to vector<1x128xbf16>
    %28 = tpu.concatenate %3, %27 in 1 : vector<1x128xbf16>, vector<1x128xbf16> -> vector<1x256xbf16>
    %c0_14 = arith.constant 0 : index
    %c0_15 = arith.constant 0 : index
    %29 = vector.load %arg5[%c0_14, %c0_15] : memref<256x128xbf16, #tpu.memory_space<vmem>>, vector<256x128xbf16>
    %cst_16 = arith.constant dense<0.000000e+00> : vector<1x128xf32>
    %30 = tpu.matmul %28, %29, %cst_16 {dimension_numbers = #tpu.dot_dimension_numbers<[1], [0], [0], [1], [0, 0, 1, 1], [], []>} : vector<1x256xbf16>, vector<256x128xbf16>, vector<1x128xf32> -> vector<1x128xf32>
    %c0_17 = arith.constant 0 : index
    %c0_18 = arith.constant 0 : index
    %31 = vector.load %arg6[%c0_17, %c0_18] : memref<1x128xf32, #tpu.memory_space<vmem>>, vector<1x128xf32>
    %32 = arith.addf %30, %31 : vector<1x128xf32>
    %cst_19 = arith.constant 0.000000e+00 : f32
    %33 = vector.broadcast %cst_19 : f32 to vector<1x128xf32>
    %34 = arith.maximumf %32, %33 : vector<1x128xf32>
    %35 = arith.truncf %34 : vector<1x128xf32> to vector<1x128xbf16>
    %36 = tpu.concatenate %35, %4 in 1 : vector<1x128xbf16>, vector<1x128xbf16> -> vector<1x256xbf16>
    %c0_20 = arith.constant 0 : index
    %c0_21 = arith.constant 0 : index
    %37 = vector.load %arg7[%c0_20, %c0_21] : memref<256x256xbf16, #tpu.memory_space<vmem>>, vector<256x256xbf16>
    %cst_22 = arith.constant dense<0.000000e+00> : vector<1x256xf32>
    %38 = tpu.matmul %36, %37, %cst_22 {dimension_numbers = #tpu.dot_dimension_numbers<[1], [0], [0], [1], [0, 0, 1, 1], [], []>} : vector<1x256xbf16>, vector<256x256xbf16>, vector<1x256xf32> -> vector<1x256xf32>
    %c0_23 = arith.constant 0 : index
    %c0_24 = arith.constant 0 : index
    %39 = vector.load %arg8[%c0_23, %c0_24] : memref<1x256xf32, #tpu.memory_space<vmem>>, vector<1x256xf32>
    %40 = arith.addf %38, %39 : vector<1x256xf32>
    %41 = vector.extract_strided_slice %40 {offsets = [0, 0], sizes = [1, 128], strides = [1, 1]} : vector<1x256xf32> to vector<1x128xf32>
    %42 = arith.negf %41 : vector<1x128xf32>
    %43 = math.exp %42 : vector<1x128xf32>
    %cst_25 = arith.constant 1.000000e+00 : f32
    %44 = vector.broadcast %cst_25 : f32 to vector<1x128xf32>
    %45 = arith.addf %44, %43 : vector<1x128xf32>
    %46 = arith.divf %44, %45 : vector<1x128xf32>
    %47 = vector.extract_strided_slice %40 {offsets = [0, 128], sizes = [1, 128], strides = [1, 1]} : vector<1x256xf32> to vector<1x128xf32>
    %48 = arith.negf %47 : vector<1x128xf32>
    %49 = math.exp %48 : vector<1x128xf32>
    %cst_26 = arith.constant 1.000000e+00 : f32
    %50 = vector.broadcast %cst_26 : f32 to vector<1x128xf32>
    %51 = arith.addf %50, %49 : vector<1x128xf32>
    %52 = arith.divf %50, %51 : vector<1x128xf32>
    %c0_27 = arith.constant 0 : index
    %c0_28 = arith.constant 0 : index
    %53 = vector.load %arg9[%c0_27, %c0_28] : memref<128x128xbf16, #tpu.memory_space<vmem>>, vector<128x128xbf16>
    %cst_29 = arith.constant dense<0.000000e+00> : vector<1x128xf32>
    %54 = tpu.matmul %35, %53, %cst_29 {dimension_numbers = #tpu.dot_dimension_numbers<[1], [0], [0], [1], [0, 0, 1, 1], [], []>} : vector<1x128xbf16>, vector<128x128xbf16>, vector<1x128xf32> -> vector<1x128xf32>
    %c0_30 = arith.constant 0 : index
    %c0_31 = arith.constant 0 : index
    %55 = vector.load %arg10[%c0_30, %c0_31] : memref<1x128xf32, #tpu.memory_space<vmem>>, vector<1x128xf32>
    %56 = arith.addf %54, %55 : vector<1x128xf32>
    %c0_32 = arith.constant 0 : index
    %c0_33 = arith.constant 0 : index
    %57 = vector.load %arg11[%c0_32, %c0_33] : memref<128x128xbf16, #tpu.memory_space<vmem>>, vector<128x128xbf16>
    %cst_34 = arith.constant dense<0.000000e+00> : vector<1x128xf32>
    %58 = tpu.matmul %4, %57, %cst_34 {dimension_numbers = #tpu.dot_dimension_numbers<[1], [0], [0], [1], [0, 0, 1, 1], [], []>} : vector<1x128xbf16>, vector<128x128xbf16>, vector<1x128xf32> -> vector<1x128xf32>
    %c0_35 = arith.constant 0 : index
    %c0_36 = arith.constant 0 : index
    %59 = vector.load %arg12[%c0_35, %c0_36] : memref<1x128xf32, #tpu.memory_space<vmem>>, vector<1x128xf32>
    %60 = arith.addf %58, %59 : vector<1x128xf32>
    %61 = arith.mulf %46, %60 : vector<1x128xf32>
    %62 = arith.addf %56, %61 : vector<1x128xf32>
    %63 = math.tanh %62 : vector<1x128xf32>
    %cst_37 = arith.constant 1.000000e+00 : f32
    %64 = vector.broadcast %cst_37 : f32 to vector<1x128xf32>
    %65 = arith.subf %64, %52 : vector<1x128xf32>
    %66 = arith.mulf %65, %63 : vector<1x128xf32>
    %67 = arith.mulf %52, %0 : vector<1x128xf32>
    %68 = arith.addf %66, %67 : vector<1x128xf32>
    %69 = arith.truncf %68 : vector<1x128xf32> to vector<1x128xbf16>
    %c0_38 = arith.constant 0 : index
    %c0_39 = arith.constant 0 : index
    %70 = vector.load %arg13[%c0_38, %c0_39] : memref<128x128xbf16, #tpu.memory_space<vmem>>, vector<128x128xbf16>
    %cst_40 = arith.constant dense<0.000000e+00> : vector<1x128xf32>
    %71 = tpu.matmul %69, %70, %cst_40 {dimension_numbers = #tpu.dot_dimension_numbers<[1], [0], [0], [1], [0, 0, 1, 1], [], []>} : vector<1x128xbf16>, vector<128x128xbf16>, vector<1x128xf32> -> vector<1x128xf32>
    %c0_41 = arith.constant 0 : index
    %c0_42 = arith.constant 0 : index
    %72 = vector.load %arg14[%c0_41, %c0_42] : memref<1x128xf32, #tpu.memory_space<vmem>>, vector<1x128xf32>
    %73 = arith.addf %71, %72 : vector<1x128xf32>
    %cst_43 = arith.constant dense<0xFF800000> : vector<1xf32>
    %74 = vector.multi_reduction <maximumf>, %73, %cst_43 [1] : vector<1x128xf32> to vector<1xf32>
    %75 = vector.shape_cast %74 : vector<1xf32> to vector<1x1xf32>
    %76 = vector.broadcast %75 : vector<1x1xf32> to vector<1x128xf32>
    %77 = arith.subf %73, %76 : vector<1x128xf32>
    %78 = math.exp %77 : vector<1x128xf32>
    %cst_44 = arith.constant dense<0.000000e+00> : vector<1xf32>
    %79 = vector.multi_reduction <add>, %78, %cst_44 [1] : vector<1x128xf32> to vector<1xf32>
    %80 = vector.shape_cast %79 : vector<1xf32> to vector<1x1xf32>
    %81 = math.log %80 : vector<1x1xf32>
    %82 = vector.broadcast %81 : vector<1x1xf32> to vector<1x128xf32>
    %83 = arith.subf %77, %82 : vector<1x128xf32>
    %84 = arith.index_cast %c0_i32 : i32 to index
    %c0_45 = arith.constant 0 : index
    %c0_46 = arith.constant 0 : index
    %85 = vector.load %arg15[%84, %c0_45, %c0_46] : memref<4x1x128xf32, #tpu.memory_space<vmem>>, vector<1x1x128xf32>
    %86 = vector.shape_cast %85 : vector<1x1x128xf32> to vector<1x128xf32>
    %87 = vector.shape_cast %83 : vector<1x128xf32> to vector<1x1x128xf32>
    tpu.vector_store %arg15[%84, %c0_45, %c0_46], %87 {strides = array<i32>} : memref<4x1x128xf32, #tpu.memory_space<vmem>>, vector<1x1x128xf32>,
    %c1_i32 = arith.constant 1 : i32
    %88 = arith.index_cast %c1_i32 : i32 to index
    %c0_47 = arith.constant 0 : index
    %c0_48 = arith.constant 0 : index
    %89 = vector.load %arg0[%88, %c0_47, %c0_48] : memref<4x1x128xbf16, #tpu.memory_space<vmem>>, vector<1x1x128xbf16>
    %90 = vector.shape_cast %89 : vector<1x1x128xbf16> to vector<1x128xbf16>
    %91 = arith.truncf %68 : vector<1x128xf32> to vector<1x128xbf16>
    %92 = tpu.concatenate %90, %91 in 1 : vector<1x128xbf16>, vector<1x128xbf16> -> vector<1x256xbf16>
    %c0_49 = arith.constant 0 : index
    %c0_50 = arith.constant 0 : index
    %93 = vector.load %arg3[%c0_49, %c0_50] : memref<256x128xbf16, #tpu.memory_space<vmem>>, vector<256x128xbf16>
    %cst_51 = arith.constant dense<0.000000e+00> : vector<1x128xf32>
    %94 = tpu.matmul %92, %93, %cst_51 {dimension_numbers = #tpu.dot_dimension_numbers<[1], [0], [0], [1], [0, 0, 1, 1], [], []>} : vector<1x256xbf16>, vector<256x128xbf16>, vector<1x128xf32> -> vector<1x128xf32>
    %c0_52 = arith.constant 0 : index
    %c0_53 = arith.constant 0 : index
    %95 = vector.load %arg4[%c0_52, %c0_53] : memref<1x128xf32, #tpu.memory_space<vmem>>, vector<1x128xf32>
    %96 = arith.addf %94, %95 : vector<1x128xf32>
    %cst_54 = arith.constant dense<0xFF800000> : vector<1xf32>
    %97 = vector.multi_reduction <maximumf>, %96, %cst_54 [1] : vector<1x128xf32> to vector<1xf32>
    %98 = vector.shape_cast %97 : vector<1xf32> to vector<1x1xf32>
    %99 = vector.broadcast %98 : vector<1x1xf32> to vector<1x128xf32>
    %100 = arith.subf %96, %99 : vector<1x128xf32>
    %101 = math.exp %100 : vector<1x128xf32>
    %cst_55 = arith.constant dense<0.000000e+00> : vector<1xf32>
    %102 = vector.multi_reduction <add>, %101, %cst_55 [1] : vector<1x128xf32> to vector<1xf32>
    %103 = vector.shape_cast %102 : vector<1xf32> to vector<1x1xf32>
    %104 = tpu.reciprocal %103 {approx = true} : vector<1x1xf32> -> vector<1x1xf32>
    %105 = vector.broadcast %104 : vector<1x1xf32> to vector<1x128xf32>
    %106 = arith.mulf %101, %105 : vector<1x128xf32>
    %107 = arith.index_cast %c1_i32 : i32 to index
    %c0_56 = arith.constant 0 : index
    %c0_57 = arith.constant 0 : index
    %108 = vector.load %arg17[%107, %c0_56, %c0_57] : memref<4x1x128xf32, #tpu.memory_space<vmem>>, vector<1x1x128xf32>
    %109 = vector.shape_cast %108 : vector<1x1x128xf32> to vector<1x128xf32>
    %110 = vector.shape_cast %106 : vector<1x128xf32> to vector<1x1x128xf32>
    tpu.vector_store %arg17[%107, %c0_56, %c0_57], %110 {strides = array<i32>} : memref<4x1x128xf32, #tpu.memory_space<vmem>>, vector<1x1x128xf32>,
    %111 = arith.truncf %106 : vector<1x128xf32> to vector<1x128xbf16>
    %c0_58 = arith.constant 0 : index
    %c0_59 = arith.constant 0 : index
    %112 = vector.load %arg2[%c0_58, %c0_59] : memref<128x128xbf16, #tpu.memory_space<vmem>>, vector<128x128xbf16>
    %cst_60 = arith.constant dense<0.000000e+00> : vector<1x128xf32>
    %113 = tpu.matmul %111, %112, %cst_60 {dimension_numbers = #tpu.dot_dimension_numbers<[1], [0], [0], [1], [0, 0, 1, 1], [], []>} : vector<1x128xbf16>, vector<128x128xbf16>, vector<1x128xf32> -> vector<1x128xf32>
    %114 = arith.truncf %113 : vector<1x128xf32> to vector<1x128xbf16>
    %115 = tpu.concatenate %90, %114 in 1 : vector<1x128xbf16>, vector<1x128xbf16> -> vector<1x256xbf16>
    %c0_61 = arith.constant 0 : index
    %c0_62 = arith.constant 0 : index
    %116 = vector.load %arg5[%c0_61, %c0_62] : memref<256x128xbf16, #tpu.memory_space<vmem>>, vector<256x128xbf16>
    %cst_63 = arith.constant dense<0.000000e+00> : vector<1x128xf32>
    %117 = tpu.matmul %115, %116, %cst_63 {dimension_numbers = #tpu.dot_dimension_numbers<[1], [0], [0], [1], [0, 0, 1, 1], [], []>} : vector<1x256xbf16>, vector<256x128xbf16>, vector<1x128xf32> -> vector<1x128xf32>
    %c0_64 = arith.constant 0 : index
    %c0_65 = arith.constant 0 : index
    %118 = vector.load %arg6[%c0_64, %c0_65] : memref<1x128xf32, #tpu.memory_space<vmem>>, vector<1x128xf32>
    %119 = arith.addf %117, %118 : vector<1x128xf32>
    %cst_66 = arith.constant 0.000000e+00 : f32
    %120 = vector.broadcast %cst_66 : f32 to vector<1x128xf32>
    %121 = arith.maximumf %119, %120 : vector<1x128xf32>
    %122 = arith.truncf %121 : vector<1x128xf32> to vector<1x128xbf16>
    %123 = tpu.concatenate %122, %91 in 1 : vector<1x128xbf16>, vector<1x128xbf16> -> vector<1x256xbf16>
    %c0_67 = arith.constant 0 : index
    %c0_68 = arith.constant 0 : index
    %124 = vector.load %arg7[%c0_67, %c0_68] : memref<256x256xbf16, #tpu.memory_space<vmem>>, vector<256x256xbf16>
    %cst_69 = arith.constant dense<0.000000e+00> : vector<1x256xf32>
    %125 = tpu.matmul %123, %124, %cst_69 {dimension_numbers = #tpu.dot_dimension_numbers<[1], [0], [0], [1], [0, 0, 1, 1], [], []>} : vector<1x256xbf16>, vector<256x256xbf16>, vector<1x256xf32> -> vector<1x256xf32>
    %c0_70 = arith.constant 0 : index
    %c0_71 = arith.constant 0 : index
    %126 = vector.load %arg8[%c0_70, %c0_71] : memref<1x256xf32, #tpu.memory_space<vmem>>, vector<1x256xf32>
    %127 = arith.addf %125, %126 : vector<1x256xf32>
    %128 = vector.extract_strided_slice %127 {offsets = [0, 0], sizes = [1, 128], strides = [1, 1]} : vector<1x256xf32> to vector<1x128xf32>
    %129 = arith.negf %128 : vector<1x128xf32>
    %130 = math.exp %129 : vector<1x128xf32>
    %cst_72 = arith.constant 1.000000e+00 : f32
    %131 = vector.broadcast %cst_72 : f32 to vector<1x128xf32>
    %132 = arith.addf %131, %130 : vector<1x128xf32>
    %133 = arith.divf %131, %132 : vector<1x128xf32>
    %134 = vector.extract_strided_slice %127 {offsets = [0, 128], sizes = [1, 128], strides = [1, 1]} : vector<1x256xf32> to vector<1x128xf32>
    %135 = arith.negf %134 : vector<1x128xf32>
    %136 = math.exp %135 : vector<1x128xf32>
    %cst_73 = arith.constant 1.000000e+00 : f32
    %137 = vector.broadcast %cst_73 : f32 to vector<1x128xf32>
    %138 = arith.addf %137, %136 : vector<1x128xf32>
    %139 = arith.divf %137, %138 : vector<1x128xf32>
    %c0_74 = arith.constant 0 : index
    %c0_75 = arith.constant 0 : index
    %140 = vector.load %arg9[%c0_74, %c0_75] : memref<128x128xbf16, #tpu.memory_space<vmem>>, vector<128x128xbf16>
    %cst_76 = arith.constant dense<0.000000e+00> : vector<1x128xf32>
    %141 = tpu.matmul %122, %140, %cst_76 {dimension_numbers = #tpu.dot_dimension_numbers<[1], [0], [0], [1], [0, 0, 1, 1], [], []>} : vector<1x128xbf16>, vector<128x128xbf16>, vector<1x128xf32> -> vector<1x128xf32>
    %c0_77 = arith.constant 0 : index
    %c0_78 = arith.constant 0 : index
    %142 = vector.load %arg10[%c0_77, %c0_78] : memref<1x128xf32, #tpu.memory_space<vmem>>, vector<1x128xf32>
    %143 = arith.addf %141, %142 : vector<1x128xf32>
    %c0_79 = arith.constant 0 : index
    %c0_80 = arith.constant 0 : index
    %144 = vector.load %arg11[%c0_79, %c0_80] : memref<128x128xbf16, #tpu.memory_space<vmem>>, vector<128x128xbf16>
    %cst_81 = arith.constant dense<0.000000e+00> : vector<1x128xf32>
    %145 = tpu.matmul %91, %144, %cst_81 {dimension_numbers = #tpu.dot_dimension_numbers<[1], [0], [0], [1], [0, 0, 1, 1], [], []>} : vector<1x128xbf16>, vector<128x128xbf16>, vector<1x128xf32> -> vector<1x128xf32>
    %c0_82 = arith.constant 0 : index
    %c0_83 = arith.constant 0 : index
    %146 = vector.load %arg12[%c0_82, %c0_83] : memref<1x128xf32, #tpu.memory_space<vmem>>, vector<1x128xf32>
    %147 = arith.addf %145, %146 : vector<1x128xf32>
    %148 = arith.mulf %133, %147 : vector<1x128xf32>
    %149 = arith.addf %143, %148 : vector<1x128xf32>
    %150 = math.tanh %149 : vector<1x128xf32>
    %cst_84 = arith.constant 1.000000e+00 : f32
    %151 = vector.broadcast %cst_84 : f32 to vector<1x128xf32>
    %152 = arith.subf %151, %139 : vector<1x128xf32>
    %153 = arith.mulf %152, %150 : vector<1x128xf32>
    %154 = arith.mulf %139, %68 : vector<1x128xf32>
    %155 = arith.addf %153, %154 : vector<1x128xf32>
    %156 = arith.truncf %155 : vector<1x128xf32> to vector<1x128xbf16>
    %c0_85 = arith.constant 0 : index
    %c0_86 = arith.constant 0 : index
    %157 = vector.load %arg13[%c0_85, %c0_86] : memref<128x128xbf16, #tpu.memory_space<vmem>>, vector<128x128xbf16>
    %cst_87 = arith.constant dense<0.000000e+00> : vector<1x128xf32>
    %158 = tpu.matmul %156, %157, %cst_87 {dimension_numbers = #tpu.dot_dimension_numbers<[1], [0], [0], [1], [0, 0, 1, 1], [], []>} : vector<1x128xbf16>, vector<128x128xbf16>, vector<1x128xf32> -> vector<1x128xf32>
    %c0_88 = arith.constant 0 : index
    %c0_89 = arith.constant 0 : index
    %159 = vector.load %arg14[%c0_88, %c0_89] : memref<1x128xf32, #tpu.memory_space<vmem>>, vector<1x128xf32>
    %160 = arith.addf %158, %159 : vector<1x128xf32>
    %cst_90 = arith.constant dense<0xFF800000> : vector<1xf32>
    %161 = vector.multi_reduction <maximumf>, %160, %cst_90 [1] : vector<1x128xf32> to vector<1xf32>
    %162 = vector.shape_cast %161 : vector<1xf32> to vector<1x1xf32>
    %163 = vector.broadcast %162 : vector<1x1xf32> to vector<1x128xf32>
    %164 = arith.subf %160, %163 : vector<1x128xf32>
    %165 = math.exp %164 : vector<1x128xf32>
    %cst_91 = arith.constant dense<0.000000e+00> : vector<1xf32>
    %166 = vector.multi_reduction <add>, %165, %cst_91 [1] : vector<1x128xf32> to vector<1xf32>
    %167 = vector.shape_cast %166 : vector<1xf32> to vector<1x1xf32>
    %168 = math.log %167 : vector<1x1xf32>
    %169 = vector.broadcast %168 : vector<1x1xf32> to vector<1x128xf32>
    %170 = arith.subf %164, %169 : vector<1x128xf32>
    %171 = arith.index_cast %c1_i32 : i32 to index
    %c0_92 = arith.constant 0 : index
    %c0_93 = arith.constant 0 : index
    %172 = vector.load %arg15[%171, %c0_92, %c0_93] : memref<4x1x128xf32, #tpu.memory_space<vmem>>, vector<1x1x128xf32>
    %173 = vector.shape_cast %172 : vector<1x1x128xf32> to vector<1x128xf32>
    %174 = vector.shape_cast %170 : vector<1x128xf32> to vector<1x1x128xf32>
    tpu.vector_store %arg15[%171, %c0_92, %c0_93], %174 {strides = array<i32>} : memref<4x1x128xf32, #tpu.memory_space<vmem>>, vector<1x1x128xf32>,
    %c2_i32 = arith.constant 2 : i32
    %175 = arith.index_cast %c2_i32 : i32 to index
    %c0_94 = arith.constant 0 : index
    %c0_95 = arith.constant 0 : index
    %176 = vector.load %arg0[%175, %c0_94, %c0_95] : memref<4x1x128xbf16, #tpu.memory_space<vmem>>, vector<1x1x128xbf16>
    %177 = vector.shape_cast %176 : vector<1x1x128xbf16> to vector<1x128xbf16>
    %178 = arith.truncf %155 : vector<1x128xf32> to vector<1x128xbf16>
    %179 = tpu.concatenate %177, %178 in 1 : vector<1x128xbf16>, vector<1x128xbf16> -> vector<1x256xbf16>
    %c0_96 = arith.constant 0 : index
    %c0_97 = arith.constant 0 : index
    %180 = vector.load %arg3[%c0_96, %c0_97] : memref<256x128xbf16, #tpu.memory_space<vmem>>, vector<256x128xbf16>
    %cst_98 = arith.constant dense<0.000000e+00> : vector<1x128xf32>
    %181 = tpu.matmul %179, %180, %cst_98 {dimension_numbers = #tpu.dot_dimension_numbers<[1], [0], [0], [1], [0, 0, 1, 1], [], []>} : vector<1x256xbf16>, vector<256x128xbf16>, vector<1x128xf32> -> vector<1x128xf32>
    %c0_99 = arith.constant 0 : index
    %c0_100 = arith.constant 0 : index
    %182 = vector.load %arg4[%c0_99, %c0_100] : memref<1x128xf32, #tpu.memory_space<vmem>>, vector<1x128xf32>
    %183 = arith.addf %181, %182 : vector<1x128xf32>
    %cst_101 = arith.constant dense<0xFF800000> : vector<1xf32>
    %184 = vector.multi_reduction <maximumf>, %183, %cst_101 [1] : vector<1x128xf32> to vector<1xf32>
    %185 = vector.shape_cast %184 : vector<1xf32> to vector<1x1xf32>
    %186 = vector.broadcast %185 : vector<1x1xf32> to vector<1x128xf32>
    %187 = arith.subf %183, %186 : vector<1x128xf32>
    %188 = math.exp %187 : vector<1x128xf32>
    %cst_102 = arith.constant dense<0.000000e+00> : vector<1xf32>
    %189 = vector.multi_reduction <add>, %188, %cst_102 [1] : vector<1x128xf32> to vector<1xf32>
    %190 = vector.shape_cast %189 : vector<1xf32> to vector<1x1xf32>
    %191 = tpu.reciprocal %190 {approx = true} : vector<1x1xf32> -> vector<1x1xf32>
    %192 = vector.broadcast %191 : vector<1x1xf32> to vector<1x128xf32>
    %193 = arith.mulf %188, %192 : vector<1x128xf32>
    %194 = arith.index_cast %c2_i32 : i32 to index
    %c0_103 = arith.constant 0 : index
    %c0_104 = arith.constant 0 : index
    %195 = vector.load %arg17[%194, %c0_103, %c0_104] : memref<4x1x128xf32, #tpu.memory_space<vmem>>, vector<1x1x128xf32>
    %196 = vector.shape_cast %195 : vector<1x1x128xf32> to vector<1x128xf32>
    %197 = vector.shape_cast %193 : vector<1x128xf32> to vector<1x1x128xf32>
    tpu.vector_store %arg17[%194, %c0_103, %c0_104], %197 {strides = array<i32>} : memref<4x1x128xf32, #tpu.memory_space<vmem>>, vector<1x1x128xf32>,
    %198 = arith.truncf %193 : vector<1x128xf32> to vector<1x128xbf16>
    %c0_105 = arith.constant 0 : index
    %c0_106 = arith.constant 0 : index
    %199 = vector.load %arg2[%c0_105, %c0_106] : memref<128x128xbf16, #tpu.memory_space<vmem>>, vector<128x128xbf16>
    %cst_107 = arith.constant dense<0.000000e+00> : vector<1x128xf32>
    %200 = tpu.matmul %198, %199, %cst_107 {dimension_numbers = #tpu.dot_dimension_numbers<[1], [0], [0], [1], [0, 0, 1, 1], [], []>} : vector<1x128xbf16>, vector<128x128xbf16>, vector<1x128xf32> -> vector<1x128xf32>
    %201 = arith.truncf %200 : vector<1x128xf32> to vector<1x128xbf16>
    %202 = tpu.concatenate %177, %201 in 1 : vector<1x128xbf16>, vector<1x128xbf16> -> vector<1x256xbf16>
    %c0_108 = arith.constant 0 : index
    %c0_109 = arith.constant 0 : index
    %203 = vector.load %arg5[%c0_108, %c0_109] : memref<256x128xbf16, #tpu.memory_space<vmem>>, vector<256x128xbf16>
    %cst_110 = arith.constant dense<0.000000e+00> : vector<1x128xf32>
    %204 = tpu.matmul %202, %203, %cst_110 {dimension_numbers = #tpu.dot_dimension_numbers<[1], [0], [0], [1], [0, 0, 1, 1], [], []>} : vector<1x256xbf16>, vector<256x128xbf16>, vector<1x128xf32> -> vector<1x128xf32>
    %c0_111 = arith.constant 0 : index
    %c0_112 = arith.constant 0 : index
    %205 = vector.load %arg6[%c0_111, %c0_112] : memref<1x128xf32, #tpu.memory_space<vmem>>, vector<1x128xf32>
    %206 = arith.addf %204, %205 : vector<1x128xf32>
    %cst_113 = arith.constant 0.000000e+00 : f32
    %207 = vector.broadcast %cst_113 : f32 to vector<1x128xf32>
    %208 = arith.maximumf %206, %207 : vector<1x128xf32>
    %209 = arith.truncf %208 : vector<1x128xf32> to vector<1x128xbf16>
    %210 = tpu.concatenate %209, %178 in 1 : vector<1x128xbf16>, vector<1x128xbf16> -> vector<1x256xbf16>
    %c0_114 = arith.constant 0 : index
    %c0_115 = arith.constant 0 : index
    %211 = vector.load %arg7[%c0_114, %c0_115] : memref<256x256xbf16, #tpu.memory_space<vmem>>, vector<256x256xbf16>
    %cst_116 = arith.constant dense<0.000000e+00> : vector<1x256xf32>
    %212 = tpu.matmul %210, %211, %cst_116 {dimension_numbers = #tpu.dot_dimension_numbers<[1], [0], [0], [1], [0, 0, 1, 1], [], []>} : vector<1x256xbf16>, vector<256x256xbf16>, vector<1x256xf32> -> vector<1x256xf32>
    %c0_117 = arith.constant 0 : index
    %c0_118 = arith.constant 0 : index
    %213 = vector.load %arg8[%c0_117, %c0_118] : memref<1x256xf32, #tpu.memory_space<vmem>>, vector<1x256xf32>
    %214 = arith.addf %212, %213 : vector<1x256xf32>
    %215 = vector.extract_strided_slice %214 {offsets = [0, 0], sizes = [1, 128], strides = [1, 1]} : vector<1x256xf32> to vector<1x128xf32>
    %216 = arith.negf %215 : vector<1x128xf32>
    %217 = math.exp %216 : vector<1x128xf32>
    %cst_119 = arith.constant 1.000000e+00 : f32
    %218 = vector.broadcast %cst_119 : f32 to vector<1x128xf32>
    %219 = arith.addf %218, %217 : vector<1x128xf32>
    %220 = arith.divf %218, %219 : vector<1x128xf32>
    %221 = vector.extract_strided_slice %214 {offsets = [0, 128], sizes = [1, 128], strides = [1, 1]} : vector<1x256xf32> to vector<1x128xf32>
    %222 = arith.negf %221 : vector<1x128xf32>
    %223 = math.exp %222 : vector<1x128xf32>
    %cst_120 = arith.constant 1.000000e+00 : f32
    %224 = vector.broadcast %cst_120 : f32 to vector<1x128xf32>
    %225 = arith.addf %224, %223 : vector<1x128xf32>
    %226 = arith.divf %224, %225 : vector<1x128xf32>
    %c0_121 = arith.constant 0 : index
    %c0_122 = arith.constant 0 : index
    %227 = vector.load %arg9[%c0_121, %c0_122] : memref<128x128xbf16, #tpu.memory_space<vmem>>, vector<128x128xbf16>
    %cst_123 = arith.constant dense<0.000000e+00> : vector<1x128xf32>
    %228 = tpu.matmul %209, %227, %cst_123 {dimension_numbers = #tpu.dot_dimension_numbers<[1], [0], [0], [1], [0, 0, 1, 1], [], []>} : vector<1x128xbf16>, vector<128x128xbf16>, vector<1x128xf32> -> vector<1x128xf32>
    %c0_124 = arith.constant 0 : index
    %c0_125 = arith.constant 0 : index
    %229 = vector.load %arg10[%c0_124, %c0_125] : memref<1x128xf32, #tpu.memory_space<vmem>>, vector<1x128xf32>
    %230 = arith.addf %228, %229 : vector<1x128xf32>
    %c0_126 = arith.constant 0 : index
    %c0_127 = arith.constant 0 : index
    %231 = vector.load %arg11[%c0_126, %c0_127] : memref<128x128xbf16, #tpu.memory_space<vmem>>, vector<128x128xbf16>
    %cst_128 = arith.constant dense<0.000000e+00> : vector<1x128xf32>
    %232 = tpu.matmul %178, %231, %cst_128 {dimension_numbers = #tpu.dot_dimension_numbers<[1], [0], [0], [1], [0, 0, 1, 1], [], []>} : vector<1x128xbf16>, vector<128x128xbf16>, vector<1x128xf32> -> vector<1x128xf32>
    %c0_129 = arith.constant 0 : index
    %c0_130 = arith.constant 0 : index
    %233 = vector.load %arg12[%c0_129, %c0_130] : memref<1x128xf32, #tpu.memory_space<vmem>>, vector<1x128xf32>
    %234 = arith.addf %232, %233 : vector<1x128xf32>
    %235 = arith.mulf %220, %234 : vector<1x128xf32>
    %236 = arith.addf %230, %235 : vector<1x128xf32>
    %237 = math.tanh %236 : vector<1x128xf32>
    %cst_131 = arith.constant 1.000000e+00 : f32
    %238 = vector.broadcast %cst_131 : f32 to vector<1x128xf32>
    %239 = arith.subf %238, %226 : vector<1x128xf32>
    %240 = arith.mulf %239, %237 : vector<1x128xf32>
    %241 = arith.mulf %226, %155 : vector<1x128xf32>
    %242 = arith.addf %240, %241 : vector<1x128xf32>
    %243 = arith.truncf %242 : vector<1x128xf32> to vector<1x128xbf16>
    %c0_132 = arith.constant 0 : index
    %c0_133 = arith.constant 0 : index
    %244 = vector.load %arg13[%c0_132, %c0_133] : memref<128x128xbf16, #tpu.memory_space<vmem>>, vector<128x128xbf16>
    %cst_134 = arith.constant dense<0.000000e+00> : vector<1x128xf32>
    %245 = tpu.matmul %243, %244, %cst_134 {dimension_numbers = #tpu.dot_dimension_numbers<[1], [0], [0], [1], [0, 0, 1, 1], [], []>} : vector<1x128xbf16>, vector<128x128xbf16>, vector<1x128xf32> -> vector<1x128xf32>
    %c0_135 = arith.constant 0 : index
    %c0_136 = arith.constant 0 : index
    %246 = vector.load %arg14[%c0_135, %c0_136] : memref<1x128xf32, #tpu.memory_space<vmem>>, vector<1x128xf32>
    %247 = arith.addf %245, %246 : vector<1x128xf32>
    %cst_137 = arith.constant dense<0xFF800000> : vector<1xf32>
    %248 = vector.multi_reduction <maximumf>, %247, %cst_137 [1] : vector<1x128xf32> to vector<1xf32>
    %249 = vector.shape_cast %248 : vector<1xf32> to vector<1x1xf32>
    %250 = vector.broadcast %249 : vector<1x1xf32> to vector<1x128xf32>
    %251 = arith.subf %247, %250 : vector<1x128xf32>
    %252 = math.exp %251 : vector<1x128xf32>
    %cst_138 = arith.constant dense<0.000000e+00> : vector<1xf32>
    %253 = vector.multi_reduction <add>, %252, %cst_138 [1] : vector<1x128xf32> to vector<1xf32>
    %254 = vector.shape_cast %253 : vector<1xf32> to vector<1x1xf32>
    %255 = math.log %254 : vector<1x1xf32>
    %256 = vector.broadcast %255 : vector<1x1xf32> to vector<1x128xf32>
    %257 = arith.subf %251, %256 : vector<1x128xf32>
    %258 = arith.index_cast %c2_i32 : i32 to index
    %c0_139 = arith.constant 0 : index
    %c0_140 = arith.constant 0 : index
    %259 = vector.load %arg15[%258, %c0_139, %c0_140] : memref<4x1x128xf32, #tpu.memory_space<vmem>>, vector<1x1x128xf32>
    %260 = vector.shape_cast %259 : vector<1x1x128xf32> to vector<1x128xf32>
    %261 = vector.shape_cast %257 : vector<1x128xf32> to vector<1x1x128xf32>
    tpu.vector_store %arg15[%258, %c0_139, %c0_140], %261 {strides = array<i32>} : memref<4x1x128xf32, #tpu.memory_space<vmem>>, vector<1x1x128xf32>,
    %c3_i32 = arith.constant 3 : i32
    %262 = arith.index_cast %c3_i32 : i32 to index
    %c0_141 = arith.constant 0 : index
    %c0_142 = arith.constant 0 : index
    %263 = vector.load %arg0[%262, %c0_141, %c0_142] : memref<4x1x128xbf16, #tpu.memory_space<vmem>>, vector<1x1x128xbf16>
    %264 = vector.shape_cast %263 : vector<1x1x128xbf16> to vector<1x128xbf16>
    %265 = arith.truncf %242 : vector<1x128xf32> to vector<1x128xbf16>
    %266 = tpu.concatenate %264, %265 in 1 : vector<1x128xbf16>, vector<1x128xbf16> -> vector<1x256xbf16>
    %c0_143 = arith.constant 0 : index
    %c0_144 = arith.constant 0 : index
    %267 = vector.load %arg3[%c0_143, %c0_144] : memref<256x128xbf16, #tpu.memory_space<vmem>>, vector<256x128xbf16>
    %cst_145 = arith.constant dense<0.000000e+00> : vector<1x128xf32>
    %268 = tpu.matmul %266, %267, %cst_145 {dimension_numbers = #tpu.dot_dimension_numbers<[1], [0], [0], [1], [0, 0, 1, 1], [], []>} : vector<1x256xbf16>, vector<256x128xbf16>, vector<1x128xf32> -> vector<1x128xf32>
    %c0_146 = arith.constant 0 : index
    %c0_147 = arith.constant 0 : index
    %269 = vector.load %arg4[%c0_146, %c0_147] : memref<1x128xf32, #tpu.memory_space<vmem>>, vector<1x128xf32>
    %270 = arith.addf %268, %269 : vector<1x128xf32>
    %cst_148 = arith.constant dense<0xFF800000> : vector<1xf32>
    %271 = vector.multi_reduction <maximumf>, %270, %cst_148 [1] : vector<1x128xf32> to vector<1xf32>
    %272 = vector.shape_cast %271 : vector<1xf32> to vector<1x1xf32>
    %273 = vector.broadcast %272 : vector<1x1xf32> to vector<1x128xf32>
    %274 = arith.subf %270, %273 : vector<1x128xf32>
    %275 = math.exp %274 : vector<1x128xf32>
    %cst_149 = arith.constant dense<0.000000e+00> : vector<1xf32>
    %276 = vector.multi_reduction <add>, %275, %cst_149 [1] : vector<1x128xf32> to vector<1xf32>
    %277 = vector.shape_cast %276 : vector<1xf32> to vector<1x1xf32>
    %278 = tpu.reciprocal %277 {approx = true} : vector<1x1xf32> -> vector<1x1xf32>
    %279 = vector.broadcast %278 : vector<1x1xf32> to vector<1x128xf32>
    %280 = arith.mulf %275, %279 : vector<1x128xf32>
    %281 = arith.index_cast %c3_i32 : i32 to index
    %c0_150 = arith.constant 0 : index
    %c0_151 = arith.constant 0 : index
    %282 = vector.load %arg17[%281, %c0_150, %c0_151] : memref<4x1x128xf32, #tpu.memory_space<vmem>>, vector<1x1x128xf32>
    %283 = vector.shape_cast %282 : vector<1x1x128xf32> to vector<1x128xf32>
    %284 = vector.shape_cast %280 : vector<1x128xf32> to vector<1x1x128xf32>
    tpu.vector_store %arg17[%281, %c0_150, %c0_151], %284 {strides = array<i32>} : memref<4x1x128xf32, #tpu.memory_space<vmem>>, vector<1x1x128xf32>,
    %285 = arith.truncf %280 : vector<1x128xf32> to vector<1x128xbf16>
    %c0_152 = arith.constant 0 : index
    %c0_153 = arith.constant 0 : index
    %286 = vector.load %arg2[%c0_152, %c0_153] : memref<128x128xbf16, #tpu.memory_space<vmem>>, vector<128x128xbf16>
    %cst_154 = arith.constant dense<0.000000e+00> : vector<1x128xf32>
    %287 = tpu.matmul %285, %286, %cst_154 {dimension_numbers = #tpu.dot_dimension_numbers<[1], [0], [0], [1], [0, 0, 1, 1], [], []>} : vector<1x128xbf16>, vector<128x128xbf16>, vector<1x128xf32> -> vector<1x128xf32>
    %288 = arith.truncf %287 : vector<1x128xf32> to vector<1x128xbf16>
    %289 = tpu.concatenate %264, %288 in 1 : vector<1x128xbf16>, vector<1x128xbf16> -> vector<1x256xbf16>
    %c0_155 = arith.constant 0 : index
    %c0_156 = arith.constant 0 : index
    %290 = vector.load %arg5[%c0_155, %c0_156] : memref<256x128xbf16, #tpu.memory_space<vmem>>, vector<256x128xbf16>
    %cst_157 = arith.constant dense<0.000000e+00> : vector<1x128xf32>
    %291 = tpu.matmul %289, %290, %cst_157 {dimension_numbers = #tpu.dot_dimension_numbers<[1], [0], [0], [1], [0, 0, 1, 1], [], []>} : vector<1x256xbf16>, vector<256x128xbf16>, vector<1x128xf32> -> vector<1x128xf32>
    %c0_158 = arith.constant 0 : index
    %c0_159 = arith.constant 0 : index
    %292 = vector.load %arg6[%c0_158, %c0_159] : memref<1x128xf32, #tpu.memory_space<vmem>>, vector<1x128xf32>
    %293 = arith.addf %291, %292 : vector<1x128xf32>
    %cst_160 = arith.constant 0.000000e+00 : f32
    %294 = vector.broadcast %cst_160 : f32 to vector<1x128xf32>
    %295 = arith.maximumf %293, %294 : vector<1x128xf32>
    %296 = arith.truncf %295 : vector<1x128xf32> to vector<1x128xbf16>
    %297 = tpu.concatenate %296, %265 in 1 : vector<1x128xbf16>, vector<1x128xbf16> -> vector<1x256xbf16>
    %c0_161 = arith.constant 0 : index
    %c0_162 = arith.constant 0 : index
    %298 = vector.load %arg7[%c0_161, %c0_162] : memref<256x256xbf16, #tpu.memory_space<vmem>>, vector<256x256xbf16>
    %cst_163 = arith.constant dense<0.000000e+00> : vector<1x256xf32>
    %299 = tpu.matmul %297, %298, %cst_163 {dimension_numbers = #tpu.dot_dimension_numbers<[1], [0], [0], [1], [0, 0, 1, 1], [], []>} : vector<1x256xbf16>, vector<256x256xbf16>, vector<1x256xf32> -> vector<1x256xf32>
    %c0_164 = arith.constant 0 : index
    %c0_165 = arith.constant 0 : index
    %300 = vector.load %arg8[%c0_164, %c0_165] : memref<1x256xf32, #tpu.memory_space<vmem>>, vector<1x256xf32>
    %301 = arith.addf %299, %300 : vector<1x256xf32>
    %302 = vector.extract_strided_slice %301 {offsets = [0, 0], sizes = [1, 128], strides = [1, 1]} : vector<1x256xf32> to vector<1x128xf32>
    %303 = arith.negf %302 : vector<1x128xf32>
    %304 = math.exp %303 : vector<1x128xf32>
    %cst_166 = arith.constant 1.000000e+00 : f32
    %305 = vector.broadcast %cst_166 : f32 to vector<1x128xf32>
    %306 = arith.addf %305, %304 : vector<1x128xf32>
    %307 = arith.divf %305, %306 : vector<1x128xf32>
    %308 = vector.extract_strided_slice %301 {offsets = [0, 128], sizes = [1, 128], strides = [1, 1]} : vector<1x256xf32> to vector<1x128xf32>
    %309 = arith.negf %308 : vector<1x128xf32>
    %310 = math.exp %309 : vector<1x128xf32>
    %cst_167 = arith.constant 1.000000e+00 : f32
    %311 = vector.broadcast %cst_167 : f32 to vector<1x128xf32>
    %312 = arith.addf %311, %310 : vector<1x128xf32>
    %313 = arith.divf %311, %312 : vector<1x128xf32>
    %c0_168 = arith.constant 0 : index
    %c0_169 = arith.constant 0 : index
    %314 = vector.load %arg9[%c0_168, %c0_169] : memref<128x128xbf16, #tpu.memory_space<vmem>>, vector<128x128xbf16>
    %cst_170 = arith.constant dense<0.000000e+00> : vector<1x128xf32>
    %315 = tpu.matmul %296, %314, %cst_170 {dimension_numbers = #tpu.dot_dimension_numbers<[1], [0], [0], [1], [0, 0, 1, 1], [], []>} : vector<1x128xbf16>, vector<128x128xbf16>, vector<1x128xf32> -> vector<1x128xf32>
    %c0_171 = arith.constant 0 : index
    %c0_172 = arith.constant 0 : index
    %316 = vector.load %arg10[%c0_171, %c0_172] : memref<1x128xf32, #tpu.memory_space<vmem>>, vector<1x128xf32>
    %317 = arith.addf %315, %316 : vector<1x128xf32>
    %c0_173 = arith.constant 0 : index
    %c0_174 = arith.constant 0 : index
    %318 = vector.load %arg11[%c0_173, %c0_174] : memref<128x128xbf16, #tpu.memory_space<vmem>>, vector<128x128xbf16>
    %cst_175 = arith.constant dense<0.000000e+00> : vector<1x128xf32>
    %319 = tpu.matmul %265, %318, %cst_175 {dimension_numbers = #tpu.dot_dimension_numbers<[1], [0], [0], [1], [0, 0, 1, 1], [], []>} : vector<1x128xbf16>, vector<128x128xbf16>, vector<1x128xf32> -> vector<1x128xf32>
    %c0_176 = arith.constant 0 : index
    %c0_177 = arith.constant 0 : index
    %320 = vector.load %arg12[%c0_176, %c0_177] : memref<1x128xf32, #tpu.memory_space<vmem>>, vector<1x128xf32>
    %321 = arith.addf %319, %320 : vector<1x128xf32>
    %322 = arith.mulf %307, %321 : vector<1x128xf32>
    %323 = arith.addf %317, %322 : vector<1x128xf32>
    %324 = math.tanh %323 : vector<1x128xf32>
    %cst_178 = arith.constant 1.000000e+00 : f32
    %325 = vector.broadcast %cst_178 : f32 to vector<1x128xf32>
    %326 = arith.subf %325, %313 : vector<1x128xf32>
    %327 = arith.mulf %326, %324 : vector<1x128xf32>
    %328 = arith.mulf %313, %242 : vector<1x128xf32>
    %329 = arith.addf %327, %328 : vector<1x128xf32>
    %330 = arith.truncf %329 : vector<1x128xf32> to vector<1x128xbf16>
    %c0_179 = arith.constant 0 : index
    %c0_180 = arith.constant 0 : index
    %331 = vector.load %arg13[%c0_179, %c0_180] : memref<128x128xbf16, #tpu.memory_space<vmem>>, vector<128x128xbf16>
    %cst_181 = arith.constant dense<0.000000e+00> : vector<1x128xf32>
    %332 = tpu.matmul %330, %331, %cst_181 {dimension_numbers = #tpu.dot_dimension_numbers<[1], [0], [0], [1], [0, 0, 1, 1], [], []>} : vector<1x128xbf16>, vector<128x128xbf16>, vector<1x128xf32> -> vector<1x128xf32>
    %c0_182 = arith.constant 0 : index
    %c0_183 = arith.constant 0 : index
    %333 = vector.load %arg14[%c0_182, %c0_183] : memref<1x128xf32, #tpu.memory_space<vmem>>, vector<1x128xf32>
    %334 = arith.addf %332, %333 : vector<1x128xf32>
    %cst_184 = arith.constant dense<0xFF800000> : vector<1xf32>
    %335 = vector.multi_reduction <maximumf>, %334, %cst_184 [1] : vector<1x128xf32> to vector<1xf32>
    %336 = vector.shape_cast %335 : vector<1xf32> to vector<1x1xf32>
    %337 = vector.broadcast %336 : vector<1x1xf32> to vector<1x128xf32>
    %338 = arith.subf %334, %337 : vector<1x128xf32>
    %339 = math.exp %338 : vector<1x128xf32>
    %cst_185 = arith.constant dense<0.000000e+00> : vector<1xf32>
    %340 = vector.multi_reduction <add>, %339, %cst_185 [1] : vector<1x128xf32> to vector<1xf32>
    %341 = vector.shape_cast %340 : vector<1xf32> to vector<1x1xf32>
    %342 = math.log %341 : vector<1x1xf32>
    %343 = vector.broadcast %342 : vector<1x1xf32> to vector<1x128xf32>
    %344 = arith.subf %338, %343 : vector<1x128xf32>
    %345 = arith.index_cast %c3_i32 : i32 to index
    %c0_186 = arith.constant 0 : index
    %c0_187 = arith.constant 0 : index
    %346 = vector.load %arg15[%345, %c0_186, %c0_187] : memref<4x1x128xf32, #tpu.memory_space<vmem>>, vector<1x1x128xf32>
    %347 = vector.shape_cast %346 : vector<1x1x128xf32> to vector<1x128xf32>
    %348 = vector.shape_cast %344 : vector<1x128xf32> to vector<1x1x128xf32>
    tpu.vector_store %arg15[%345, %c0_186, %c0_187], %348 {strides = array<i32>} : memref<4x1x128xf32, #tpu.memory_space<vmem>>, vector<1x1x128xf32>,
    %c4_i32 = arith.constant 4 : i32
    %c0_188 = arith.constant 0 : index
    %c0_189 = arith.constant 0 : index
    %349 = vector.load %arg16[%c0_188, %c0_189] : memref<1x128xf32, #tpu.memory_space<vmem>>, vector<1x128xf32>
    tpu.vector_store %arg16[%c0_188, %c0_189], %329 {strides = array<i32>} : memref<1x128xf32, #tpu.memory_space<vmem>>, vector<1x128xf32>,
    return
  }
}

</mosaic_0001>

<llo_original>
// kernel: tpu_custom_call.1
$region0: #{tpu_custom_call.1}
  #allocation0 [shape = 'u32[]', space=smem, size = 0x4, offset = 0x4, fixed_abs, tag = 'smem constant byte address 0x4 - core index']
  #allocation1 [shape = 'u32[144,128]{1,0:T(1,128)}', space=vmem, size = 0x12000, scoped, tag = 'internal scratch']
  %s0 = inlined_call_operand.vmem [shape: bf16[4,1,128], index: 0, kind: input, shape index: {}]
  %s1 = inlined_call_operand.vmem [shape: f32[1,128], index: 1, kind: input, shape index: {}]
  %s2 = inlined_call_operand.hbm [shape: bf16[128,128], index: 2, kind: input, shape index: {}]
  %s3 = inlined_call_operand.hbm [shape: bf16[256,128], index: 3, kind: input, shape index: {}]
  %s4 = inlined_call_operand.vmem [shape: f32[1,128], index: 4, kind: input, shape index: {}]
  %s5 = inlined_call_operand.hbm [shape: bf16[256,128], index: 5, kind: input, shape index: {}]
  %s6 = inlined_call_operand.vmem [shape: f32[1,128], index: 6, kind: input, shape index: {}]
  %s7 = inlined_call_operand.hbm [shape: bf16[256,256], index: 7, kind: input, shape index: {}]
  %s8 = inlined_call_operand.vmem [shape: f32[1,256], index: 8, kind: input, shape index: {}]
  %s9 = inlined_call_operand.hbm [shape: bf16[128,128], index: 9, kind: input, shape index: {}]
  %s10 = inlined_call_operand.vmem [shape: f32[1,128], index: 10, kind: input, shape index: {}]
  %s11 = inlined_call_operand.hbm [shape: bf16[128,128], index: 11, kind: input, shape index: {}]
  %s12 = inlined_call_operand.vmem [shape: f32[1,128], index: 12, kind: input, shape index: {}]
  %s13 = inlined_call_operand.hbm [shape: bf16[128,128], index: 13, kind: input, shape index: {}]
  %s14 = inlined_call_operand.vmem [shape: f32[1,128], index: 14, kind: input, shape index: {}]
  %s15 = inlined_call_operand.hbm [shape: f32[4,1,128], index: 15, kind: output, shape index: {0}]
  %s16 = inlined_call_operand.hbm [shape: f32[1,128], index: 16, kind: output, shape index: {1}]
  %s17 = inlined_call_operand.hbm [shape: f32[4,1,128], index: 17, kind: output, shape index: {2}]
  %18 = xla_tuple %s15, %s16, %s17
  %s19 = sld [smem:[#allocation0]]
  $region114: #{tpu_custom_call.1} parent=0
    _
  %s21 = ssub.s32 1, %s19
  %s22 = scalar_select 0, %s21, %s19
  $region1: #{tpu_custom_call.1} parent=0
    #allocation2 [shape = 'u8[32768]{0}', space=vmem, size = 0x8000, scoped, tag = 'input window, operand 2, single buffered']
    #allocation3 [shape = 's32[1]{0}', space=sflag, size = 0x4, scoped, tag = 'scoped memory for tpu_custom_call.1']
    #allocation4 [shape = 's32[1]{0}', space=sflag, size = 0x4, scoped, tag = 'scoped memory for tpu_custom_call.1']
    #allocation5 [shape = 'u8[65536]{0}', space=vmem, size = 0x10000, scoped, tag = 'input window, operand 3, single buffered']
    #allocation6 [shape = 's32[1]{0}', space=sflag, size = 0x4, scoped, tag = 'scoped memory for tpu_custom_call.1']
    #allocation7 [shape = 'u8[65536]{0}', space=vmem, size = 0x10000, scoped, tag = 'input window, operand 5, single buffered']
    #allocation8 [shape = 'u8[131072]{0}', space=vmem, size = 0x20000, scoped, tag = 'input window, operand 7, single buffered']
    #allocation9 [shape = 's32[1]{0}', space=sflag, size = 0x4, scoped, tag = 'scoped memory for tpu_custom_call.1']
    #allocation10 [shape = 'u8[32768]{0}', space=vmem, size = 0x8000, scoped, tag = 'input window, operand 9, single buffered']
    #allocation11 [shape = 'u8[32768]{0}', space=vmem, size = 0x8000, scoped, tag = 'input window, operand 11, single buffered']
    #allocation12 [shape = 's32[1]{0}', space=sflag, size = 0x4, scoped, tag = 'scoped memory for tpu_custom_call.1']
    #allocation13 [shape = 'u8[32768]{0}', space=vmem, size = 0x8000, scoped, tag = 'input window, operand 13, single buffered']
    #allocation14 [shape = 'u8[2048]{0}', space=vmem, size = 0x800, scoped, tag = 'output window, operand 0, single buffered']
    #allocation15 [shape = 'u8[512]{0}', space=vmem, size = 0x400, scoped, tag = 'output window, operand 1, single buffered']
    #allocation16 [shape = 's32[1]{0}', space=sflag, size = 0x4, scoped, tag = 'scoped memory for tpu_custom_call.1']
    #allocation17 [shape = 'u8[2048]{0}', space=vmem, size = 0x800, scoped, tag = 'output window, operand 2, single buffered']
    %23 = vsyncpa [#allocation3], 0
    %24 = vsyncpa [#allocation6], 0
    %25 = vsyncpa [#allocation9], 0
    %26 = vsyncpa [#allocation12], 0
    %27 = vsyncpa [#allocation4], 0
    %28 = vsyncpa [#allocation16], 0
    // Predicated region
    $region2: #{tpu_custom_call.1} parent=1 // pred_check
      _
    $region3: #{tpu_custom_call.1} parent=1 // pred_check_branch
      %30 = sbr.rel (0) target = $region5
    $region4: #{tpu_custom_call.1} parent=1 // pred_region
      _
    $region5: #{tpu_custom_call.1} parent=1 // pred_fallthru
      _
    // Predicated region
    $region6: #{tpu_custom_call.1} parent=1 // pred_check
      _
    $region7: #{tpu_custom_call.1} parent=1 // pred_check_branch
      %32 = sbr.rel (0) target = $region9
    $region8: #{tpu_custom_call.1} parent=1 // pred_region
      _
    $region9: #{tpu_custom_call.1} parent=1 // pred_fallthru
      _
    // Predicated region
    $region10: #{tpu_custom_call.1} parent=1 // pred_check
      _
    $region11: #{tpu_custom_call.1} parent=1 // pred_check_branch
      %34 = sbr.rel (0) target = $region13
    $region12: #{tpu_custom_call.1} parent=1 // pred_region
      %s36 = ssub.s32 1024, 1024
      %37 = vsyncadd [#allocation3], %s36
      %s38 = sshll.u32 [#allocation2], 4
      %s39 = int_to_ptr.vmem [resolvable:$true] %s38
      %44 = dma.hbm_to_vmem [thread:$0]  %s2, 1024, %s39, [#allocation3], 64, 64, 4
    $region13: #{tpu_custom_call.1} parent=1 // pred_fallthru
      _
    // Predicated region
    $region14: #{tpu_custom_call.1} parent=1 // pred_check
      _
    $region15: #{tpu_custom_call.1} parent=1 // pred_check_branch
      %46 = sbr.rel (0) target = $region17
    $region16: #{tpu_custom_call.1} parent=1 // pred_region
      %s48 = ssub.s32 2048, 2048
      %49 = vsyncadd [#allocation6], %s48
      %s50 = sshll.u32 [#allocation5], 4
      %s51 = int_to_ptr.vmem [resolvable:$true] %s50
      %56 = dma.hbm_to_vmem [thread:$0]  %s3, 2048, %s51, [#allocation6], 64, 64, 4
    $region17: #{tpu_custom_call.1} parent=1 // pred_fallthru
      _
    // Predicated region
    $region18: #{tpu_custom_call.1} parent=1 // pred_check
      _
    $region19: #{tpu_custom_call.1} parent=1 // pred_check_branch
      %58 = sbr.rel (0) target = $region21
    $region20: #{tpu_custom_call.1} parent=1 // pred_region
      _
    $region21: #{tpu_custom_call.1} parent=1 // pred_fallthru
      _
    // Predicated region
    $region22: #{tpu_custom_call.1} parent=1 // pred_check
      _
    $region23: #{tpu_custom_call.1} parent=1 // pred_check_branch
      %60 = sbr.rel (0) target = $region25
    $region24: #{tpu_custom_call.1} parent=1 // pred_region
      %s62 = ssub.s32 2048, 2048
      %63 = vsyncadd [#allocation6], %s62
      %s64 = sshll.u32 [#allocation7], 4
      %s65 = int_to_ptr.vmem [resolvable:$true] %s64
      %70 = dma.hbm_to_vmem [thread:$0]  %s5, 2048, %s65, [#allocation6], 64, 64, 4
    $region25: #{tpu_custom_call.1} parent=1 // pred_fallthru
      _
    // Predicated region
    $region26: #{tpu_custom_call.1} parent=1 // pred_check
      _
    $region27: #{tpu_custom_call.1} parent=1 // pred_check_branch
      %72 = sbr.rel (0) target = $region29
    $region28: #{tpu_custom_call.1} parent=1 // pred_region
      _
    $region29: #{tpu_custom_call.1} parent=1 // pred_fallthru
      _
    // Predicated region
    $region30: #{tpu_custom_call.1} parent=1 // pred_check
      _
    $region31: #{tpu_custom_call.1} parent=1 // pred_check_branch
      %74 = sbr.rel (0) target = $region33
    $region32: #{tpu_custom_call.1} parent=1 // pred_region
      %s76 = ssub.s32 4096, 4096
      %77 = vsyncadd [#allocation9], %s76
      %s78 = sshll.u32 [#allocation8], 4
      %s79 = int_to_ptr.vmem [resolvable:$true] %s78
      %84 = dma.hbm_to_vmem [thread:$0]  %s7, 4096, %s79, [#allocation9], 128, 128, 8
    $region33: #{tpu_custom_call.1} parent=1 // pred_fallthru
      _
    // Predicated region
    $region34: #{tpu_custom_call.1} parent=1 // pred_check
      _
    $region35: #{tpu_custom_call.1} parent=1 // pred_check_branch
      %86 = sbr.rel (0) target = $region37
    $region36: #{tpu_custom_call.1} parent=1 // pred_region
      _
    $region37: #{tpu_custom_call.1} parent=1 // pred_fallthru
      _
    // Predicated region
    $region38: #{tpu_custom_call.1} parent=1 // pred_check
      _
    $region39: #{tpu_custom_call.1} parent=1 // pred_check_branch
      %88 = sbr.rel (0) target = $region41
    $region40: #{tpu_custom_call.1} parent=1 // pred_region
      %s90 = ssub.s32 1024, 1024
      %91 = vsyncadd [#allocation9], %s90
      %s92 = sshll.u32 [#allocation10], 4
      %s93 = int_to_ptr.vmem [resolvable:$true] %s92
      %98 = dma.hbm_to_vmem [thread:$0]  %s9, 1024, %s93, [#allocation9], 64, 64, 4
    $region41: #{tpu_custom_call.1} parent=1 // pred_fallthru
      _
    // Predicated region
    $region42: #{tpu_custom_call.1} parent=1 // pred_check
      _
    $region43: #{tpu_custom_call.1} parent=1 // pred_check_branch
      %100 = sbr.rel (0) target = $region45
    $region44: #{tpu_custom_call.1} parent=1 // pred_region
      _
    $region45: #{tpu_custom_call.1} parent=1 // pred_fallthru
      _
    // Predicated region
    $region46: #{tpu_custom_call.1} parent=1 // pred_check
      _
    $region47: #{tpu_custom_call.1} parent=1 // pred_check_branch
      %102 = sbr.rel (0) target = $region49
    $region48: #{tpu_custom_call.1} parent=1 // pred_region
      %s104 = ssub.s32 1024, 1024
      %105 = vsyncadd [#allocation12], %s104
      %s106 = sshll.u32 [#allocation11], 4
      %s107 = int_to_ptr.vmem [resolvable:$true] %s106
      %112 = dma.hbm_to_vmem [thread:$0]  %s11, 1024, %s107, [#allocation12], 64, 64, 4
    $region49: #{tpu_custom_call.1} parent=1 // pred_fallthru
      _
    // Predicated region
    $region50: #{tpu_custom_call.1} parent=1 // pred_check
      _
    $region51: #{tpu_custom_call.1} parent=1 // pred_check_branch
      %114 = sbr.rel (0) target = $region53
    $region52: #{tpu_custom_call.1} parent=1 // pred_region
      _
    $region53: #{tpu_custom_call.1} parent=1 // pred_fallthru
      _
    // Predicated region
    $region54: #{tpu_custom_call.1} parent=1 // pred_check
      _
    $region55: #{tpu_custom_call.1} parent=1 // pred_check_branch
      %116 = sbr.rel (0) target = $region57
    $region56: #{tpu_custom_call.1} parent=1 // pred_region
      %s118 = ssub.s32 1024, 1024
      %119 = vsyncadd [#allocation12], %s118
      %s120 = sshll.u32 [#allocation13], 4
      %s121 = int_to_ptr.vmem [resolvable:$true] %s120
      %126 = dma.hbm_to_vmem [thread:$0]  %s13, 1024, %s121, [#allocation12], 64, 64, 4
    $region57: #{tpu_custom_call.1} parent=1 // pred_fallthru
      _
    // Predicated region
    $region58: #{tpu_custom_call.1} parent=1 // pred_check
      _
    $region59: #{tpu_custom_call.1} parent=1 // pred_check_branch
      %128 = sbr.rel (0) target = $region61
    $region60: #{tpu_custom_call.1} parent=1 // pred_region
      _
    $region61: #{tpu_custom_call.1} parent=1 // pred_fallthru
      _
    // Predicated region
    $region62: #{tpu_custom_call.1} parent=1 // pred_check
      _
    $region63: #{tpu_custom_call.1} parent=1 // pred_check_branch
      %130 = sbr.rel (0) target = $region65
    $region64: #{tpu_custom_call.1} parent=1 // pred_region
      %131 = dma.done [#allocation3], 1024
    $region65: #{tpu_custom_call.1} parent=1 // pred_fallthru
      _
    // Predicated region
    $region66: #{tpu_custom_call.1} parent=1 // pred_check
      _
    $region67: #{tpu_custom_call.1} parent=1 // pred_check_branch
      %133 = sbr.rel (0) target = $region69
    $region68: #{tpu_custom_call.1} parent=1 // pred_region
      %134 = dma.done [#allocation6], 2048
    $region69: #{tpu_custom_call.1} parent=1 // pred_fallthru
      _
    // Predicated region
    $region70: #{tpu_custom_call.1} parent=1 // pred_check
      _
    $region71: #{tpu_custom_call.1} parent=1 // pred_check_branch
      %136 = sbr.rel (0) target = $region73
    $region72: #{tpu_custom_call.1} parent=1 // pred_region
      %137 = dma.done [#allocation6], 2048
    $region73: #{tpu_custom_call.1} parent=1 // pred_fallthru
      _
    // Predicated region
    $region74: #{tpu_custom_call.1} parent=1 // pred_check
      _
    $region75: #{tpu_custom_call.1} parent=1 // pred_check_branch
      %139 = sbr.rel (0) target = $region77
    $region76: #{tpu_custom_call.1} parent=1 // pred_region
      %140 = dma.done [#allocation9], 4096
    $region77: #{tpu_custom_call.1} parent=1 // pred_fallthru
      _
    // Predicated region
    $region78: #{tpu_custom_call.1} parent=1 // pred_check
      _
    $region79: #{tpu_custom_call.1} parent=1 // pred_check_branch
      %142 = sbr.rel (0) target = $region81
    $region80: #{tpu_custom_call.1} parent=1 // pred_region
      %143 = dma.done [#allocation9], 1024
    $region81: #{tpu_custom_call.1} parent=1 // pred_fallthru
      _
    // Predicated region
    $region82: #{tpu_custom_call.1} parent=1 // pred_check
      _
    $region83: #{tpu_custom_call.1} parent=1 // pred_check_branch
      %145 = sbr.rel (0) target = $region85
    $region84: #{tpu_custom_call.1} parent=1 // pred_region
      %146 = dma.done [#allocation12], 1024
    $region85: #{tpu_custom_call.1} parent=1 // pred_fallthru
      _
    // Predicated region
    $region86: #{tpu_custom_call.1} parent=1 // pred_check
      _
    $region87: #{tpu_custom_call.1} parent=1 // pred_check_branch
      %148 = sbr.rel (0) target = $region89
    $region88: #{tpu_custom_call.1} parent=1 // pred_region
      %149 = dma.done [#allocation12], 1024
    $region89: #{tpu_custom_call.1} parent=1 // pred_fallthru
      _
    %v151 = vld [vmem:[%s1] sm:$0x1]
    %v152 = vld [vmem:[%s0] sm:$0x1]
    %v153 = vpack.c.bf16 %v151, %v151
    %v154 = vld [vmem:[#allocation5] sm:$0xf]
    %v155 = vld [vmem:[#allocation5 + $0x4] sm:$0xf]
    %v156 = vld [vmem:[#allocation5 + $0x8] sm:$0xf]
    %v157 = vld [vmem:[#allocation5 + $0xc] sm:$0xf]
    %v158 = vld [vmem:[#allocation5 + $0x10] sm:$0xf]
    %v159 = vld [vmem:[#allocation5 + $0x14] sm:$0xf]
    %v160 = vld [vmem:[#allocation5 + $0x18] sm:$0xf]
    %v161 = vld [vmem:[#allocation5 + $0x1c] sm:$0xf]
    %v162 = vld [vmem:[#allocation5 + $0x20] sm:$0xf]
    %v163 = vld [vmem:[#allocation5 + $0x24] sm:$0xf]
    %v164 = vld [vmem:[#allocation5 + $0x28] sm:$0xf]
    %v165 = vld [vmem:[#allocation5 + $0x2c] sm:$0xf]
    %v166 = vld [vmem:[#allocation5 + $0x30] sm:$0xf]
    %v167 = vld [vmem:[#allocation5 + $0x34] sm:$0xf]
    %v168 = vld [vmem:[#allocation5 + $0x38] sm:$0xf]
    %v169 = vld [vmem:[#allocation5 + $0x3c] sm:$0xf]
    %v170 = vld [vmem:[#allocation5 + $0x40] sm:$0xf]
    %v171 = vld [vmem:[#allocation5 + $0x44] sm:$0xf]
    %v172 = vld [vmem:[#allocation5 + $0x48] sm:$0xf]
    %v173 = vld [vmem:[#allocation5 + $0x4c] sm:$0xf]
    %v174 = vld [vmem:[#allocation5 + $0x50] sm:$0xf]
    %v175 = vld [vmem:[#allocation5 + $0x54] sm:$0xf]
    %v176 = vld [vmem:[#allocation5 + $0x58] sm:$0xf]
    %v177 = vld [vmem:[#allocation5 + $0x5c] sm:$0xf]
    %v178 = vld [vmem:[#allocation5 + $0x60] sm:$0xf]
    %v179 = vld [vmem:[#allocation5 + $0x64] sm:$0xf]
    %v180 = vld [vmem:[#allocation5 + $0x68] sm:$0xf]
    %v181 = vld [vmem:[#allocation5 + $0x6c] sm:$0xf]
    %v182 = vld [vmem:[#allocation5 + $0x70] sm:$0xf]
    %v183 = vld [vmem:[#allocation5 + $0x74] sm:$0xf]
    %v184 = vld [vmem:[#allocation5 + $0x78] sm:$0xf]
    %v185 = vld [vmem:[#allocation5 + $0x7c] sm:$0xf]
    %v186 = vld [vmem:[%s4] sm:$0x1]
    %v219 = vunpack.c.l.b16 %v154
    %v220 = vunpack.c.l.b16 %v155
    %v221 = vunpack.c.l.b16 %v156
    %v222 = vunpack.c.l.b16 %v157
    %v223 = vunpack.c.l.b16 %v158
    %v224 = vunpack.c.l.b16 %v159
    %v225 = vunpack.c.l.b16 %v160
    %v226 = vunpack.c.l.b16 %v161
    %v227 = vunpack.c.l.b16 %v162
    %v228 = vunpack.c.l.b16 %v163
    %v229 = vunpack.c.l.b16 %v164
    %v230 = vunpack.c.l.b16 %v165
    %v231 = vunpack.c.l.b16 %v166
    %v232 = vunpack.c.l.b16 %v167
    %v233 = vunpack.c.l.b16 %v168
    %v234 = vunpack.c.l.b16 %v169
    %v235 = vunpack.c.l.b16 %v170
    %v236 = vunpack.c.l.b16 %v171
    %v237 = vunpack.c.l.b16 %v172
    %v238 = vunpack.c.l.b16 %v173
    %v239 = vunpack.c.l.b16 %v174
    %v240 = vunpack.c.l.b16 %v175
    %v241 = vunpack.c.l.b16 %v176
    %v242 = vunpack.c.l.b16 %v177
    %v243 = vunpack.c.l.b16 %v178
    %v244 = vunpack.c.l.b16 %v179
    %v245 = vunpack.c.l.b16 %v180
    %v246 = vunpack.c.l.b16 %v181
    %v247 = vunpack.c.l.b16 %v182
    %v248 = vunpack.c.l.b16 %v183
    %v249 = vunpack.c.l.b16 %v184
    %v250 = vunpack.c.l.b16 %v185
    %v251 = vpack.c.b16 %v220, %v219
    %v252 = vpack.c.b16 %v222, %v221
    %v253 = vpack.c.b16 %v224, %v223
    %v254 = vpack.c.b16 %v226, %v225
    %v255 = vpack.c.b16 %v228, %v227
    %v256 = vpack.c.b16 %v230, %v229
    %v257 = vpack.c.b16 %v232, %v231
    %v258 = vpack.c.b16 %v234, %v233
    %v259 = vpack.c.b16 %v236, %v235
    %v260 = vpack.c.b16 %v238, %v237
    %v261 = vpack.c.b16 %v240, %v239
    %v262 = vpack.c.b16 %v242, %v241
    %v263 = vpack.c.b16 %v244, %v243
    %v264 = vpack.c.b16 %v246, %v245
    %v265 = vpack.c.b16 %v248, %v247
    %v266 = vpack.c.b16 %v250, %v249
    %283 = vmatprep.subr.bf16.mxu0 0
    %284 = vmatpush1.bf16.msra.mxu0 %v251
    %285 = vmatprep.subr.bf16.mxu0 0
    %286 = vmatpush1.bf16.msra.mxu0 %v252
    %287 = vmatprep.subr.bf16.mxu0 0
    %288 = vmatpush1.bf16.msra.mxu0 %v253
    %289 = vmatprep.subr.bf16.mxu0 0
    %290 = vmatpush1.bf16.msra.mxu0 %v254
    %291 = vmatprep.subr.bf16.mxu0 0
    %292 = vmatpush1.bf16.msra.mxu0 %v255
    %293 = vmatprep.subr.bf16.mxu0 0
    %294 = vmatpush1.bf16.msra.mxu0 %v256
    %295 = vmatprep.subr.bf16.mxu0 0
    %296 = vmatpush1.bf16.msra.mxu0 %v257
    %297 = vmatprep.subr.bf16.mxu0 0
    %298 = vmatpush1.bf16.msra.mxu0 %v258
    %299 = vmatprep.subr.bf16.mxu0 0
    %300 = vmatpush1.bf16.msra.mxu0 %v259
    %301 = vmatprep.subr.bf16.mxu0 0
    %302 = vmatpush1.bf16.msra.mxu0 %v260
    %303 = vmatprep.subr.bf16.mxu0 0
    %304 = vmatpush1.bf16.msra.mxu0 %v261
    %305 = vmatprep.subr.bf16.mxu0 0
    %306 = vmatpush1.bf16.msra.mxu0 %v262
    %307 = vmatprep.subr.bf16.mxu0 0
    %308 = vmatpush1.bf16.msra.mxu0 %v263
    %309 = vmatprep.subr.bf16.mxu0 0
    %310 = vmatpush1.bf16.msra.mxu0 %v264
    %311 = vmatprep.subr.bf16.mxu0 0
    %312 = vmatpush1.bf16.msra.mxu0 %v265
    %313 = vmatprep.subr.bf16.mxu0 0
    %314 = vmatpush1.bf16.msra.mxu0 %v266
    %315 = vmatprep.mubr.bf16.mxu0 %v153
    %316 = vmatmul.mubr.bf16.gmra.mrb[0].mxu0 %v152
    %v317 = vpop.f32.mrb[0].mxu0
    %v318 = vadd.f32 %v186, %v317
    %v319 = vpop.f32.mrb[0].mxu0
    %v320 = vpop.f32.mrb[0].mxu0
    %v321 = vpop.f32.mrb[0].mxu0
    %322 = vdwg.mxu0
    %vm323 = vcmask 1040384
    %v324 = vsel %vm323, %v318, -inf
    %325 = vmax.xlane.f32.xlu0 %v324
    %v326 = vpop.xlane.xlu0 %325
    %v327 = vsub.f32 %v318, %v326
    %v328 = vmul.f32 %v327, 1.442695
    %v329 = vpow.pop %v328
    %v330 = vsel %vm323, %v329, 0.0
    %331 = vadd.xlane.f32.xlu0 %v330
    %v332 = vpop.xlane.xlu0 %331
    %v333 = vrcp.pop %v332
    %v334 = vmul.f32 %v329, %v333
    %335 = vst [vmem:[#allocation17] sm:$0x1] %v334
    %v336 = vpack.c.bf16 %v334, %v334
    %v337 = vld [vmem:[#allocation2] sm:$0xf]
    %v338 = vld [vmem:[#allocation2 + $0x4] sm:$0xf]
    %v339 = vld [vmem:[#allocation2 + $0x8] sm:$0xf]
    %v340 = vld [vmem:[#allocation2 + $0xc] sm:$0xf]
    %v341 = vld [vmem:[#allocation2 + $0x10] sm:$0xf]
    %v342 = vld [vmem:[#allocation2 + $0x14] sm:$0xf]
    %v343 = vld [vmem:[#allocation2 + $0x18] sm:$0xf]
    %v344 = vld [vmem:[#allocation2 + $0x1c] sm:$0xf]
    %v345 = vld [vmem:[#allocation2 + $0x20] sm:$0xf]
    %v346 = vld [vmem:[#allocation2 + $0x24] sm:$0xf]
    %v347 = vld [vmem:[#allocation2 + $0x28] sm:$0xf]
    %v348 = vld [vmem:[#allocation2 + $0x2c] sm:$0xf]
    %v349 = vld [vmem:[#allocation2 + $0x30] sm:$0xf]
    %v350 = vld [vmem:[#allocation2 + $0x34] sm:$0xf]
    %v351 = vld [vmem:[#allocation2 + $0x38] sm:$0xf]
    %v352 = vld [vmem:[#allocation2 + $0x3c] sm:$0xf]
    %v369 = vunpack.c.l.b16 %v337
    %v370 = vunpack.c.l.b16 %v338
    %v371 = vunpack.c.l.b16 %v339
    %v372 = vunpack.c.l.b16 %v340
    %v373 = vunpack.c.l.b16 %v341
    %v374 = vunpack.c.l.b16 %v342
    %v375 = vunpack.c.l.b16 %v343
    %v376 = vunpack.c.l.b16 %v344
    %v377 = vunpack.c.l.b16 %v345
    %v378 = vunpack.c.l.b16 %v346
    %v379 = vunpack.c.l.b16 %v347
    %v380 = vunpack.c.l.b16 %v348
    %v381 = vunpack.c.l.b16 %v349
    %v382 = vunpack.c.l.b16 %v350
    %v383 = vunpack.c.l.b16 %v351
    %v384 = vunpack.c.l.b16 %v352
    %v385 = vpack.c.b16 %v370, %v369
    %v386 = vpack.c.b16 %v372, %v371
    %v387 = vpack.c.b16 %v374, %v373
    %v388 = vpack.c.b16 %v376, %v375
    %v389 = vpack.c.b16 %v378, %v377
    %v390 = vpack.c.b16 %v380, %v379
    %v391 = vpack.c.b16 %v382, %v381
    %v392 = vpack.c.b16 %v384, %v383
    %401 = vmatprep.subr.bf16.mxu0 0
    %402 = vmatpush1.bf16.msra.mxu0 %v385
    %403 = vmatprep.subr.bf16.mxu0 0
    %404 = vmatpush1.bf16.msra.mxu0 %v386
    %405 = vmatprep.subr.bf16.mxu0 0
    %406 = vmatpush1.bf16.msra.mxu0 %v387
    %407 = vmatprep.subr.bf16.mxu0 0
    %408 = vmatpush1.bf16.msra.mxu0 %v388
    %409 = vmatprep.subr.bf16.mxu0 0
    %410 = vmatpush1.bf16.msra.mxu0 %v389
    %411 = vmatprep.subr.bf16.mxu0 0
    %412 = vmatpush1.bf16.msra.mxu0 %v390
    %413 = vmatprep.subr.bf16.mxu0 0
    %414 = vmatpush1.bf16.msra.mxu0 %v391
    %415 = vmatprep.subr.bf16.mxu0 0
    %416 = vmatpush1.bf16.msra.mxu0 %v392
    %417 = vmatprep.subr.bf16.mxu0 0
    %418 = vmatpush1.bf16.msra.mxu0 0
    %419 = vmatprep.subr.bf16.mxu0 0
    %420 = vmatpush1.bf16.msra.mxu0 0
    %421 = vmatprep.subr.bf16.mxu0 0
    %422 = vmatpush1.bf16.msra.mxu0 0
    %423 = vmatprep.subr.bf16.mxu0 0
    %424 = vmatpush1.bf16.msra.mxu0 0
    %425 = vmatprep.subr.bf16.mxu0 0
    %426 = vmatpush1.bf16.msra.mxu0 0
    %427 = vmatprep.subr.bf16.mxu0 0
    %428 = vmatpush1.bf16.msra.mxu0 0
    %429 = vmatprep.subr.bf16.mxu0 0
    %430 = vmatpush1.bf16.msra.mxu0 0
    %431 = vmatprep.subr.bf16.mxu0 0
    %432 = vmatpush1.bf16.msra.mxu0 0
    %433 = vmatprep.mubr.bf16.mxu0 0
    %434 = vmatmul.mubr.bf16.gmra.mrb[0].mxu0 %v336
    %v435 = vpop.f32.mrb[0].mxu0
    %v436 = vadd.f32 0.0, %v435
    %v437 = vpop.f32.mrb[0].mxu0
    %v438 = vpop.f32.mrb[0].mxu0
    %v439 = vpop.f32.mrb[0].mxu0
    %440 = vdwg.mxu0
    %v441 = vpack.c.bf16 %v436, %v436
    %v442 = vld [vmem:[#allocation7] sm:$0xf]
    %v443 = vld [vmem:[#allocation7 + $0x4] sm:$0xf]
    %v444 = vld [vmem:[#allocation7 + $0x8] sm:$0xf]
    %v445 = vld [vmem:[#allocation7 + $0xc] sm:$0xf]
    %v446 = vld [vmem:[#allocation7 + $0x10] sm:$0xf]
    %v447 = vld [vmem:[#allocation7 + $0x14] sm:$0xf]
    %v448 = vld [vmem:[#allocation7 + $0x18] sm:$0xf]
    %v449 = vld [vmem:[#allocation7 + $0x1c] sm:$0xf]
    %v450 = vld [vmem:[#allocation7 + $0x20] sm:$0xf]
    %v451 = vld [vmem:[#allocation7 + $0x24] sm:$0xf]
    %v452 = vld [vmem:[#allocation7 + $0x28] sm:$0xf]
    %v453 = vld [vmem:[#allocation7 + $0x2c] sm:$0xf]
    %v454 = vld [vmem:[#allocation7 + $0x30] sm:$0xf]
    %v455 = vld [vmem:[#allocation7 + $0x34] sm:$0xf]
    %v456 = vld [vmem:[#allocation7 + $0x38] sm:$0xf]
    %v457 = vld [vmem:[#allocation7 + $0x3c] sm:$0xf]
    %v458 = vld [vmem:[#allocation7 + $0x40] sm:$0xf]
    %v459 = vld [vmem:[#allocation7 + $0x44] sm:$0xf]
    %v460 = vld [vmem:[#allocation7 + $0x48] sm:$0xf]
    %v461 = vld [vmem:[#allocation7 + $0x4c] sm:$0xf]
    %v462 = vld [vmem:[#allocation7 + $0x50] sm:$0xf]
    %v463 = vld [vmem:[#allocation7 + $0x54] sm:$0xf]
    %v464 = vld [vmem:[#allocation7 + $0x58] sm:$0xf]
    %v465 = vld [vmem:[#allocation7 + $0x5c] sm:$0xf]
    %v466 = vld [vmem:[#allocation7 + $0x60] sm:$0xf]
    %v467 = vld [vmem:[#allocation7 + $0x64] sm:$0xf]
    %v468 = vld [vmem:[#allocation7 + $0x68] sm:$0xf]
    %v469 = vld [vmem:[#allocation7 + $0x6c] sm:$0xf]
    %v470 = vld [vmem:[#allocation7 + $0x70] sm:$0xf]
    %v471 = vld [vmem:[#allocation7 + $0x74] sm:$0xf]
    %v472 = vld [vmem:[#allocation7 + $0x78] sm:$0xf]
    %v473 = vld [vmem:[#allocation7 + $0x7c] sm:$0xf]
    %v474 = vld [vmem:[%s6] sm:$0x1]
    %v507 = vunpack.c.l.b16 %v442
    %v508 = vunpack.c.l.b16 %v443
    %v509 = vunpack.c.l.b16 %v444
    %v510 = vunpack.c.l.b16 %v445
    %v511 = vunpack.c.l.b16 %v446
    %v512 = vunpack.c.l.b16 %v447
    %v513 = vunpack.c.l.b16 %v448
    %v514 = vunpack.c.l.b16 %v449
    %v515 = vunpack.c.l.b16 %v450
    %v516 = vunpack.c.l.b16 %v451
    %v517 = vunpack.c.l.b16 %v452
    %v518 = vunpack.c.l.b16 %v453
    %v519 = vunpack.c.l.b16 %v454
    %v520 = vunpack.c.l.b16 %v455
    %v521 = vunpack.c.l.b16 %v456
    %v522 = vunpack.c.l.b16 %v457
    %v523 = vunpack.c.l.b16 %v458
    %v524 = vunpack.c.l.b16 %v459
    %v525 = vunpack.c.l.b16 %v460
    %v526 = vunpack.c.l.b16 %v461
    %v527 = vunpack.c.l.b16 %v462
    %v528 = vunpack.c.l.b16 %v463
    %v529 = vunpack.c.l.b16 %v464
    %v530 = vunpack.c.l.b16 %v465
    %v531 = vunpack.c.l.b16 %v466
    %v532 = vunpack.c.l.b16 %v467
    %v533 = vunpack.c.l.b16 %v468
    %v534 = vunpack.c.l.b16 %v469
    %v535 = vunpack.c.l.b16 %v470
    %v536 = vunpack.c.l.b16 %v471
    %v537 = vunpack.c.l.b16 %v472
    %v538 = vunpack.c.l.b16 %v473
    %v539 = vpack.c.b16 %v508, %v507
    %v540 = vpack.c.b16 %v510, %v509
    %v541 = vpack.c.b16 %v512, %v511
    %v542 = vpack.c.b16 %v514, %v513
    %v543 = vpack.c.b16 %v516, %v515
    %v544 = vpack.c.b16 %v518, %v517
    %v545 = vpack.c.b16 %v520, %v519
    %v546 = vpack.c.b16 %v522, %v521
    %v547 = vpack.c.b16 %v524, %v523
    %v548 = vpack.c.b16 %v526, %v525
    %v549 = vpack.c.b16 %v528, %v527
    %v550 = vpack.c.b16 %v530, %v529
    %v551 = vpack.c.b16 %v532, %v531
    %v552 = vpack.c.b16 %v534, %v533
    %v553 = vpack.c.b16 %v536, %v535
    %v554 = vpack.c.b16 %v538, %v537
    %571 = vmatprep.subr.bf16.mxu0 0
    %572 = vmatpush1.bf16.msra.mxu0 %v539
    %573 = vmatprep.subr.bf16.mxu0 0
    %574 = vmatpush1.bf16.msra.mxu0 %v540
    %575 = vmatprep.subr.bf16.mxu0 0
    %576 = vmatpush1.bf16.msra.mxu0 %v541
    %577 = vmatprep.subr.bf16.mxu0 0
    %578 = vmatpush1.bf16.msra.mxu0 %v542
    %579 = vmatprep.subr.bf16.mxu0 0
    %580 = vmatpush1.bf16.msra.mxu0 %v543
    %581 = vmatprep.subr.bf16.mxu0 0
    %582 = vmatpush1.bf16.msra.mxu0 %v544
    %583 = vmatprep.subr.bf16.mxu0 0
    %584 = vmatpush1.bf16.msra.mxu0 %v545
    %585 = vmatprep.subr.bf16.mxu0 0
    %586 = vmatpush1.bf16.msra.mxu0 %v546
    %587 = vmatprep.subr.bf16.mxu0 0
    %588 = vmatpush1.bf16.msra.mxu0 %v547
    %589 = vmatprep.subr.bf16.mxu0 0
    %590 = vmatpush1.bf16.msra.mxu0 %v548
    %591 = vmatprep.subr.bf16.mxu0 0
    %592 = vmatpush1.bf16.msra.mxu0 %v549
    %593 = vmatprep.subr.bf16.mxu0 0
    %594 = vmatpush1.bf16.msra.mxu0 %v550
    %595 = vmatprep.subr.bf16.mxu0 0
    %596 = vmatpush1.bf16.msra.mxu0 %v551
    %597 = vmatprep.subr.bf16.mxu0 0
    %598 = vmatpush1.bf16.msra.mxu0 %v552
    %599 = vmatprep.subr.bf16.mxu0 0
    %600 = vmatpush1.bf16.msra.mxu0 %v553
    %601 = vmatprep.subr.bf16.mxu0 0
    %602 = vmatpush1.bf16.msra.mxu0 %v554
    %603 = vmatprep.mubr.bf16.mxu0 %v441
    %604 = vmatmul.mubr.bf16.gmra.mrb[0].mxu0 %v152
    %v605 = vpop.f32.mrb[0].mxu0
    %v606 = vadd.f32 %v474, %v605
    %v607 = vpop.f32.mrb[0].mxu0
    %v608 = vpop.f32.mrb[0].mxu0
    %v609 = vpop.f32.mrb[0].mxu0
    %610 = vdwg.mxu0
    %v611 = vmax.f32 %v606, 0.0
    %v612 = vpack.c.bf16 %v611, %v611
    %v613 = vld [vmem:[#allocation8] sm:$0xff]
    %v614 = vld [vmem:[#allocation8 + $0x8] sm:$0xff]
    %v615 = vld [vmem:[#allocation8 + $0x10] sm:$0xff]
    %v616 = vld [vmem:[#allocation8 + $0x18] sm:$0xff]
    %v617 = vld [vmem:[#allocation8 + $0x20] sm:$0xff]
    %v618 = vld [vmem:[#allocation8 + $0x28] sm:$0xff]
    %v619 = vld [vmem:[#allocation8 + $0x30] sm:$0xff]
    %v620 = vld [vmem:[#allocation8 + $0x38] sm:$0xff]
    %v621 = vld [vmem:[#allocation8 + $0x40] sm:$0xff]
    %v622 = vld [vmem:[#allocation8 + $0x48] sm:$0xff]
    %v623 = vld [vmem:[#allocation8 + $0x50] sm:$0xff]
    %v624 = vld [vmem:[#allocation8 + $0x58] sm:$0xff]
    %v625 = vld [vmem:[#allocation8 + $0x60] sm:$0xff]
    %v626 = vld [vmem:[#allocation8 + $0x68] sm:$0xff]
    %v627 = vld [vmem:[#allocation8 + $0x70] sm:$0xff]
    %v628 = vld [vmem:[#allocation8 + $0x78] sm:$0xff]
    %v629 = vld [vmem:[#allocation8 + $0x80] sm:$0xff]
    %v630 = vld [vmem:[#allocation8 + $0x88] sm:$0xff]
    %v631 = vld [vmem:[#allocation8 + $0x90] sm:$0xff]
    %v632 = vld [vmem:[#allocation8 + $0x98] sm:$0xff]
    %v633 = vld [vmem:[#allocation8 + $0xa0] sm:$0xff]
    %v634 = vld [vmem:[#allocation8 + $0xa8] sm:$0xff]
    %v635 = vld [vmem:[#allocation8 + $0xb0] sm:$0xff]
    %v636 = vld [vmem:[#allocation8 + $0xb8] sm:$0xff]
    %v637 = vld [vmem:[#allocation8 + $0xc0] sm:$0xff]
    %v638 = vld [vmem:[#allocation8 + $0xc8] sm:$0xff]
    %v639 = vld [vmem:[#allocation8 + $0xd0] sm:$0xff]
    %v640 = vld [vmem:[#allocation8 + $0xd8] sm:$0xff]
    %v641 = vld [vmem:[#allocation8 + $0xe0] sm:$0xff]
    %v642 = vld [vmem:[#allocation8 + $0xe8] sm:$0xff]
    %v643 = vld [vmem:[#allocation8 + $0xf0] sm:$0xff]
    %v644 = vld [vmem:[#allocation8 + $0xf8] sm:$0xff]
    %v645 = vld [vmem:[%s8] sm:$0x3]
    %v678 = vunpack.c.l.b16 %v613
    %v679 = vunpack.c.h.b16 %v613
    %v680 = vunpack.c.l.b16 %v614
    %v681 = vunpack.c.h.b16 %v614
    %v682 = vunpack.c.l.b16 %v615
    %v683 = vunpack.c.h.b16 %v615
    %v684 = vunpack.c.l.b16 %v616
    %v685 = vunpack.c.h.b16 %v616
    %v686 = vunpack.c.l.b16 %v617
    %v687 = vunpack.c.h.b16 %v617
    %v688 = vunpack.c.l.b16 %v618
    %v689 = vunpack.c.h.b16 %v618
    %v690 = vunpack.c.l.b16 %v619
    %v691 = vunpack.c.h.b16 %v619
    %v692 = vunpack.c.l.b16 %v620
    %v693 = vunpack.c.h.b16 %v620
    %v694 = vunpack.c.l.b16 %v621
    %v695 = vunpack.c.h.b16 %v621
    %v696 = vunpack.c.l.b16 %v622
    %v697 = vunpack.c.h.b16 %v622
    %v698 = vunpack.c.l.b16 %v623
    %v699 = vunpack.c.h.b16 %v623
    %v700 = vunpack.c.l.b16 %v624
    %v701 = vunpack.c.h.b16 %v624
    %v702 = vunpack.c.l.b16 %v625
    %v703 = vunpack.c.h.b16 %v625
    %v704 = vunpack.c.l.b16 %v626
    %v705 = vunpack.c.h.b16 %v626
    %v706 = vunpack.c.l.b16 %v627
    %v707 = vunpack.c.h.b16 %v627
    %v708 = vunpack.c.l.b16 %v628
    %v709 = vunpack.c.h.b16 %v628
    %v710 = vunpack.c.l.b16 %v629
    %v711 = vunpack.c.h.b16 %v629
    %v712 = vunpack.c.l.b16 %v630
    %v713 = vunpack.c.h.b16 %v630
    %v714 = vunpack.c.l.b16 %v631
    %v715 = vunpack.c.h.b16 %v631
    %v716 = vunpack.c.l.b16 %v632
    %v717 = vunpack.c.h.b16 %v632
    %v718 = vunpack.c.l.b16 %v633
    %v719 = vunpack.c.h.b16 %v633
    %v720 = vunpack.c.l.b16 %v634
    %v721 = vunpack.c.h.b16 %v634
    %v722 = vunpack.c.l.b16 %v635
    %v723 = vunpack.c.h.b16 %v635
    %v724 = vunpack.c.l.b16 %v636
    %v725 = vunpack.c.h.b16 %v636
    %v726 = vunpack.c.l.b16 %v637
    %v727 = vunpack.c.h.b16 %v637
    %v728 = vunpack.c.l.b16 %v638
    %v729 = vunpack.c.h.b16 %v638
    %v730 = vunpack.c.l.b16 %v639
    %v731 = vunpack.c.h.b16 %v639
    %v732 = vunpack.c.l.b16 %v640
    %v733 = vunpack.c.h.b16 %v640
    %v734 = vunpack.c.l.b16 %v641
    %v735 = vunpack.c.h.b16 %v641
    %v736 = vunpack.c.l.b16 %v642
    %v737 = vunpack.c.h.b16 %v642
    %v738 = vunpack.c.l.b16 %v643
    %v739 = vunpack.c.h.b16 %v643
    %v740 = vunpack.c.l.b16 %v644
    %v741 = vunpack.c.h.b16 %v644
    %v742 = vpack.c.b16 %v680, %v678
    %v743 = vpack.c.b16 %v681, %v679
    %v744 = vpack.c.b16 %v684, %v682
    %v745 = vpack.c.b16 %v685, %v683
    %v746 = vpack.c.b16 %v688, %v686
    %v747 = vpack.c.b16 %v689, %v687
    %v748 = vpack.c.b16 %v692, %v690
    %v749 = vpack.c.b16 %v693, %v691
    %v750 = vpack.c.b16 %v696, %v694
    %v751 = vpack.c.b16 %v697, %v695
    %v752 = vpack.c.b16 %v700, %v698
    %v753 = vpack.c.b16 %v701, %v699
    %v754 = vpack.c.b16 %v704, %v702
    %v755 = vpack.c.b16 %v705, %v703
    %v756 = vpack.c.b16 %v708, %v706
    %v757 = vpack.c.b16 %v709, %v707
    %v758 = vpack.c.b16 %v712, %v710
    %v759 = vpack.c.b16 %v713, %v711
    %v760 = vpack.c.b16 %v716, %v714
    %v761 = vpack.c.b16 %v717, %v715
    %v762 = vpack.c.b16 %v720, %v718
    %v763 = vpack.c.b16 %v721, %v719
    %v764 = vpack.c.b16 %v724, %v722
    %v765 = vpack.c.b16 %v725, %v723
    %v766 = vpack.c.b16 %v728, %v726
    %v767 = vpack.c.b16 %v729, %v727
    %v768 = vpack.c.b16 %v732, %v730
    %v769 = vpack.c.b16 %v733, %v731
    %v770 = vpack.c.b16 %v736, %v734
    %v771 = vpack.c.b16 %v737, %v735
    %v772 = vpack.c.b16 %v740, %v738
    %v773 = vpack.c.b16 %v741, %v739
    %v807 = vlaneseq
    %v808 = vshrl.u32 %v807, 7
    %v809 = vsub.s32 0, %v808
    %v810 = vrot.slane %v645, %v809
    %v811 = vlaneseq
    %v812 = vshrl.u32 %v811, 7
    %v813 = vsub.s32 1, %v812
    %v814 = vrot.slane %v645, %v813
    %817 = vmatprep.subr.bf16.mxu0 %v743
    %818 = vmatpush1.bf16.msra.mxu0 %v742
    %819 = vmatprep.subr.bf16.mxu0 %v745
    %820 = vmatpush1.bf16.msra.mxu0 %v744
    %821 = vmatprep.subr.bf16.mxu0 %v747
    %822 = vmatpush1.bf16.msra.mxu0 %v746
    %823 = vmatprep.subr.bf16.mxu0 %v749
    %824 = vmatpush1.bf16.msra.mxu0 %v748
    %825 = vmatprep.subr.bf16.mxu0 %v751
    %826 = vmatpush1.bf16.msra.mxu0 %v750
    %827 = vmatprep.subr.bf16.mxu0 %v753
    %828 = vmatpush1.bf16.msra.mxu0 %v752
    %829 = vmatprep.subr.bf16.mxu0 %v755
    %830 = vmatpush1.bf16.msra.mxu0 %v754
    %831 = vmatprep.subr.bf16.mxu0 %v757
    %832 = vmatpush1.bf16.msra.mxu0 %v756
    %833 = vmatprep.subr.bf16.mxu0 %v759
    %834 = vmatpush1.bf16.msra.mxu0 %v758
    %835 = vmatprep.subr.bf16.mxu0 %v761
    %836 = vmatpush1.bf16.msra.mxu0 %v760
    %837 = vmatprep.subr.bf16.mxu0 %v763
    %838 = vmatpush1.bf16.msra.mxu0 %v762
    %839 = vmatprep.subr.bf16.mxu0 %v765
    %840 = vmatpush1.bf16.msra.mxu0 %v764
    %841 = vmatprep.subr.bf16.mxu0 %v767
    %842 = vmatpush1.bf16.msra.mxu0 %v766
    %843 = vmatprep.subr.bf16.mxu0 %v769
    %844 = vmatpush1.bf16.msra.mxu0 %v768
    %845 = vmatprep.subr.bf16.mxu0 %v771
    %846 = vmatpush1.bf16.msra.mxu0 %v770
    %847 = vmatprep.subr.bf16.mxu0 %v773
    %848 = vmatpush1.bf16.msra.mxu0 %v772
    %849 = vmatprep.mubr.bf16.mxu0 %v153
    %850 = vmatmul.mubr.bf16.gmra.mrb[0].mxu0 %v612
    %v851 = vpop.f32.mrb[0].mxu0
    %v852 = vadd.f32 %v810, %v851
    %v853 = vpop.f32.mrb[0].mxu0
    %v854 = vadd.f32 %v814, %v853
    %v855 = vpop.f32.mrb[0].mxu0
    %v856 = vpop.f32.mrb[0].mxu0
    %857 = vdwg.mxu0
    %v858 = vxor.u32 %v852, 2147483648
    %v859 = vmul.f32 %v858, 1.442695
    %v860 = vpow.pop %v859
    %v861 = vadd.f32 %v860, 1.0
    %v862 = vrcp.pop %v861
    %v863 = vmul.f32 1.0, %v862
    %v864 = vxor.u32 %v854, 2147483648
    %v865 = vmul.f32 %v864, 1.442695
    %v866 = vpow.pop %v865
    %v867 = vadd.f32 %v866, 1.0
    %v868 = vrcp.pop %v867
    %v869 = vmul.f32 1.0, %v868
    %v870 = vld [vmem:[#allocation10] sm:$0xf]
    %v871 = vld [vmem:[#allocation10 + $0x4] sm:$0xf]
    %v872 = vld [vmem:[#allocation10 + $0x8] sm:$0xf]
    %v873 = vld [vmem:[#allocation10 + $0xc] sm:$0xf]
    %v874 = vld [vmem:[#allocation10 + $0x10] sm:$0xf]
    %v875 = vld [vmem:[#allocation10 + $0x14] sm:$0xf]
    %v876 = vld [vmem:[#allocation10 + $0x18] sm:$0xf]
    %v877 = vld [vmem:[#allocation10 + $0x1c] sm:$0xf]
    %v878 = vld [vmem:[#allocation10 + $0x20] sm:$0xf]
    %v879 = vld [vmem:[#allocation10 + $0x24] sm:$0xf]
    %v880 = vld [vmem:[#allocation10 + $0x28] sm:$0xf]
    %v881 = vld [vmem:[#allocation10 + $0x2c] sm:$0xf]
    %v882 = vld [vmem:[#allocation10 + $0x30] sm:$0xf]
    %v883 = vld [vmem:[#allocation10 + $0x34] sm:$0xf]
    %v884 = vld [vmem:[#allocation10 + $0x38] sm:$0xf]
    %v885 = vld [vmem:[#allocation10 + $0x3c] sm:$0xf]
    %v886 = vld [vmem:[%s10] sm:$0x1]
    %v903 = vunpack.c.l.b16 %v870
    %v904 = vunpack.c.l.b16 %v871
    %v905 = vunpack.c.l.b16 %v872
    %v906 = vunpack.c.l.b16 %v873
    %v907 = vunpack.c.l.b16 %v874
    %v908 = vunpack.c.l.b16 %v875
    %v909 = vunpack.c.l.b16 %v876
    %v910 = vunpack.c.l.b16 %v877
    %v911 = vunpack.c.l.b16 %v878
    %v912 = vunpack.c.l.b16 %v879
    %v913 = vunpack.c.l.b16 %v880
    %v914 = vunpack.c.l.b16 %v881
    %v915 = vunpack.c.l.b16 %v882
    %v916 = vunpack.c.l.b16 %v883
    %v917 = vunpack.c.l.b16 %v884
    %v918 = vunpack.c.l.b16 %v885
    %v919 = vpack.c.b16 %v904, %v903
    %v920 = vpack.c.b16 %v906, %v905
    %v921 = vpack.c.b16 %v908, %v907
    %v922 = vpack.c.b16 %v910, %v909
    %v923 = vpack.c.b16 %v912, %v911
    %v924 = vpack.c.b16 %v914, %v913
    %v925 = vpack.c.b16 %v916, %v915
    %v926 = vpack.c.b16 %v918, %v917
    %935 = vmatprep.subr.bf16.mxu0 0
    %936 = vmatpush1.bf16.msra.mxu0 %v919
    %937 = vmatprep.subr.bf16.mxu0 0
    %938 = vmatpush1.bf16.msra.mxu0 %v920
    %939 = vmatprep.subr.bf16.mxu0 0
    %940 = vmatpush1.bf16.msra.mxu0 %v921
    %941 = vmatprep.subr.bf16.mxu0 0
    %942 = vmatpush1.bf16.msra.mxu0 %v922
    %943 = vmatprep.subr.bf16.mxu0 0
    %944 = vmatpush1.bf16.msra.mxu0 %v923
    %945 = vmatprep.subr.bf16.mxu0 0
    %946 = vmatpush1.bf16.msra.mxu0 %v924
    %947 = vmatprep.subr.bf16.mxu0 0
    %948 = vmatpush1.bf16.msra.mxu0 %v925
    %949 = vmatprep.subr.bf16.mxu0 0
    %950 = vmatpush1.bf16.msra.mxu0 %v926
    %951 = vmatprep.subr.bf16.mxu0 0
    %952 = vmatpush1.bf16.msra.mxu0 0
    %953 = vmatprep.subr.bf16.mxu0 0
    %954 = vmatpush1.bf16.msra.mxu0 0
    %955 = vmatprep.subr.bf16.mxu0 0
    %956 = vmatpush1.bf16.msra.mxu0 0
    %957 = vmatprep.subr.bf16.mxu0 0
    %958 = vmatpush1.bf16.msra.mxu0 0
    %959 = vmatprep.subr.bf16.mxu0 0
    %960 = vmatpush1.bf16.msra.mxu0 0
    %961 = vmatprep.subr.bf16.mxu0 0
    %962 = vmatpush1.bf16.msra.mxu0 0
    %963 = vmatprep.subr.bf16.mxu0 0
    %964 = vmatpush1.bf16.msra.mxu0 0
    %965 = vmatprep.subr.bf16.mxu0 0
    %966 = vmatpush1.bf16.msra.mxu0 0
    %967 = vmatprep.mubr.bf16.mxu0 0
    %968 = vmatmul.mubr.bf16.gmra.mrb[0].mxu0 %v612
    %v969 = vpop.f32.mrb[0].mxu0
    %v970 = vadd.f32 %v886, %v969
    %v971 = vpop.f32.mrb[0].mxu0
    %v972 = vpop.f32.mrb[0].mxu0
    %v973 = vpop.f32.mrb[0].mxu0
    %974 = vdwg.mxu0
    %v975 = vld [vmem:[#allocation11] sm:$0xf]
    %v976 = vld [vmem:[#allocation11 + $0x4] sm:$0xf]
    %v977 = vld [vmem:[#allocation11 + $0x8] sm:$0xf]
    %v978 = vld [vmem:[#allocation11 + $0xc] sm:$0xf]
    %v979 = vld [vmem:[#allocation11 + $0x10] sm:$0xf]
    %v980 = vld [vmem:[#allocation11 + $0x14] sm:$0xf]
    %v981 = vld [vmem:[#allocation11 + $0x18] sm:$0xf]
    %v982 = vld [vmem:[#allocation11 + $0x1c] sm:$0xf]
    %v983 = vld [vmem:[#allocation11 + $0x20] sm:$0xf]
    %v984 = vld [vmem:[#allocation11 + $0x24] sm:$0xf]
    %v985 = vld [vmem:[#allocation11 + $0x28] sm:$0xf]
    %v986 = vld [vmem:[#allocation11 + $0x2c] sm:$0xf]
    %v987 = vld [vmem:[#allocation11 + $0x30] sm:$0xf]
    %v988 = vld [vmem:[#allocation11 + $0x34] sm:$0xf]
    %v989 = vld [vmem:[#allocation11 + $0x38] sm:$0xf]
    %v990 = vld [vmem:[#allocation11 + $0x3c] sm:$0xf]
    %v991 = vld [vmem:[%s12] sm:$0x1]
    %v1008 = vunpack.c.l.b16 %v975
    %v1009 = vunpack.c.l.b16 %v976
    %v1010 = vunpack.c.l.b16 %v977
    %v1011 = vunpack.c.l.b16 %v978
    %v1012 = vunpack.c.l.b16 %v979
    %v1013 = vunpack.c.l.b16 %v980
    %v1014 = vunpack.c.l.b16 %v981
    %v1015 = vunpack.c.l.b16 %v982
    %v1016 = vunpack.c.l.b16 %v983
    %v1017 = vunpack.c.l.b16 %v984
    %v1018 = vunpack.c.l.b16 %v985
    %v1019 = vunpack.c.l.b16 %v986
    %v1020 = vunpack.c.l.b16 %v987
    %v1021 = vunpack.c.l.b16 %v988
    %v1022 = vunpack.c.l.b16 %v989
    %v1023 = vunpack.c.l.b16 %v990
    %v1024 = vpack.c.b16 %v1009, %v1008
    %v1025 = vpack.c.b16 %v1011, %v1010
    %v1026 = vpack.c.b16 %v1013, %v1012
    %v1027 = vpack.c.b16 %v1015, %v1014
    %v1028 = vpack.c.b16 %v1017, %v1016
    %v1029 = vpack.c.b16 %v1019, %v1018
    %v1030 = vpack.c.b16 %v1021, %v1020
    %v1031 = vpack.c.b16 %v1023, %v1022
    %1040 = vmatprep.subr.bf16.mxu0 0
    %1041 = vmatpush1.bf16.msra.mxu0 %v1024
    %1042 = vmatprep.subr.bf16.mxu0 0
    %1043 = vmatpush1.bf16.msra.mxu0 %v1025
    %1044 = vmatprep.subr.bf16.mxu0 0
    %1045 = vmatpush1.bf16.msra.mxu0 %v1026
    %1046 = vmatprep.subr.bf16.mxu0 0
    %1047 = vmatpush1.bf16.msra.mxu0 %v1027
    %1048 = vmatprep.subr.bf16.mxu0 0
    %1049 = vmatpush1.bf16.msra.mxu0 %v1028
    %1050 = vmatprep.subr.bf16.mxu0 0
    %1051 = vmatpush1.bf16.msra.mxu0 %v1029
    %1052 = vmatprep.subr.bf16.mxu0 0
    %1053 = vmatpush1.bf16.msra.mxu0 %v1030
    %1054 = vmatprep.subr.bf16.mxu0 0
    %1055 = vmatpush1.bf16.msra.mxu0 %v1031
    %1056 = vmatprep.subr.bf16.mxu0 0
    %1057 = vmatpush1.bf16.msra.mxu0 0
    %1058 = vmatprep.subr.bf16.mxu0 0
    %1059 = vmatpush1.bf16.msra.mxu0 0
    %1060 = vmatprep.subr.bf16.mxu0 0
    %1061 = vmatpush1.bf16.msra.mxu0 0
    %1062 = vmatprep.subr.bf16.mxu0 0
    %1063 = vmatpush1.bf16.msra.mxu0 0
    %1064 = vmatprep.subr.bf16.mxu0 0
    %1065 = vmatpush1.bf16.msra.mxu0 0
    %1066 = vmatprep.subr.bf16.mxu0 0
    %1067 = vmatpush1.bf16.msra.mxu0 0
    %1068 = vmatprep.subr.bf16.mxu0 0
    %1069 = vmatpush1.bf16.msra.mxu0 0
    %1070 = vmatprep.subr.bf16.mxu0 0
    %1071 = vmatpush1.bf16.msra.mxu0 0
    %1072 = vmatprep.mubr.bf16.mxu0 0
    %1073 = vmatmul.mubr.bf16.gmra.mrb[0].mxu0 %v153
    %v1074 = vpop.f32.mrb[0].mxu0
    %v1075 = vadd.f32 %v991, %v1074
    %v1076 = vpop.f32.mrb[0].mxu0
    %v1077 = vpop.f32.mrb[0].mxu0
    %v1078 = vpop.f32.mrb[0].mxu0
    %1079 = vdwg.mxu0
    %v1080 = vmul.f32 %v863, %v1075
    %v1081 = vadd.f32 %v970, %v1080
    %v1082 = vtanh.pop %v1081
    %v1083 = vsub.f32 1.0, %v869
    %v1084 = vmul.f32 %v1083, %v1082
    %v1085 = vmul.f32 %v869, %v151
    %v1086 = vadd.f32 %v1084, %v1085
    %v1087 = vpack.c.bf16 %v1086, %v1086
    %v1088 = vld [vmem:[#allocation13] sm:$0xf]
    %v1089 = vld [vmem:[#allocation13 + $0x4] sm:$0xf]
    %v1090 = vld [vmem:[#allocation13 + $0x8] sm:$0xf]
    %v1091 = vld [vmem:[#allocation13 + $0xc] sm:$0xf]
    %v1092 = vld [vmem:[#allocation13 + $0x10] sm:$0xf]
    %v1093 = vld [vmem:[#allocation13 + $0x14] sm:$0xf]
    %v1094 = vld [vmem:[#allocation13 + $0x18] sm:$0xf]
    %v1095 = vld [vmem:[#allocation13 + $0x1c] sm:$0xf]
    %v1096 = vld [vmem:[#allocation13 + $0x20] sm:$0xf]
    %v1097 = vld [vmem:[#allocation13 + $0x24] sm:$0xf]
    %v1098 = vld [vmem:[#allocation13 + $0x28] sm:$0xf]
    %v1099 = vld [vmem:[#allocation13 + $0x2c] sm:$0xf]
    %v1100 = vld [vmem:[#allocation13 + $0x30] sm:$0xf]
    %v1101 = vld [vmem:[#allocation13 + $0x34] sm:$0xf]
    %v1102 = vld [vmem:[#allocation13 + $0x38] sm:$0xf]
    %v1103 = vld [vmem:[#allocation13 + $0x3c] sm:$0xf]
    %v1104 = vld [vmem:[%s14] sm:$0x1]
    %v1121 = vunpack.c.l.b16 %v1088
    %v1122 = vunpack.c.l.b16 %v1089
    %v1123 = vunpack.c.l.b16 %v1090
    %v1124 = vunpack.c.l.b16 %v1091
    %v1125 = vunpack.c.l.b16 %v1092
    %v1126 = vunpack.c.l.b16 %v1093
    %v1127 = vunpack.c.l.b16 %v1094
    %v1128 = vunpack.c.l.b16 %v1095
    %v1129 = vunpack.c.l.b16 %v1096
    %v1130 = vunpack.c.l.b16 %v1097
    %v1131 = vunpack.c.l.b16 %v1098
    %v1132 = vunpack.c.l.b16 %v1099
    %v1133 = vunpack.c.l.b16 %v1100
    %v1134 = vunpack.c.l.b16 %v1101
    %v1135 = vunpack.c.l.b16 %v1102
    %v1136 = vunpack.c.l.b16 %v1103
    %v1137 = vpack.c.b16 %v1122, %v1121
    %v1138 = vpack.c.b16 %v1124, %v1123
    %v1139 = vpack.c.b16 %v1126, %v1125
    %v1140 = vpack.c.b16 %v1128, %v1127
    %v1141 = vpack.c.b16 %v1130, %v1129
    %v1142 = vpack.c.b16 %v1132, %v1131
    %v1143 = vpack.c.b16 %v1134, %v1133
    %v1144 = vpack.c.b16 %v1136, %v1135
    %1153 = vmatprep.subr.bf16.mxu0 0
    %1154 = vmatpush1.bf16.msra.mxu0 %v1137
    %1155 = vmatprep.subr.bf16.mxu0 0
    %1156 = vmatpush1.bf16.msra.mxu0 %v1138
    %1157 = vmatprep.subr.bf16.mxu0 0
    %1158 = vmatpush1.bf16.msra.mxu0 %v1139
    %1159 = vmatprep.subr.bf16.mxu0 0
    %1160 = vmatpush1.bf16.msra.mxu0 %v1140
    %1161 = vmatprep.subr.bf16.mxu0 0
    %1162 = vmatpush1.bf16.msra.mxu0 %v1141
    %1163 = vmatprep.subr.bf16.mxu0 0
    %1164 = vmatpush1.bf16.msra.mxu0 %v1142
    %1165 = vmatprep.subr.bf16.mxu0 0
    %1166 = vmatpush1.bf16.msra.mxu0 %v1143
    %1167 = vmatprep.subr.bf16.mxu0 0
    %1168 = vmatpush1.bf16.msra.mxu0 %v1144
    %1169 = vmatprep.subr.bf16.mxu0 0
    %1170 = vmatpush1.bf16.msra.mxu0 0
    %1171 = vmatprep.subr.bf16.mxu0 0
    %1172 = vmatpush1.bf16.msra.mxu0 0
    %1173 = vmatprep.subr.bf16.mxu0 0
    %1174 = vmatpush1.bf16.msra.mxu0 0
    %1175 = vmatprep.subr.bf16.mxu0 0
    %1176 = vmatpush1.bf16.msra.mxu0 0
    %1177 = vmatprep.subr.bf16.mxu0 0
    %1178 = vmatpush1.bf16.msra.mxu0 0
    %1179 = vmatprep.subr.bf16.mxu0 0
    %1180 = vmatpush1.bf16.msra.mxu0 0
    %1181 = vmatprep.subr.bf16.mxu0 0
    %1182 = vmatpush1.bf16.msra.mxu0 0
    %1183 = vmatprep.subr.bf16.mxu0 0
    %1184 = vmatpush1.bf16.msra.mxu0 0
    %1185 = vmatprep.mubr.bf16.mxu0 0
    %1186 = vmatmul.mubr.bf16.gmra.mrb[0].mxu0 %v1087
    %v1187 = vpop.f32.mrb[0].mxu0
    %v1188 = vadd.f32 %v1104, %v1187
    %v1189 = vpop.f32.mrb[0].mxu0
    %v1190 = vpop.f32.mrb[0].mxu0
    %v1191 = vpop.f32.mrb[0].mxu0
    %1192 = vdwg.mxu0
    %v1193 = vsel %vm323, %v1188, -inf
    %1194 = vmax.xlane.f32.xlu0 %v1193
    %v1195 = vpop.xlane.xlu0 %1194
    %v1196 = vsub.f32 %v1188, %v1195
    %v1197 = vmul.f32 %v1196, 1.442695
    %v1198 = vpow.pop %v1197
    %v1199 = vsel %vm323, %v1198, 0.0
    %1200 = vadd.xlane.f32.xlu0 %v1199
    %v1201 = vpop.xlane.xlu0 %1200
    %v1202 = vlog2.pop %v1201
    %v1203 = vmul.f32 %v1202, 0.6931472
    %v1204 = vsub.f32 %v1196, %v1203
    %1205 = vst [vmem:[#allocation14] sm:$0x1] %v1204
    %s1206 = scalar_lea.vmem %s0, 1
    %v1207 = vld [vmem:[%s1206] sm:$0x1]
    %v1208 = vld [vmem:[#allocation5] sm:$0xf]
    %v1209 = vld [vmem:[#allocation5 + $0x4] sm:$0xf]
    %v1210 = vld [vmem:[#allocation5 + $0x8] sm:$0xf]
    %v1211 = vld [vmem:[#allocation5 + $0xc] sm:$0xf]
    %v1212 = vld [vmem:[#allocation5 + $0x10] sm:$0xf]
    %v1213 = vld [vmem:[#allocation5 + $0x14] sm:$0xf]
    %v1214 = vld [vmem:[#allocation5 + $0x18] sm:$0xf]
    %v1215 = vld [vmem:[#allocation5 + $0x1c] sm:$0xf]
    %v1216 = vld [vmem:[#allocation5 + $0x20] sm:$0xf]
    %v1217 = vld [vmem:[#allocation5 + $0x24] sm:$0xf]
    %v1218 = vld [vmem:[#allocation5 + $0x28] sm:$0xf]
    %v1219 = vld [vmem:[#allocation5 + $0x2c] sm:$0xf]
    %v1220 = vld [vmem:[#allocation5 + $0x30] sm:$0xf]
    %v1221 = vld [vmem:[#allocation5 + $0x34] sm:$0xf]
    %v1222 = vld [vmem:[#allocation5 + $0x38] sm:$0xf]
    %v1223 = vld [vmem:[#allocation5 + $0x3c] sm:$0xf]
    %v1224 = vld [vmem:[#allocation5 + $0x40] sm:$0xf]
    %v1225 = vld [vmem:[#allocation5 + $0x44] sm:$0xf]
    %v1226 = vld [vmem:[#allocation5 + $0x48] sm:$0xf]
    %v1227 = vld [vmem:[#allocation5 + $0x4c] sm:$0xf]
    %v1228 = vld [vmem:[#allocation5 + $0x50] sm:$0xf]
    %v1229 = vld [vmem:[#allocation5 + $0x54] sm:$0xf]
    %v1230 = vld [vmem:[#allocation5 + $0x58] sm:$0xf]
    %v1231 = vld [vmem:[#allocation5 + $0x5c] sm:$0xf]
    %v1232 = vld [vmem:[#allocation5 + $0x60] sm:$0xf]
    %v1233 = vld [vmem:[#allocation5 + $0x64] sm:$0xf]
    %v1234 = vld [vmem:[#allocation5 + $0x68] sm:$0xf]
    %v1235 = vld [vmem:[#allocation5 + $0x6c] sm:$0xf]
    %v1236 = vld [vmem:[#allocation5 + $0x70] sm:$0xf]
    %v1237 = vld [vmem:[#allocation5 + $0x74] sm:$0xf]
    %v1238 = vld [vmem:[#allocation5 + $0x78] sm:$0xf]
    %v1239 = vld [vmem:[#allocation5 + $0x7c] sm:$0xf]
    %v1240 = vld [vmem:[%s4] sm:$0x1]
    %v1273 = vunpack.c.l.b16 %v1208
    %v1274 = vunpack.c.l.b16 %v1209
    %v1275 = vunpack.c.l.b16 %v1210
    %v1276 = vunpack.c.l.b16 %v1211
    %v1277 = vunpack.c.l.b16 %v1212
    %v1278 = vunpack.c.l.b16 %v1213
    %v1279 = vunpack.c.l.b16 %v1214
    %v1280 = vunpack.c.l.b16 %v1215
    %v1281 = vunpack.c.l.b16 %v1216
    %v1282 = vunpack.c.l.b16 %v1217
    %v1283 = vunpack.c.l.b16 %v1218
    %v1284 = vunpack.c.l.b16 %v1219
    %v1285 = vunpack.c.l.b16 %v1220
    %v1286 = vunpack.c.l.b16 %v1221
    %v1287 = vunpack.c.l.b16 %v1222
    %v1288 = vunpack.c.l.b16 %v1223
    %v1289 = vunpack.c.l.b16 %v1224
    %v1290 = vunpack.c.l.b16 %v1225
    %v1291 = vunpack.c.l.b16 %v1226
    %v1292 = vunpack.c.l.b16 %v1227
    %v1293 = vunpack.c.l.b16 %v1228
    %v1294 = vunpack.c.l.b16 %v1229
    %v1295 = vunpack.c.l.b16 %v1230
    %v1296 = vunpack.c.l.b16 %v1231
    %v1297 = vunpack.c.l.b16 %v1232
    %v1298 = vunpack.c.l.b16 %v1233
    %v1299 = vunpack.c.l.b16 %v1234
    %v1300 = vunpack.c.l.b16 %v1235
    %v1301 = vunpack.c.l.b16 %v1236
    %v1302 = vunpack.c.l.b16 %v1237
    %v1303 = vunpack.c.l.b16 %v1238
    %v1304 = vunpack.c.l.b16 %v1239
    %v1305 = vpack.c.b16 %v1274, %v1273
    %v1306 = vpack.c.b16 %v1276, %v1275
    %v1307 = vpack.c.b16 %v1278, %v1277
    %v1308 = vpack.c.b16 %v1280, %v1279
    %v1309 = vpack.c.b16 %v1282, %v1281
    %v1310 = vpack.c.b16 %v1284, %v1283
    %v1311 = vpack.c.b16 %v1286, %v1285
    %v1312 = vpack.c.b16 %v1288, %v1287
    %v1313 = vpack.c.b16 %v1290, %v1289
    %v1314 = vpack.c.b16 %v1292, %v1291
    %v1315 = vpack.c.b16 %v1294, %v1293
    %v1316 = vpack.c.b16 %v1296, %v1295
    %v1317 = vpack.c.b16 %v1298, %v1297
    %v1318 = vpack.c.b16 %v1300, %v1299
    %v1319 = vpack.c.b16 %v1302, %v1301
    %v1320 = vpack.c.b16 %v1304, %v1303
    %1337 = vmatprep.subr.bf16.mxu0 0
    %1338 = vmatpush1.bf16.msra.mxu0 %v1305
    %1339 = vmatprep.subr.bf16.mxu0 0
    %1340 = vmatpush1.bf16.msra.mxu0 %v1306
    %1341 = vmatprep.subr.bf16.mxu0 0
    %1342 = vmatpush1.bf16.msra.mxu0 %v1307
    %1343 = vmatprep.subr.bf16.mxu0 0
    %1344 = vmatpush1.bf16.msra.mxu0 %v1308
    %1345 = vmatprep.subr.bf16.mxu0 0
    %1346 = vmatpush1.bf16.msra.mxu0 %v1309
    %1347 = vmatprep.subr.bf16.mxu0 0
    %1348 = vmatpush1.bf16.msra.mxu0 %v1310
    %1349 = vmatprep.subr.bf16.mxu0 0
    %1350 = vmatpush1.bf16.msra.mxu0 %v1311
    %1351 = vmatprep.subr.bf16.mxu0 0
    %1352 = vmatpush1.bf16.msra.mxu0 %v1312
    %1353 = vmatprep.subr.bf16.mxu0 0
    %1354 = vmatpush1.bf16.msra.mxu0 %v1313
    %1355 = vmatprep.subr.bf16.mxu0 0
    %1356 = vmatpush1.bf16.msra.mxu0 %v1314
    %1357 = vmatprep.subr.bf16.mxu0 0
    %1358 = vmatpush1.bf16.msra.mxu0 %v1315
    %1359 = vmatprep.subr.bf16.mxu0 0
    %1360 = vmatpush1.bf16.msra.mxu0 %v1316
    %1361 = vmatprep.subr.bf16.mxu0 0
    %1362 = vmatpush1.bf16.msra.mxu0 %v1317
    %1363 = vmatprep.subr.bf16.mxu0 0
    %1364 = vmatpush1.bf16.msra.mxu0 %v1318
    %1365 = vmatprep.subr.bf16.mxu0 0
    %1366 = vmatpush1.bf16.msra.mxu0 %v1319
    %1367 = vmatprep.subr.bf16.mxu0 0
    %1368 = vmatpush1.bf16.msra.mxu0 %v1320
    %1369 = vmatprep.mubr.bf16.mxu0 %v1087
    %1370 = vmatmul.mubr.bf16.gmra.mrb[0].mxu0 %v1207
    %v1371 = vpop.f32.mrb[0].mxu0
    %v1372 = vadd.f32 %v1240, %v1371
    %v1373 = vpop.f32.mrb[0].mxu0
    %v1374 = vpop.f32.mrb[0].mxu0
    %v1375 = vpop.f32.mrb[0].mxu0
    %1376 = vdwg.mxu0
    %v1377 = vsel %vm323, %v1372, -inf
    %1378 = vmax.xlane.f32.xlu0 %v1377
    %v1379 = vpop.xlane.xlu0 %1378
    %v1380 = vsub.f32 %v1372, %v1379
    %v1381 = vmul.f32 %v1380, 1.442695
    %v1382 = vpow.pop %v1381
    %v1383 = vsel %vm323, %v1382, 0.0
    %1384 = vadd.xlane.f32.xlu0 %v1383
    %v1385 = vpop.xlane.xlu0 %1384
    %v1386 = vrcp.pop %v1385
    %v1387 = vmul.f32 %v1382, %v1386
    %s1388 = scalar_lea.vmem [#allocation17], 1
    %1389 = vst [vmem:[%s1388] sm:$0x1] %v1387
    %v1390 = vpack.c.bf16 %v1387, %v1387
    %v1391 = vld [vmem:[#allocation2] sm:$0xf]
    %v1392 = vld [vmem:[#allocation2 + $0x4] sm:$0xf]
    %v1393 = vld [vmem:[#allocation2 + $0x8] sm:$0xf]
    %v1394 = vld [vmem:[#allocation2 + $0xc] sm:$0xf]
    %v1395 = vld [vmem:[#allocation2 + $0x10] sm:$0xf]
    %v1396 = vld [vmem:[#allocation2 + $0x14] sm:$0xf]
    %v1397 = vld [vmem:[#allocation2 + $0x18] sm:$0xf]
    %v1398 = vld [vmem:[#allocation2 + $0x1c] sm:$0xf]
    %v1399 = vld [vmem:[#allocation2 + $0x20] sm:$0xf]
    %v1400 = vld [vmem:[#allocation2 + $0x24] sm:$0xf]
    %v1401 = vld [vmem:[#allocation2 + $0x28] sm:$0xf]
    %v1402 = vld [vmem:[#allocation2 + $0x2c] sm:$0xf]
    %v1403 = vld [vmem:[#allocation2 + $0x30] sm:$0xf]
    %v1404 = vld [vmem:[#allocation2 + $0x34] sm:$0xf]
    %v1405 = vld [vmem:[#allocation2 + $0x38] sm:$0xf]
    %v1406 = vld [vmem:[#allocation2 + $0x3c] sm:$0xf]
    %v1423 = vunpack.c.l.b16 %v1391
    %v1424 = vunpack.c.l.b16 %v1392
    %v1425 = vunpack.c.l.b16 %v1393
    %v1426 = vunpack.c.l.b16 %v1394
    %v1427 = vunpack.c.l.b16 %v1395
    %v1428 = vunpack.c.l.b16 %v1396
    %v1429 = vunpack.c.l.b16 %v1397
    %v1430 = vunpack.c.l.b16 %v1398
    %v1431 = vunpack.c.l.b16 %v1399
    %v1432 = vunpack.c.l.b16 %v1400
    %v1433 = vunpack.c.l.b16 %v1401
    %v1434 = vunpack.c.l.b16 %v1402
    %v1435 = vunpack.c.l.b16 %v1403
    %v1436 = vunpack.c.l.b16 %v1404
    %v1437 = vunpack.c.l.b16 %v1405
    %v1438 = vunpack.c.l.b16 %v1406
    %v1439 = vpack.c.b16 %v1424, %v1423
    %v1440 = vpack.c.b16 %v1426, %v1425
    %v1441 = vpack.c.b16 %v1428, %v1427
    %v1442 = vpack.c.b16 %v1430, %v1429
    %v1443 = vpack.c.b16 %v1432, %v1431
    %v1444 = vpack.c.b16 %v1434, %v1433
    %v1445 = vpack.c.b16 %v1436, %v1435
    %v1446 = vpack.c.b16 %v1438, %v1437
    %1455 = vmatprep.subr.bf16.mxu0 0
    %1456 = vmatpush1.bf16.msra.mxu0 %v1439
    %1457 = vmatprep.subr.bf16.mxu0 0
    %1458 = vmatpush1.bf16.msra.mxu0 %v1440
    %1459 = vmatprep.subr.bf16.mxu0 0
    %1460 = vmatpush1.bf16.msra.mxu0 %v1441
    %1461 = vmatprep.subr.bf16.mxu0 0
    %1462 = vmatpush1.bf16.msra.mxu0 %v1442
    %1463 = vmatprep.subr.bf16.mxu0 0
    %1464 = vmatpush1.bf16.msra.mxu0 %v1443
    %1465 = vmatprep.subr.bf16.mxu0 0
    %1466 = vmatpush1.bf16.msra.mxu0 %v1444
    %1467 = vmatprep.subr.bf16.mxu0 0
    %1468 = vmatpush1.bf16.msra.mxu0 %v1445
    %1469 = vmatprep.subr.bf16.mxu0 0
    %1470 = vmatpush1.bf16.msra.mxu0 %v1446
    %1471 = vmatprep.subr.bf16.mxu0 0
    %1472 = vmatpush1.bf16.msra.mxu0 0
    %1473 = vmatprep.subr.bf16.mxu0 0
    %1474 = vmatpush1.bf16.msra.mxu0 0
    %1475 = vmatprep.subr.bf16.mxu0 0
    %1476 = vmatpush1.bf16.msra.mxu0 0
    %1477 = vmatprep.subr.bf16.mxu0 0
    %1478 = vmatpush1.bf16.msra.mxu0 0
    %1479 = vmatprep.subr.bf16.mxu0 0
    %1480 = vmatpush1.bf16.msra.mxu0 0
    %1481 = vmatprep.subr.bf16.mxu0 0
    %1482 = vmatpush1.bf16.msra.mxu0 0
    %1483 = vmatprep.subr.bf16.mxu0 0
    %1484 = vmatpush1.bf16.msra.mxu0 0
    %1485 = vmatprep.subr.bf16.mxu0 0
    %1486 = vmatpush1.bf16.msra.mxu0 0
    %1487 = vmatprep.mubr.bf16.mxu0 0
    %1488 = vmatmul.mubr.bf16.gmra.mrb[0].mxu0 %v1390
    %v1489 = vpop.f32.mrb[0].mxu0
    %v1490 = vadd.f32 0.0, %v1489
    %v1491 = vpop.f32.mrb[0].mxu0
    %v1492 = vpop.f32.mrb[0].mxu0
    %v1493 = vpop.f32.mrb[0].mxu0
    %1494 = vdwg.mxu0
    %v1495 = vpack.c.bf16 %v1490, %v1490
    %v1496 = vld [vmem:[#allocation7] sm:$0xf]
    %v1497 = vld [vmem:[#allocation7 + $0x4] sm:$0xf]
    %v1498 = vld [vmem:[#allocation7 + $0x8] sm:$0xf]
    %v1499 = vld [vmem:[#allocation7 + $0xc] sm:$0xf]
    %v1500 = vld [vmem:[#allocation7 + $0x10] sm:$0xf]
    %v1501 = vld [vmem:[#allocation7 + $0x14] sm:$0xf]
    %v1502 = vld [vmem:[#allocation7 + $0x18] sm:$0xf]
    %v1503 = vld [vmem:[#allocation7 + $0x1c] sm:$0xf]
    %v1504 = vld [vmem:[#allocation7 + $0x20] sm:$0xf]
    %v1505 = vld [vmem:[#allocation7 + $0x24] sm:$0xf]
    %v1506 = vld [vmem:[#allocation7 + $0x28] sm:$0xf]
    %v1507 = vld [vmem:[#allocation7 + $0x2c] sm:$0xf]
    %v1508 = vld [vmem:[#allocation7 + $0x30] sm:$0xf]
    %v1509 = vld [vmem:[#allocation7 + $0x34] sm:$0xf]
    %v1510 = vld [vmem:[#allocation7 + $0x38] sm:$0xf]
    %v1511 = vld [vmem:[#allocation7 + $0x3c] sm:$0xf]
    %v1512 = vld [vmem:[#allocation7 + $0x40] sm:$0xf]
    %v1513 = vld [vmem:[#allocation7 + $0x44] sm:$0xf]
    %v1514 = vld [vmem:[#allocation7 + $0x48] sm:$0xf]
    %v1515 = vld [vmem:[#allocation7 + $0x4c] sm:$0xf]
    %v1516 = vld [vmem:[#allocation7 + $0x50] sm:$0xf]
    %v1517 = vld [vmem:[#allocation7 + $0x54] sm:$0xf]
    %v1518 = vld [vmem:[#allocation7 + $0x58] sm:$0xf]
    %v1519 = vld [vmem:[#allocation7 + $0x5c] sm:$0xf]
    %v1520 = vld [vmem:[#allocation7 + $0x60] sm:$0xf]
    %v1521 = vld [vmem:[#allocation7 + $0x64] sm:$0xf]
    %v1522 = vld [vmem:[#allocation7 + $0x68] sm:$0xf]
    %v1523 = vld [vmem:[#allocation7 + $0x6c] sm:$0xf]
    %v1524 = vld [vmem:[#allocation7 + $0x70] sm:$0xf]
    %v1525 = vld [vmem:[#allocation7 + $0x74] sm:$0xf]
    %v1526 = vld [vmem:[#allocation7 + $0x78] sm:$0xf]
    %v1527 = vld [vmem:[#allocation7 + $0x7c] sm:$0xf]
    %v1528 = vld [vmem:[%s6] sm:$0x1]
    %v1561 = vunpack.c.l.b16 %v1496
    %v1562 = vunpack.c.l.b16 %v1497
    %v1563 = vunpack.c.l.b16 %v1498
    %v1564 = vunpack.c.l.b16 %v1499
    %v1565 = vunpack.c.l.b16 %v1500
    %v1566 = vunpack.c.l.b16 %v1501
    %v1567 = vunpack.c.l.b16 %v1502
    %v1568 = vunpack.c.l.b16 %v1503
    %v1569 = vunpack.c.l.b16 %v1504
    %v1570 = vunpack.c.l.b16 %v1505
    %v1571 = vunpack.c.l.b16 %v1506
    %v1572 = vunpack.c.l.b16 %v1507
    %v1573 = vunpack.c.l.b16 %v1508
    %v1574 = vunpack.c.l.b16 %v1509
    %v1575 = vunpack.c.l.b16 %v1510
    %v1576 = vunpack.c.l.b16 %v1511
    %v1577 = vunpack.c.l.b16 %v1512
    %v1578 = vunpack.c.l.b16 %v1513
    %v1579 = vunpack.c.l.b16 %v1514
    %v1580 = vunpack.c.l.b16 %v1515
    %v1581 = vunpack.c.l.b16 %v1516
    %v1582 = vunpack.c.l.b16 %v1517
    %v1583 = vunpack.c.l.b16 %v1518
    %v1584 = vunpack.c.l.b16 %v1519
    %v1585 = vunpack.c.l.b16 %v1520
    %v1586 = vunpack.c.l.b16 %v1521
    %v1587 = vunpack.c.l.b16 %v1522
    %v1588 = vunpack.c.l.b16 %v1523
    %v1589 = vunpack.c.l.b16 %v1524
    %v1590 = vunpack.c.l.b16 %v1525
    %v1591 = vunpack.c.l.b16 %v1526
    %v1592 = vunpack.c.l.b16 %v1527
    %v1593 = vpack.c.b16 %v1562, %v1561
    %v1594 = vpack.c.b16 %v1564, %v1563
    %v1595 = vpack.c.b16 %v1566, %v1565
    %v1596 = vpack.c.b16 %v1568, %v1567
    %v1597 = vpack.c.b16 %v1570, %v1569
    %v1598 = vpack.c.b16 %v1572, %v1571
    %v1599 = vpack.c.b16 %v1574, %v1573
    %v1600 = vpack.c.b16 %v1576, %v1575
    %v1601 = vpack.c.b16 %v1578, %v1577
    %v1602 = vpack.c.b16 %v1580, %v1579
    %v1603 = vpack.c.b16 %v1582, %v1581
    %v1604 = vpack.c.b16 %v1584, %v1583
    %v1605 = vpack.c.b16 %v1586, %v1585
    %v1606 = vpack.c.b16 %v1588, %v1587
    %v1607 = vpack.c.b16 %v1590, %v1589
    %v1608 = vpack.c.b16 %v1592, %v1591
    %1625 = vmatprep.subr.bf16.mxu0 0
    %1626 = vmatpush1.bf16.msra.mxu0 %v1593
    %1627 = vmatprep.subr.bf16.mxu0 0
    %1628 = vmatpush1.bf16.msra.mxu0 %v1594
    %1629 = vmatprep.subr.bf16.mxu0 0
    %1630 = vmatpush1.bf16.msra.mxu0 %v1595
    %1631 = vmatprep.subr.bf16.mxu0 0
    %1632 = vmatpush1.bf16.msra.mxu0 %v1596
    %1633 = vmatprep.subr.bf16.mxu0 0
    %1634 = vmatpush1.bf16.msra.mxu0 %v1597
    %1635 = vmatprep.subr.bf16.mxu0 0
    %1636 = vmatpush1.bf16.msra.mxu0 %v1598
    %1637 = vmatprep.subr.bf16.mxu0 0
    %1638 = vmatpush1.bf16.msra.mxu0 %v1599
    %1639 = vmatprep.subr.bf16.mxu0 0
    %1640 = vmatpush1.bf16.msra.mxu0 %v1600
    %1641 = vmatprep.subr.bf16.mxu0 0
    %1642 = vmatpush1.bf16.msra.mxu0 %v1601
    %1643 = vmatprep.subr.bf16.mxu0 0
    %1644 = vmatpush1.bf16.msra.mxu0 %v1602
    %1645 = vmatprep.subr.bf16.mxu0 0
    %1646 = vmatpush1.bf16.msra.mxu0 %v1603
    %1647 = vmatprep.subr.bf16.mxu0 0
    %1648 = vmatpush1.bf16.msra.mxu0 %v1604
    %1649 = vmatprep.subr.bf16.mxu0 0
    %1650 = vmatpush1.bf16.msra.mxu0 %v1605
    %1651 = vmatprep.subr.bf16.mxu0 0
    %1652 = vmatpush1.bf16.msra.mxu0 %v1606
    %1653 = vmatprep.subr.bf16.mxu0 0
    %1654 = vmatpush1.bf16.msra.mxu0 %v1607
    %1655 = vmatprep.subr.bf16.mxu0 0
    %1656 = vmatpush1.bf16.msra.mxu0 %v1608
    %1657 = vmatprep.mubr.bf16.mxu0 %v1495
    %1658 = vmatmul.mubr.bf16.gmra.mrb[0].mxu0 %v1207
    %v1659 = vpop.f32.mrb[0].mxu0
    %v1660 = vadd.f32 %v1528, %v1659
    %v1661 = vpop.f32.mrb[0].mxu0
    %v1662 = vpop.f32.mrb[0].mxu0
    %v1663 = vpop.f32.mrb[0].mxu0
    %1664 = vdwg.mxu0
    %v1665 = vmax.f32 %v1660, 0.0
    %v1666 = vpack.c.bf16 %v1665, %v1665
    %v1667 = vld [vmem:[#allocation8] sm:$0xff]
    %v1668 = vld [vmem:[#allocation8 + $0x8] sm:$0xff]
    %v1669 = vld [vmem:[#allocation8 + $0x10] sm:$0xff]
    %v1670 = vld [vmem:[#allocation8 + $0x18] sm:$0xff]
    %v1671 = vld [vmem:[#allocation8 + $0x20] sm:$0xff]
    %v1672 = vld [vmem:[#allocation8 + $0x28] sm:$0xff]
    %v1673 = vld [vmem:[#allocation8 + $0x30] sm:$0xff]
    %v1674 = vld [vmem:[#allocation8 + $0x38] sm:$0xff]
    %v1675 = vld [vmem:[#allocation8 + $0x40] sm:$0xff]
    %v1676 = vld [vmem:[#allocation8 + $0x48] sm:$0xff]
    %v1677 = vld [vmem:[#allocation8 + $0x50] sm:$0xff]
    %v1678 = vld [vmem:[#allocation8 + $0x58] sm:$0xff]
    %v1679 = vld [vmem:[#allocation8 + $0x60] sm:$0xff]
    %v1680 = vld [vmem:[#allocation8 + $0x68] sm:$0xff]
    %v1681 = vld [vmem:[#allocation8 + $0x70] sm:$0xff]
    %v1682 = vld [vmem:[#allocation8 + $0x78] sm:$0xff]
    %v1683 = vld [vmem:[#allocation8 + $0x80] sm:$0xff]
    %v1684 = vld [vmem:[#allocation8 + $0x88] sm:$0xff]
    %v1685 = vld [vmem:[#allocation8 + $0x90] sm:$0xff]
    %v1686 = vld [vmem:[#allocation8 + $0x98] sm:$0xff]
    %v1687 = vld [vmem:[#allocation8 + $0xa0] sm:$0xff]
    %v1688 = vld [vmem:[#allocation8 + $0xa8] sm:$0xff]
    %v1689 = vld [vmem:[#allocation8 + $0xb0] sm:$0xff]
    %v1690 = vld [vmem:[#allocation8 + $0xb8] sm:$0xff]
    %v1691 = vld [vmem:[#allocation8 + $0xc0] sm:$0xff]
    %v1692 = vld [vmem:[#allocation8 + $0xc8] sm:$0xff]
    %v1693 = vld [vmem:[#allocation8 + $0xd0] sm:$0xff]
    %v1694 = vld [vmem:[#allocation8 + $0xd8] sm:$0xff]
    %v1695 = vld [vmem:[#allocation8 + $0xe0] sm:$0xff]
    %v1696 = vld [vmem:[#allocation8 + $0xe8] sm:$0xff]
    %v1697 = vld [vmem:[#allocation8 + $0xf0] sm:$0xff]
    %v1698 = vld [vmem:[#allocation8 + $0xf8] sm:$0xff]
    %v1699 = vld [vmem:[%s8] sm:$0x3]
    %v1732 = vunpack.c.l.b16 %v1667
    %v1733 = vunpack.c.h.b16 %v1667
    %v1734 = vunpack.c.l.b16 %v1668
    %v1735 = vunpack.c.h.b16 %v1668
    %v1736 = vunpack.c.l.b16 %v1669
    %v1737 = vunpack.c.h.b16 %v1669
    %v1738 = vunpack.c.l.b16 %v1670
    %v1739 = vunpack.c.h.b16 %v1670
    %v1740 = vunpack.c.l.b16 %v1671
    %v1741 = vunpack.c.h.b16 %v1671
    %v1742 = vunpack.c.l.b16 %v1672
    %v1743 = vunpack.c.h.b16 %v1672
    %v1744 = vunpack.c.l.b16 %v1673
    %v1745 = vunpack.c.h.b16 %v1673
    %v1746 = vunpack.c.l.b16 %v1674
    %v1747 = vunpack.c.h.b16 %v1674
    %v1748 = vunpack.c.l.b16 %v1675
    %v1749 = vunpack.c.h.b16 %v1675
    %v1750 = vunpack.c.l.b16 %v1676
    %v1751 = vunpack.c.h.b16 %v1676
    %v1752 = vunpack.c.l.b16 %v1677
    %v1753 = vunpack.c.h.b16 %v1677
    %v1754 = vunpack.c.l.b16 %v1678
    %v1755 = vunpack.c.h.b16 %v1678
    %v1756 = vunpack.c.l.b16 %v1679
    %v1757 = vunpack.c.h.b16 %v1679
    %v1758 = vunpack.c.l.b16 %v1680
    %v1759 = vunpack.c.h.b16 %v1680
    %v1760 = vunpack.c.l.b16 %v1681
    %v1761 = vunpack.c.h.b16 %v1681
    %v1762 = vunpack.c.l.b16 %v1682
    %v1763 = vunpack.c.h.b16 %v1682
    %v1764 = vunpack.c.l.b16 %v1683
    %v1765 = vunpack.c.h.b16 %v1683
    %v1766 = vunpack.c.l.b16 %v1684
    %v1767 = vunpack.c.h.b16 %v1684
    %v1768 = vunpack.c.l.b16 %v1685
    %v1769 = vunpack.c.h.b16 %v1685
    %v1770 = vunpack.c.l.b16 %v1686
    %v1771 = vunpack.c.h.b16 %v1686
    %v1772 = vunpack.c.l.b16 %v1687
    %v1773 = vunpack.c.h.b16 %v1687
    %v1774 = vunpack.c.l.b16 %v1688
    %v1775 = vunpack.c.h.b16 %v1688
    %v1776 = vunpack.c.l.b16 %v1689
    %v1777 = vunpack.c.h.b16 %v1689
    %v1778 = vunpack.c.l.b16 %v1690
    %v1779 = vunpack.c.h.b16 %v1690
    %v1780 = vunpack.c.l.b16 %v1691
    %v1781 = vunpack.c.h.b16 %v1691
    %v1782 = vunpack.c.l.b16 %v1692
    %v1783 = vunpack.c.h.b16 %v1692
    %v1784 = vunpack.c.l.b16 %v1693
    %v1785 = vunpack.c.h.b16 %v1693
    %v1786 = vunpack.c.l.b16 %v1694
    %v1787 = vunpack.c.h.b16 %v1694
    %v1788 = vunpack.c.l.b16 %v1695
    %v1789 = vunpack.c.h.b16 %v1695
    %v1790 = vunpack.c.l.b16 %v1696
    %v1791 = vunpack.c.h.b16 %v1696
    %v1792 = vunpack.c.l.b16 %v1697
    %v1793 = vunpack.c.h.b16 %v1697
    %v1794 = vunpack.c.l.b16 %v1698
    %v1795 = vunpack.c.h.b16 %v1698
    %v1796 = vpack.c.b16 %v1734, %v1732
    %v1797 = vpack.c.b16 %v1735, %v1733
    %v1798 = vpack.c.b16 %v1738, %v1736
    %v1799 = vpack.c.b16 %v1739, %v1737
    %v1800 = vpack.c.b16 %v1742, %v1740
    %v1801 = vpack.c.b16 %v1743, %v1741
    %v1802 = vpack.c.b16 %v1746, %v1744
    %v1803 = vpack.c.b16 %v1747, %v1745
    %v1804 = vpack.c.b16 %v1750, %v1748
    %v1805 = vpack.c.b16 %v1751, %v1749
    %v1806 = vpack.c.b16 %v1754, %v1752
    %v1807 = vpack.c.b16 %v1755, %v1753
    %v1808 = vpack.c.b16 %v1758, %v1756
    %v1809 = vpack.c.b16 %v1759, %v1757
    %v1810 = vpack.c.b16 %v1762, %v1760
    %v1811 = vpack.c.b16 %v1763, %v1761
    %v1812 = vpack.c.b16 %v1766, %v1764
    %v1813 = vpack.c.b16 %v1767, %v1765
    %v1814 = vpack.c.b16 %v1770, %v1768
    %v1815 = vpack.c.b16 %v1771, %v1769
    %v1816 = vpack.c.b16 %v1774, %v1772
    %v1817 = vpack.c.b16 %v1775, %v1773
    %v1818 = vpack.c.b16 %v1778, %v1776
    %v1819 = vpack.c.b16 %v1779, %v1777
    %v1820 = vpack.c.b16 %v1782, %v1780
    %v1821 = vpack.c.b16 %v1783, %v1781
    %v1822 = vpack.c.b16 %v1786, %v1784
    %v1823 = vpack.c.b16 %v1787, %v1785
    %v1824 = vpack.c.b16 %v1790, %v1788
    %v1825 = vpack.c.b16 %v1791, %v1789
    %v1826 = vpack.c.b16 %v1794, %v1792
    %v1827 = vpack.c.b16 %v1795, %v1793
    %v1861 = vlaneseq
    %v1862 = vshrl.u32 %v1861, 7
    %v1863 = vsub.s32 0, %v1862
    %v1864 = vrot.slane %v1699, %v1863
    %v1865 = vlaneseq
    %v1866 = vshrl.u32 %v1865, 7
    %v1867 = vsub.s32 1, %v1866
    %v1868 = vrot.slane %v1699, %v1867
    %1871 = vmatprep.subr.bf16.mxu0 %v1797
    %1872 = vmatpush1.bf16.msra.mxu0 %v1796
    %1873 = vmatprep.subr.bf16.mxu0 %v1799
    %1874 = vmatpush1.bf16.msra.mxu0 %v1798
    %1875 = vmatprep.subr.bf16.mxu0 %v1801
    %1876 = vmatpush1.bf16.msra.mxu0 %v1800
    %1877 = vmatprep.subr.bf16.mxu0 %v1803
    %1878 = vmatpush1.bf16.msra.mxu0 %v1802
    %1879 = vmatprep.subr.bf16.mxu0 %v1805
    %1880 = vmatpush1.bf16.msra.mxu0 %v1804
    %1881 = vmatprep.subr.bf16.mxu0 %v1807
    %1882 = vmatpush1.bf16.msra.mxu0 %v1806
    %1883 = vmatprep.subr.bf16.mxu0 %v1809
    %1884 = vmatpush1.bf16.msra.mxu0 %v1808
    %1885 = vmatprep.subr.bf16.mxu0 %v1811
    %1886 = vmatpush1.bf16.msra.mxu0 %v1810
    %1887 = vmatprep.subr.bf16.mxu0 %v1813
    %1888 = vmatpush1.bf16.msra.mxu0 %v1812
    %1889 = vmatprep.subr.bf16.mxu0 %v1815
    %1890 = vmatpush1.bf16.msra.mxu0 %v1814
    %1891 = vmatprep.subr.bf16.mxu0 %v1817
    %1892 = vmatpush1.bf16.msra.mxu0 %v1816
    %1893 = vmatprep.subr.bf16.mxu0 %v1819
    %1894 = vmatpush1.bf16.msra.mxu0 %v1818
    %1895 = vmatprep.subr.bf16.mxu0 %v1821
    %1896 = vmatpush1.bf16.msra.mxu0 %v1820
    %1897 = vmatprep.subr.bf16.mxu0 %v1823
    %1898 = vmatpush1.bf16.msra.mxu0 %v1822
    %1899 = vmatprep.subr.bf16.mxu0 %v1825
    %1900 = vmatpush1.bf16.msra.mxu0 %v1824
    %1901 = vmatprep.subr.bf16.mxu0 %v1827
    %1902 = vmatpush1.bf16.msra.mxu0 %v1826
    %1903 = vmatprep.mubr.bf16.mxu0 %v1087
    %1904 = vmatmul.mubr.bf16.gmra.mrb[0].mxu0 %v1666
    %v1905 = vpop.f32.mrb[0].mxu0
    %v1906 = vadd.f32 %v1864, %v1905
    %v1907 = vpop.f32.mrb[0].mxu0
    %v1908 = vadd.f32 %v1868, %v1907
    %v1909 = vpop.f32.mrb[0].mxu0
    %v1910 = vpop.f32.mrb[0].mxu0
    %1911 = vdwg.mxu0
    %v1912 = vxor.u32 %v1906, 2147483648
    %v1913 = vmul.f32 %v1912, 1.442695
    %v1914 = vpow.pop %v1913
    %v1915 = vadd.f32 %v1914, 1.0
    %v1916 = vrcp.pop %v1915
    %v1917 = vmul.f32 1.0, %v1916
    %v1918 = vxor.u32 %v1908, 2147483648
    %v1919 = vmul.f32 %v1918, 1.442695
    %v1920 = vpow.pop %v1919
    %v1921 = vadd.f32 %v1920, 1.0
    %v1922 = vrcp.pop %v1921
    %v1923 = vmul.f32 1.0, %v1922
    %v1924 = vld [vmem:[#allocation10] sm:$0xf]
    %v1925 = vld [vmem:[#allocation10 + $0x4] sm:$0xf]
    %v1926 = vld [vmem:[#allocation10 + $0x8] sm:$0xf]
    %v1927 = vld [vmem:[#allocation10 + $0xc] sm:$0xf]
    %v1928 = vld [vmem:[#allocation10 + $0x10] sm:$0xf]
    %v1929 = vld [vmem:[#allocation10 + $0x14] sm:$0xf]
    %v1930 = vld [vmem:[#allocation10 + $0x18] sm:$0xf]
    %v1931 = vld [vmem:[#allocation10 + $0x1c] sm:$0xf]
    %v1932 = vld [vmem:[#allocation10 + $0x20] sm:$0xf]
    %v1933 = vld [vmem:[#allocation10 + $0x24] sm:$0xf]
    %v1934 = vld [vmem:[#allocation10 + $0x28] sm:$0xf]
    %v1935 = vld [vmem:[#allocation10 + $0x2c] sm:$0xf]
    %v1936 = vld [vmem:[#allocation10 + $0x30] sm:$0xf]
    %v1937 = vld [vmem:[#allocation10 + $0x34] sm:$0xf]
    %v1938 = vld [vmem:[#allocation10 + $0x38] sm:$0xf]
    %v1939 = vld [vmem:[#allocation10 + $0x3c] sm:$0xf]
    %v1940 = vld [vmem:[%s10] sm:$0x1]
    %v1957 = vunpack.c.l.b16 %v1924
    %v1958 = vunpack.c.l.b16 %v1925
    %v1959 = vunpack.c.l.b16 %v1926
    %v1960 = vunpack.c.l.b16 %v1927
    %v1961 = vunpack.c.l.b16 %v1928
    %v1962 = vunpack.c.l.b16 %v1929
    %v1963 = vunpack.c.l.b16 %v1930
    %v1964 = vunpack.c.l.b16 %v1931
    %v1965 = vunpack.c.l.b16 %v1932
    %v1966 = vunpack.c.l.b16 %v1933
    %v1967 = vunpack.c.l.b16 %v1934
    %v1968 = vunpack.c.l.b16 %v1935
    %v1969 = vunpack.c.l.b16 %v1936
    %v1970 = vunpack.c.l.b16 %v1937
    %v1971 = vunpack.c.l.b16 %v1938
    %v1972 = vunpack.c.l.b16 %v1939
    %v1973 = vpack.c.b16 %v1958, %v1957
    %v1974 = vpack.c.b16 %v1960, %v1959
    %v1975 = vpack.c.b16 %v1962, %v1961
    %v1976 = vpack.c.b16 %v1964, %v1963
    %v1977 = vpack.c.b16 %v1966, %v1965
    %v1978 = vpack.c.b16 %v1968, %v1967
    %v1979 = vpack.c.b16 %v1970, %v1969
    %v1980 = vpack.c.b16 %v1972, %v1971
    %1989 = vmatprep.subr.bf16.mxu0 0
    %1990 = vmatpush1.bf16.msra.mxu0 %v1973
    %1991 = vmatprep.subr.bf16.mxu0 0
    %1992 = vmatpush1.bf16.msra.mxu0 %v1974
    %1993 = vmatprep.subr.bf16.mxu0 0
    %1994 = vmatpush1.bf16.msra.mxu0 %v1975
    %1995 = vmatprep.subr.bf16.mxu0 0
    %1996 = vmatpush1.bf16.msra.mxu0 %v1976
    %1997 = vmatprep.subr.bf16.mxu0 0
    %1998 = vmatpush1.bf16.msra.mxu0 %v1977
    %1999 = vmatprep.subr.bf16.mxu0 0
    %2000 = vmatpush1.bf16.msra.mxu0 %v1978
    %2001 = vmatprep.subr.bf16.mxu0 0
    %2002 = vmatpush1.bf16.msra.mxu0 %v1979
    %2003 = vmatprep.subr.bf16.mxu0 0
    %2004 = vmatpush1.bf16.msra.mxu0 %v1980
    %2005 = vmatprep.subr.bf16.mxu0 0
    %2006 = vmatpush1.bf16.msra.mxu0 0
    %2007 = vmatprep.subr.bf16.mxu0 0
    %2008 = vmatpush1.bf16.msra.mxu0 0
    %2009 = vmatprep.subr.bf16.mxu0 0
    %2010 = vmatpush1.bf16.msra.mxu0 0
    %2011 = vmatprep.subr.bf16.mxu0 0
    %2012 = vmatpush1.bf16.msra.mxu0 0
    %2013 = vmatprep.subr.bf16.mxu0 0
    %2014 = vmatpush1.bf16.msra.mxu0 0
    %2015 = vmatprep.subr.bf16.mxu0 0
    %2016 = vmatpush1.bf16.msra.mxu0 0
    %2017 = vmatprep.subr.bf16.mxu0 0
    %2018 = vmatpush1.bf16.msra.mxu0 0
    %2019 = vmatprep.subr.bf16.mxu0 0
    %2020 = vmatpush1.bf16.msra.mxu0 0
    %2021 = vmatprep.mubr.bf16.mxu0 0
    %2022 = vmatmul.mubr.bf16.gmra.mrb[0].mxu0 %v1666
    %v2023 = vpop.f32.mrb[0].mxu0
    %v2024 = vadd.f32 %v1940, %v2023
    %v2025 = vpop.f32.mrb[0].mxu0
    %v2026 = vpop.f32.mrb[0].mxu0
    %v2027 = vpop.f32.mrb[0].mxu0
    %2028 = vdwg.mxu0
    %v2029 = vld [vmem:[#allocation11] sm:$0xf]
    %v2030 = vld [vmem:[#allocation11 + $0x4] sm:$0xf]
    %v2031 = vld [vmem:[#allocation11 + $0x8] sm:$0xf]
    %v2032 = vld [vmem:[#allocation11 + $0xc] sm:$0xf]
    %v2033 = vld [vmem:[#allocation11 + $0x10] sm:$0xf]
    %v2034 = vld [vmem:[#allocation11 + $0x14] sm:$0xf]
    %v2035 = vld [vmem:[#allocation11 + $0x18] sm:$0xf]
    %v2036 = vld [vmem:[#allocation11 + $0x1c] sm:$0xf]
    %v2037 = vld [vmem:[#allocation11 + $0x20] sm:$0xf]
    %v2038 = vld [vmem:[#allocation11 + $0x24] sm:$0xf]
    %v2039 = vld [vmem:[#allocation11 + $0x28] sm:$0xf]
    %v2040 = vld [vmem:[#allocation11 + $0x2c] sm:$0xf]
    %v2041 = vld [vmem:[#allocation11 + $0x30] sm:$0xf]
    %v2042 = vld [vmem:[#allocation11 + $0x34] sm:$0xf]
    %v2043 = vld [vmem:[#allocation11 + $0x38] sm:$0xf]
    %v2044 = vld [vmem:[#allocation11 + $0x3c] sm:$0xf]
    %v2045 = vld [vmem:[%s12] sm:$0x1]
    %v2062 = vunpack.c.l.b16 %v2029
    %v2063 = vunpack.c.l.b16 %v2030
    %v2064 = vunpack.c.l.b16 %v2031
    %v2065 = vunpack.c.l.b16 %v2032
    %v2066 = vunpack.c.l.b16 %v2033
    %v2067 = vunpack.c.l.b16 %v2034
    %v2068 = vunpack.c.l.b16 %v2035
    %v2069 = vunpack.c.l.b16 %v2036
    %v2070 = vunpack.c.l.b16 %v2037
    %v2071 = vunpack.c.l.b16 %v2038
    %v2072 = vunpack.c.l.b16 %v2039
    %v2073 = vunpack.c.l.b16 %v2040
    %v2074 = vunpack.c.l.b16 %v2041
    %v2075 = vunpack.c.l.b16 %v2042
    %v2076 = vunpack.c.l.b16 %v2043
    %v2077 = vunpack.c.l.b16 %v2044
    %v2078 = vpack.c.b16 %v2063, %v2062
    %v2079 = vpack.c.b16 %v2065, %v2064
    %v2080 = vpack.c.b16 %v2067, %v2066
    %v2081 = vpack.c.b16 %v2069, %v2068
    %v2082 = vpack.c.b16 %v2071, %v2070
    %v2083 = vpack.c.b16 %v2073, %v2072
    %v2084 = vpack.c.b16 %v2075, %v2074
    %v2085 = vpack.c.b16 %v2077, %v2076
    %2094 = vmatprep.subr.bf16.mxu0 0
    %2095 = vmatpush1.bf16.msra.mxu0 %v2078
    %2096 = vmatprep.subr.bf16.mxu0 0
    %2097 = vmatpush1.bf16.msra.mxu0 %v2079
    %2098 = vmatprep.subr.bf16.mxu0 0
    %2099 = vmatpush1.bf16.msra.mxu0 %v2080
    %2100 = vmatprep.subr.bf16.mxu0 0
    %2101 = vmatpush1.bf16.msra.mxu0 %v2081
    %2102 = vmatprep.subr.bf16.mxu0 0
    %2103 = vmatpush1.bf16.msra.mxu0 %v2082
    %2104 = vmatprep.subr.bf16.mxu0 0
    %2105 = vmatpush1.bf16.msra.mxu0 %v2083
    %2106 = vmatprep.subr.bf16.mxu0 0
    %2107 = vmatpush1.bf16.msra.mxu0 %v2084
    %2108 = vmatprep.subr.bf16.mxu0 0
    %2109 = vmatpush1.bf16.msra.mxu0 %v2085
    %2110 = vmatprep.subr.bf16.mxu0 0
    %2111 = vmatpush1.bf16.msra.mxu0 0
    %2112 = vmatprep.subr.bf16.mxu0 0
    %2113 = vmatpush1.bf16.msra.mxu0 0
    %2114 = vmatprep.subr.bf16.mxu0 0
    %2115 = vmatpush1.bf16.msra.mxu0 0
    %2116 = vmatprep.subr.bf16.mxu0 0
    %2117 = vmatpush1.bf16.msra.mxu0 0
    %2118 = vmatprep.subr.bf16.mxu0 0
    %2119 = vmatpush1.bf16.msra.mxu0 0
    %2120 = vmatprep.subr.bf16.mxu0 0
    %2121 = vmatpush1.bf16.msra.mxu0 0
    %2122 = vmatprep.subr.bf16.mxu0 0
    %2123 = vmatpush1.bf16.msra.mxu0 0
    %2124 = vmatprep.subr.bf16.mxu0 0
    %2125 = vmatpush1.bf16.msra.mxu0 0
    %2126 = vmatprep.mubr.bf16.mxu0 0
    %2127 = vmatmul.mubr.bf16.gmra.mrb[0].mxu0 %v1087
    %v2128 = vpop.f32.mrb[0].mxu0
    %v2129 = vadd.f32 %v2045, %v2128
    %v2130 = vpop.f32.mrb[0].mxu0
    %v2131 = vpop.f32.mrb[0].mxu0
    %v2132 = vpop.f32.mrb[0].mxu0
    %2133 = vdwg.mxu0
    %v2134 = vmul.f32 %v1917, %v2129
    %v2135 = vadd.f32 %v2024, %v2134
    %v2136 = vtanh.pop %v2135
    %v2137 = vsub.f32 1.0, %v1923
    %v2138 = vmul.f32 %v2137, %v2136
    %v2139 = vmul.f32 %v1923, %v1086
    %v2140 = vadd.f32 %v2138, %v2139
    %v2141 = vpack.c.bf16 %v2140, %v2140
    %v2142 = vld [vmem:[#allocation13] sm:$0xf]
    %v2143 = vld [vmem:[#allocation13 + $0x4] sm:$0xf]
    %v2144 = vld [vmem:[#allocation13 + $0x8] sm:$0xf]
    %v2145 = vld [vmem:[#allocation13 + $0xc] sm:$0xf]
    %v2146 = vld [vmem:[#allocation13 + $0x10] sm:$0xf]
    %v2147 = vld [vmem:[#allocation13 + $0x14] sm:$0xf]
    %v2148 = vld [vmem:[#allocation13 + $0x18] sm:$0xf]
    %v2149 = vld [vmem:[#allocation13 + $0x1c] sm:$0xf]
    %v2150 = vld [vmem:[#allocation13 + $0x20] sm:$0xf]
    %v2151 = vld [vmem:[#allocation13 + $0x24] sm:$0xf]
    %v2152 = vld [vmem:[#allocation13 + $0x28] sm:$0xf]
    %v2153 = vld [vmem:[#allocation13 + $0x2c] sm:$0xf]
    %v2154 = vld [vmem:[#allocation13 + $0x30] sm:$0xf]
    %v2155 = vld [vmem:[#allocation13 + $0x34] sm:$0xf]
    %v2156 = vld [vmem:[#allocation13 + $0x38] sm:$0xf]
    %v2157 = vld [vmem:[#allocation13 + $0x3c] sm:$0xf]
    %v2158 = vld [vmem:[%s14] sm:$0x1]
    %v2175 = vunpack.c.l.b16 %v2142
    %v2176 = vunpack.c.l.b16 %v2143
    %v2177 = vunpack.c.l.b16 %v2144
    %v2178 = vunpack.c.l.b16 %v2145
    %v2179 = vunpack.c.l.b16 %v2146
    %v2180 = vunpack.c.l.b16 %v2147
    %v2181 = vunpack.c.l.b16 %v2148
    %v2182 = vunpack.c.l.b16 %v2149
    %v2183 = vunpack.c.l.b16 %v2150
    %v2184 = vunpack.c.l.b16 %v2151
    %v2185 = vunpack.c.l.b16 %v2152
    %v2186 = vunpack.c.l.b16 %v2153
    %v2187 = vunpack.c.l.b16 %v2154
    %v2188 = vunpack.c.l.b16 %v2155
    %v2189 = vunpack.c.l.b16 %v2156
    %v2190 = vunpack.c.l.b16 %v2157
    %v2191 = vpack.c.b16 %v2176, %v2175
    %v2192 = vpack.c.b16 %v2178, %v2177
    %v2193 = vpack.c.b16 %v2180, %v2179
    %v2194 = vpack.c.b16 %v2182, %v2181
    %v2195 = vpack.c.b16 %v2184, %v2183
    %v2196 = vpack.c.b16 %v2186, %v2185
    %v2197 = vpack.c.b16 %v2188, %v2187
    %v2198 = vpack.c.b16 %v2190, %v2189
    %2207 = vmatprep.subr.bf16.mxu0 0
    %2208 = vmatpush1.bf16.msra.mxu0 %v2191
    %2209 = vmatprep.subr.bf16.mxu0 0
    %2210 = vmatpush1.bf16.msra.mxu0 %v2192
    %2211 = vmatprep.subr.bf16.mxu0 0
    %2212 = vmatpush1.bf16.msra.mxu0 %v2193
    %2213 = vmatprep.subr.bf16.mxu0 0
    %2214 = vmatpush1.bf16.msra.mxu0 %v2194
    %2215 = vmatprep.subr.bf16.mxu0 0
    %2216 = vmatpush1.bf16.msra.mxu0 %v2195
    %2217 = vmatprep.subr.bf16.mxu0 0
    %2218 = vmatpush1.bf16.msra.mxu0 %v2196
    %2219 = vmatprep.subr.bf16.mxu0 0
    %2220 = vmatpush1.bf16.msra.mxu0 %v2197
    %2221 = vmatprep.subr.bf16.mxu0 0
    %2222 = vmatpush1.bf16.msra.mxu0 %v2198
    %2223 = vmatprep.subr.bf16.mxu0 0
    %2224 = vmatpush1.bf16.msra.mxu0 0
    %2225 = vmatprep.subr.bf16.mxu0 0
    %2226 = vmatpush1.bf16.msra.mxu0 0
    %2227 = vmatprep.subr.bf16.mxu0 0
    %2228 = vmatpush1.bf16.msra.mxu0 0
    %2229 = vmatprep.subr.bf16.mxu0 0
    %2230 = vmatpush1.bf16.msra.mxu0 0
    %2231 = vmatprep.subr.bf16.mxu0 0
    %2232 = vmatpush1.bf16.msra.mxu0 0
    %2233 = vmatprep.subr.bf16.mxu0 0
    %2234 = vmatpush1.bf16.msra.mxu0 0
    %2235 = vmatprep.subr.bf16.mxu0 0
    %2236 = vmatpush1.bf16.msra.mxu0 0
    %2237 = vmatprep.subr.bf16.mxu0 0
    %2238 = vmatpush1.bf16.msra.mxu0 0
    %2239 = vmatprep.mubr.bf16.mxu0 0
    %2240 = vmatmul.mubr.bf16.gmra.mrb[0].mxu0 %v2141
    %v2241 = vpop.f32.mrb[0].mxu0
    %v2242 = vadd.f32 %v2158, %v2241
    %v2243 = vpop.f32.mrb[0].mxu0
    %v2244 = vpop.f32.mrb[0].mxu0
    %v2245 = vpop.f32.mrb[0].mxu0
    %2246 = vdwg.mxu0
    %v2247 = vsel %vm323, %v2242, -inf
    %2248 = vmax.xlane.f32.xlu0 %v2247
    %v2249 = vpop.xlane.xlu0 %2248
    %v2250 = vsub.f32 %v2242, %v2249
    %v2251 = vmul.f32 %v2250, 1.442695
    %v2252 = vpow.pop %v2251
    %v2253 = vsel %vm323, %v2252, 0.0
    %2254 = vadd.xlane.f32.xlu0 %v2253
    %v2255 = vpop.xlane.xlu0 %2254
    %v2256 = vlog2.pop %v2255
    %v2257 = vmul.f32 %v2256, 0.6931472
    %v2258 = vsub.f32 %v2250, %v2257
    %s2259 = scalar_lea.vmem [#allocation14], 1
    %2260 = vst [vmem:[%s2259] sm:$0x1] %v2258
    %s2261 = scalar_lea.vmem %s0, 2
    %v2262 = vld [vmem:[%s2261] sm:$0x1]
    %v2263 = vld [vmem:[#allocation5] sm:$0xf]
    %v2264 = vld [vmem:[#allocation5 + $0x4] sm:$0xf]
    %v2265 = vld [vmem:[#allocation5 + $0x8] sm:$0xf]
    %v2266 = vld [vmem:[#allocation5 + $0xc] sm:$0xf]
    %v2267 = vld [vmem:[#allocation5 + $0x10] sm:$0xf]
    %v2268 = vld [vmem:[#allocation5 + $0x14] sm:$0xf]
    %v2269 = vld [vmem:[#allocation5 + $0x18] sm:$0xf]
    %v2270 = vld [vmem:[#allocation5 + $0x1c] sm:$0xf]
    %v2271 = vld [vmem:[#allocation5 + $0x20] sm:$0xf]
    %v2272 = vld [vmem:[#allocation5 + $0x24] sm:$0xf]
    %v2273 = vld [vmem:[#allocation5 + $0x28] sm:$0xf]
    %v2274 = vld [vmem:[#allocation5 + $0x2c] sm:$0xf]
    %v2275 = vld [vmem:[#allocation5 + $0x30] sm:$0xf]
    %v2276 = vld [vmem:[#allocation5 + $0x34] sm:$0xf]
    %v2277 = vld [vmem:[#allocation5 + $0x38] sm:$0xf]
    %v2278 = vld [vmem:[#allocation5 + $0x3c] sm:$0xf]
    %v2279 = vld [vmem:[#allocation5 + $0x40] sm:$0xf]
    %v2280 = vld [vmem:[#allocation5 + $0x44] sm:$0xf]
    %v2281 = vld [vmem:[#allocation5 + $0x48] sm:$0xf]
    %v2282 = vld [vmem:[#allocation5 + $0x4c] sm:$0xf]
    %v2283 = vld [vmem:[#allocation5 + $0x50] sm:$0xf]
    %v2284 = vld [vmem:[#allocation5 + $0x54] sm:$0xf]
    %v2285 = vld [vmem:[#allocation5 + $0x58] sm:$0xf]
    %v2286 = vld [vmem:[#allocation5 + $0x5c] sm:$0xf]
    %v2287 = vld [vmem:[#allocation5 + $0x60] sm:$0xf]
    %v2288 = vld [vmem:[#allocation5 + $0x64] sm:$0xf]
    %v2289 = vld [vmem:[#allocation5 + $0x68] sm:$0xf]
    %v2290 = vld [vmem:[#allocation5 + $0x6c] sm:$0xf]
    %v2291 = vld [vmem:[#allocation5 + $0x70] sm:$0xf]
    %v2292 = vld [vmem:[#allocation5 + $0x74] sm:$0xf]
    %v2293 = vld [vmem:[#allocation5 + $0x78] sm:$0xf]
    %v2294 = vld [vmem:[#allocation5 + $0x7c] sm:$0xf]
    %v2295 = vld [vmem:[%s4] sm:$0x1]
    %v2328 = vunpack.c.l.b16 %v2263
    %v2329 = vunpack.c.l.b16 %v2264
    %v2330 = vunpack.c.l.b16 %v2265
    %v2331 = vunpack.c.l.b16 %v2266
    %v2332 = vunpack.c.l.b16 %v2267
    %v2333 = vunpack.c.l.b16 %v2268
    %v2334 = vunpack.c.l.b16 %v2269
    %v2335 = vunpack.c.l.b16 %v2270
    %v2336 = vunpack.c.l.b16 %v2271
    %v2337 = vunpack.c.l.b16 %v2272
    %v2338 = vunpack.c.l.b16 %v2273
    %v2339 = vunpack.c.l.b16 %v2274
    %v2340 = vunpack.c.l.b16 %v2275
    %v2341 = vunpack.c.l.b16 %v2276
    %v2342 = vunpack.c.l.b16 %v2277
    %v2343 = vunpack.c.l.b16 %v2278
    %v2344 = vunpack.c.l.b16 %v2279
    %v2345 = vunpack.c.l.b16 %v2280
    %v2346 = vunpack.c.l.b16 %v2281
    %v2347 = vunpack.c.l.b16 %v2282
    %v2348 = vunpack.c.l.b16 %v2283
    %v2349 = vunpack.c.l.b16 %v2284
    %v2350 = vunpack.c.l.b16 %v2285
    %v2351 = vunpack.c.l.b16 %v2286
    %v2352 = vunpack.c.l.b16 %v2287
    %v2353 = vunpack.c.l.b16 %v2288
    %v2354 = vunpack.c.l.b16 %v2289
    %v2355 = vunpack.c.l.b16 %v2290
    %v2356 = vunpack.c.l.b16 %v2291
    %v2357 = vunpack.c.l.b16 %v2292
    %v2358 = vunpack.c.l.b16 %v2293
    %v2359 = vunpack.c.l.b16 %v2294
    %v2360 = vpack.c.b16 %v2329, %v2328
    %v2361 = vpack.c.b16 %v2331, %v2330
    %v2362 = vpack.c.b16 %v2333, %v2332
    %v2363 = vpack.c.b16 %v2335, %v2334
    %v2364 = vpack.c.b16 %v2337, %v2336
    %v2365 = vpack.c.b16 %v2339, %v2338
    %v2366 = vpack.c.b16 %v2341, %v2340
    %v2367 = vpack.c.b16 %v2343, %v2342
    %v2368 = vpack.c.b16 %v2345, %v2344
    %v2369 = vpack.c.b16 %v2347, %v2346
    %v2370 = vpack.c.b16 %v2349, %v2348
    %v2371 = vpack.c.b16 %v2351, %v2350
    %v2372 = vpack.c.b16 %v2353, %v2352
    %v2373 = vpack.c.b16 %v2355, %v2354
    %v2374 = vpack.c.b16 %v2357, %v2356
    %v2375 = vpack.c.b16 %v2359, %v2358
    %2392 = vmatprep.subr.bf16.mxu0 0
    %2393 = vmatpush1.bf16.msra.mxu0 %v2360
    %2394 = vmatprep.subr.bf16.mxu0 0
    %2395 = vmatpush1.bf16.msra.mxu0 %v2361
    %2396 = vmatprep.subr.bf16.mxu0 0
    %2397 = vmatpush1.bf16.msra.mxu0 %v2362
    %2398 = vmatprep.subr.bf16.mxu0 0
    %2399 = vmatpush1.bf16.msra.mxu0 %v2363
    %2400 = vmatprep.subr.bf16.mxu0 0
    %2401 = vmatpush1.bf16.msra.mxu0 %v2364
    %2402 = vmatprep.subr.bf16.mxu0 0
    %2403 = vmatpush1.bf16.msra.mxu0 %v2365
    %2404 = vmatprep.subr.bf16.mxu0 0
    %2405 = vmatpush1.bf16.msra.mxu0 %v2366
    %2406 = vmatprep.subr.bf16.mxu0 0
    %2407 = vmatpush1.bf16.msra.mxu0 %v2367
    %2408 = vmatprep.subr.bf16.mxu0 0
    %2409 = vmatpush1.bf16.msra.mxu0 %v2368
    %2410 = vmatprep.subr.bf16.mxu0 0
    %2411 = vmatpush1.bf16.msra.mxu0 %v2369
    %2412 = vmatprep.subr.bf16.mxu0 0
    %2413 = vmatpush1.bf16.msra.mxu0 %v2370
    %2414 = vmatprep.subr.bf16.mxu0 0
    %2415 = vmatpush1.bf16.msra.mxu0 %v2371
    %2416 = vmatprep.subr.bf16.mxu0 0
    %2417 = vmatpush1.bf16.msra.mxu0 %v2372
    %2418 = vmatprep.subr.bf16.mxu0 0
    %2419 = vmatpush1.bf16.msra.mxu0 %v2373
    %2420 = vmatprep.subr.bf16.mxu0 0
    %2421 = vmatpush1.bf16.msra.mxu0 %v2374
    %2422 = vmatprep.subr.bf16.mxu0 0
    %2423 = vmatpush1.bf16.msra.mxu0 %v2375
    %2424 = vmatprep.mubr.bf16.mxu0 %v2141
    %2425 = vmatmul.mubr.bf16.gmra.mrb[0].mxu0 %v2262
    %v2426 = vpop.f32.mrb[0].mxu0
    %v2427 = vadd.f32 %v2295, %v2426
    %v2428 = vpop.f32.mrb[0].mxu0
    %v2429 = vpop.f32.mrb[0].mxu0
    %v2430 = vpop.f32.mrb[0].mxu0
    %2431 = vdwg.mxu0
    %v2432 = vsel %vm323, %v2427, -inf
    %2433 = vmax.xlane.f32.xlu0 %v2432
    %v2434 = vpop.xlane.xlu0 %2433
    %v2435 = vsub.f32 %v2427, %v2434
    %v2436 = vmul.f32 %v2435, 1.442695
    %v2437 = vpow.pop %v2436
    %v2438 = vsel %vm323, %v2437, 0.0
    %2439 = vadd.xlane.f32.xlu0 %v2438
    %v2440 = vpop.xlane.xlu0 %2439
    %v2441 = vrcp.pop %v2440
    %v2442 = vmul.f32 %v2437, %v2441
    %s2443 = scalar_lea.vmem [#allocation17], 2
    %2444 = vst [vmem:[%s2443] sm:$0x1] %v2442
    %v2445 = vpack.c.bf16 %v2442, %v2442
    %v2446 = vld [vmem:[#allocation2] sm:$0xf]
    %v2447 = vld [vmem:[#allocation2 + $0x4] sm:$0xf]
    %v2448 = vld [vmem:[#allocation2 + $0x8] sm:$0xf]
    %v2449 = vld [vmem:[#allocation2 + $0xc] sm:$0xf]
    %v2450 = vld [vmem:[#allocation2 + $0x10] sm:$0xf]
    %v2451 = vld [vmem:[#allocation2 + $0x14] sm:$0xf]
    %v2452 = vld [vmem:[#allocation2 + $0x18] sm:$0xf]
    %v2453 = vld [vmem:[#allocation2 + $0x1c] sm:$0xf]
    %v2454 = vld [vmem:[#allocation2 + $0x20] sm:$0xf]
    %v2455 = vld [vmem:[#allocation2 + $0x24] sm:$0xf]
    %v2456 = vld [vmem:[#allocation2 + $0x28] sm:$0xf]
    %v2457 = vld [vmem:[#allocation2 + $0x2c] sm:$0xf]
    %v2458 = vld [vmem:[#allocation2 + $0x30] sm:$0xf]
    %v2459 = vld [vmem:[#allocation2 + $0x34] sm:$0xf]
    %v2460 = vld [vmem:[#allocation2 + $0x38] sm:$0xf]
    %v2461 = vld [vmem:[#allocation2 + $0x3c] sm:$0xf]
    %v2478 = vunpack.c.l.b16 %v2446
    %v2479 = vunpack.c.l.b16 %v2447
    %v2480 = vunpack.c.l.b16 %v2448
    %v2481 = vunpack.c.l.b16 %v2449
    %v2482 = vunpack.c.l.b16 %v2450
    %v2483 = vunpack.c.l.b16 %v2451
    %v2484 = vunpack.c.l.b16 %v2452
    %v2485 = vunpack.c.l.b16 %v2453
    %v2486 = vunpack.c.l.b16 %v2454
    %v2487 = vunpack.c.l.b16 %v2455
    %v2488 = vunpack.c.l.b16 %v2456
    %v2489 = vunpack.c.l.b16 %v2457
    %v2490 = vunpack.c.l.b16 %v2458
    %v2491 = vunpack.c.l.b16 %v2459
    %v2492 = vunpack.c.l.b16 %v2460
    %v2493 = vunpack.c.l.b16 %v2461
    %v2494 = vpack.c.b16 %v2479, %v2478
    %v2495 = vpack.c.b16 %v2481, %v2480
    %v2496 = vpack.c.b16 %v2483, %v2482
    %v2497 = vpack.c.b16 %v2485, %v2484
    %v2498 = vpack.c.b16 %v2487, %v2486
    %v2499 = vpack.c.b16 %v2489, %v2488
    %v2500 = vpack.c.b16 %v2491, %v2490
    %v2501 = vpack.c.b16 %v2493, %v2492
    %2510 = vmatprep.subr.bf16.mxu0 0
    %2511 = vmatpush1.bf16.msra.mxu0 %v2494
    %2512 = vmatprep.subr.bf16.mxu0 0
    %2513 = vmatpush1.bf16.msra.mxu0 %v2495
    %2514 = vmatprep.subr.bf16.mxu0 0
    %2515 = vmatpush1.bf16.msra.mxu0 %v2496
    %2516 = vmatprep.subr.bf16.mxu0 0
    %2517 = vmatpush1.bf16.msra.mxu0 %v2497
    %2518 = vmatprep.subr.bf16.mxu0 0
    %2519 = vmatpush1.bf16.msra.mxu0 %v2498
    %2520 = vmatprep.subr.bf16.mxu0 0
    %2521 = vmatpush1.bf16.msra.mxu0 %v2499
    %2522 = vmatprep.subr.bf16.mxu0 0
    %2523 = vmatpush1.bf16.msra.mxu0 %v2500
    %2524 = vmatprep.subr.bf16.mxu0 0
    %2525 = vmatpush1.bf16.msra.mxu0 %v2501
    %2526 = vmatprep.subr.bf16.mxu0 0
    %2527 = vmatpush1.bf16.msra.mxu0 0
    %2528 = vmatprep.subr.bf16.mxu0 0
    %2529 = vmatpush1.bf16.msra.mxu0 0
    %2530 = vmatprep.subr.bf16.mxu0 0
    %2531 = vmatpush1.bf16.msra.mxu0 0
    %2532 = vmatprep.subr.bf16.mxu0 0
    %2533 = vmatpush1.bf16.msra.mxu0 0
    %2534 = vmatprep.subr.bf16.mxu0 0
    %2535 = vmatpush1.bf16.msra.mxu0 0
    %2536 = vmatprep.subr.bf16.mxu0 0
    %2537 = vmatpush1.bf16.msra.mxu0 0
    %2538 = vmatprep.subr.bf16.mxu0 0
    %2539 = vmatpush1.bf16.msra.mxu0 0
    %2540 = vmatprep.subr.bf16.mxu0 0
    %2541 = vmatpush1.bf16.msra.mxu0 0
    %2542 = vmatprep.mubr.bf16.mxu0 0
    %2543 = vmatmul.mubr.bf16.gmra.mrb[0].mxu0 %v2445
    %v2544 = vpop.f32.mrb[0].mxu0
    %v2545 = vadd.f32 0.0, %v2544
    %v2546 = vpop.f32.mrb[0].mxu0
    %v2547 = vpop.f32.mrb[0].mxu0
    %v2548 = vpop.f32.mrb[0].mxu0
    %2549 = vdwg.mxu0
    %v2550 = vpack.c.bf16 %v2545, %v2545
    %v2551 = vld [vmem:[#allocation7] sm:$0xf]
    %v2552 = vld [vmem:[#allocation7 + $0x4] sm:$0xf]
    %v2553 = vld [vmem:[#allocation7 + $0x8] sm:$0xf]
    %v2554 = vld [vmem:[#allocation7 + $0xc] sm:$0xf]
    %v2555 = vld [vmem:[#allocation7 + $0x10] sm:$0xf]
    %v2556 = vld [vmem:[#allocation7 + $0x14] sm:$0xf]
    %v2557 = vld [vmem:[#allocation7 + $0x18] sm:$0xf]
    %v2558 = vld [vmem:[#allocation7 + $0x1c] sm:$0xf]
    %v2559 = vld [vmem:[#allocation7 + $0x20] sm:$0xf]
    %v2560 = vld [vmem:[#allocation7 + $0x24] sm:$0xf]
    %v2561 = vld [vmem:[#allocation7 + $0x28] sm:$0xf]
    %v2562 = vld [vmem:[#allocation7 + $0x2c] sm:$0xf]
    %v2563 = vld [vmem:[#allocation7 + $0x30] sm:$0xf]
    %v2564 = vld [vmem:[#allocation7 + $0x34] sm:$0xf]
    %v2565 = vld [vmem:[#allocation7 + $0x38] sm:$0xf]
    %v2566 = vld [vmem:[#allocation7 + $0x3c] sm:$0xf]
    %v2567 = vld [vmem:[#allocation7 + $0x40] sm:$0xf]
    %v2568 = vld [vmem:[#allocation7 + $0x44] sm:$0xf]
    %v2569 = vld [vmem:[#allocation7 + $0x48] sm:$0xf]
    %v2570 = vld [vmem:[#allocation7 + $0x4c] sm:$0xf]
    %v2571 = vld [vmem:[#allocation7 + $0x50] sm:$0xf]
    %v2572 = vld [vmem:[#allocation7 + $0x54] sm:$0xf]
    %v2573 = vld [vmem:[#allocation7 + $0x58] sm:$0xf]
    %v2574 = vld [vmem:[#allocation7 + $0x5c] sm:$0xf]
    %v2575 = vld [vmem:[#allocation7 + $0x60] sm:$0xf]
    %v2576 = vld [vmem:[#allocation7 + $0x64] sm:$0xf]
    %v2577 = vld [vmem:[#allocation7 + $0x68] sm:$0xf]
    %v2578 = vld [vmem:[#allocation7 + $0x6c] sm:$0xf]
    %v2579 = vld [vmem:[#allocation7 + $0x70] sm:$0xf]
    %v2580 = vld [vmem:[#allocation7 + $0x74] sm:$0xf]
    %v2581 = vld [vmem:[#allocation7 + $0x78] sm:$0xf]
    %v2582 = vld [vmem:[#allocation7 + $0x7c] sm:$0xf]
    %v2583 = vld [vmem:[%s6] sm:$0x1]
    %v2616 = vunpack.c.l.b16 %v2551
    %v2617 = vunpack.c.l.b16 %v2552
    %v2618 = vunpack.c.l.b16 %v2553
    %v2619 = vunpack.c.l.b16 %v2554
    %v2620 = vunpack.c.l.b16 %v2555
    %v2621 = vunpack.c.l.b16 %v2556
    %v2622 = vunpack.c.l.b16 %v2557
    %v2623 = vunpack.c.l.b16 %v2558
    %v2624 = vunpack.c.l.b16 %v2559
    %v2625 = vunpack.c.l.b16 %v2560
    %v2626 = vunpack.c.l.b16 %v2561
    %v2627 = vunpack.c.l.b16 %v2562
    %v2628 = vunpack.c.l.b16 %v2563
    %v2629 = vunpack.c.l.b16 %v2564
    %v2630 = vunpack.c.l.b16 %v2565
    %v2631 = vunpack.c.l.b16 %v2566
    %v2632 = vunpack.c.l.b16 %v2567
    %v2633 = vunpack.c.l.b16 %v2568
    %v2634 = vunpack.c.l.b16 %v2569
    %v2635 = vunpack.c.l.b16 %v2570
    %v2636 = vunpack.c.l.b16 %v2571
    %v2637 = vunpack.c.l.b16 %v2572
    %v2638 = vunpack.c.l.b16 %v2573
    %v2639 = vunpack.c.l.b16 %v2574
    %v2640 = vunpack.c.l.b16 %v2575
    %v2641 = vunpack.c.l.b16 %v2576
    %v2642 = vunpack.c.l.b16 %v2577
    %v2643 = vunpack.c.l.b16 %v2578
    %v2644 = vunpack.c.l.b16 %v2579
    %v2645 = vunpack.c.l.b16 %v2580
    %v2646 = vunpack.c.l.b16 %v2581
    %v2647 = vunpack.c.l.b16 %v2582
    %v2648 = vpack.c.b16 %v2617, %v2616
    %v2649 = vpack.c.b16 %v2619, %v2618
    %v2650 = vpack.c.b16 %v2621, %v2620
    %v2651 = vpack.c.b16 %v2623, %v2622
    %v2652 = vpack.c.b16 %v2625, %v2624
    %v2653 = vpack.c.b16 %v2627, %v2626
    %v2654 = vpack.c.b16 %v2629, %v2628
    %v2655 = vpack.c.b16 %v2631, %v2630
    %v2656 = vpack.c.b16 %v2633, %v2632
    %v2657 = vpack.c.b16 %v2635, %v2634
    %v2658 = vpack.c.b16 %v2637, %v2636
    %v2659 = vpack.c.b16 %v2639, %v2638
    %v2660 = vpack.c.b16 %v2641, %v2640
    %v2661 = vpack.c.b16 %v2643, %v2642
    %v2662 = vpack.c.b16 %v2645, %v2644
    %v2663 = vpack.c.b16 %v2647, %v2646
    %2680 = vmatprep.subr.bf16.mxu0 0
    %2681 = vmatpush1.bf16.msra.mxu0 %v2648
    %2682 = vmatprep.subr.bf16.mxu0 0
    %2683 = vmatpush1.bf16.msra.mxu0 %v2649
    %2684 = vmatprep.subr.bf16.mxu0 0
    %2685 = vmatpush1.bf16.msra.mxu0 %v2650
    %2686 = vmatprep.subr.bf16.mxu0 0
    %2687 = vmatpush1.bf16.msra.mxu0 %v2651
    %2688 = vmatprep.subr.bf16.mxu0 0
    %2689 = vmatpush1.bf16.msra.mxu0 %v2652
    %2690 = vmatprep.subr.bf16.mxu0 0
    %2691 = vmatpush1.bf16.msra.mxu0 %v2653
    %2692 = vmatprep.subr.bf16.mxu0 0
    %2693 = vmatpush1.bf16.msra.mxu0 %v2654
    %2694 = vmatprep.subr.bf16.mxu0 0
    %2695 = vmatpush1.bf16.msra.mxu0 %v2655
    %2696 = vmatprep.subr.bf16.mxu0 0
    %2697 = vmatpush1.bf16.msra.mxu0 %v2656
    %2698 = vmatprep.subr.bf16.mxu0 0
    %2699 = vmatpush1.bf16.msra.mxu0 %v2657
    %2700 = vmatprep.subr.bf16.mxu0 0
    %2701 = vmatpush1.bf16.msra.mxu0 %v2658
    %2702 = vmatprep.subr.bf16.mxu0 0
    %2703 = vmatpush1.bf16.msra.mxu0 %v2659
    %2704 = vmatprep.subr.bf16.mxu0 0
    %2705 = vmatpush1.bf16.msra.mxu0 %v2660
    %2706 = vmatprep.subr.bf16.mxu0 0
    %2707 = vmatpush1.bf16.msra.mxu0 %v2661
    %2708 = vmatprep.subr.bf16.mxu0 0
    %2709 = vmatpush1.bf16.msra.mxu0 %v2662
    %2710 = vmatprep.subr.bf16.mxu0 0
    %2711 = vmatpush1.bf16.msra.mxu0 %v2663
    %2712 = vmatprep.mubr.bf16.mxu0 %v2550
    %2713 = vmatmul.mubr.bf16.gmra.mrb[0].mxu0 %v2262
    %v2714 = vpop.f32.mrb[0].mxu0
    %v2715 = vadd.f32 %v2583, %v2714
    %v2716 = vpop.f32.mrb[0].mxu0
    %v2717 = vpop.f32.mrb[0].mxu0
    %v2718 = vpop.f32.mrb[0].mxu0
    %2719 = vdwg.mxu0
    %v2720 = vmax.f32 %v2715, 0.0
    %v2721 = vpack.c.bf16 %v2720, %v2720
    %v2722 = vld [vmem:[#allocation8] sm:$0xff]
    %v2723 = vld [vmem:[#allocation8 + $0x8] sm:$0xff]
    %v2724 = vld [vmem:[#allocation8 + $0x10] sm:$0xff]
    %v2725 = vld [vmem:[#allocation8 + $0x18] sm:$0xff]
    %v2726 = vld [vmem:[#allocation8 + $0x20] sm:$0xff]
    %v2727 = vld [vmem:[#allocation8 + $0x28] sm:$0xff]
    %v2728 = vld [vmem:[#allocation8 + $0x30] sm:$0xff]
    %v2729 = vld [vmem:[#allocation8 + $0x38] sm:$0xff]
    %v2730 = vld [vmem:[#allocation8 + $0x40] sm:$0xff]
    %v2731 = vld [vmem:[#allocation8 + $0x48] sm:$0xff]
    %v2732 = vld [vmem:[#allocation8 + $0x50] sm:$0xff]
    %v2733 = vld [vmem:[#allocation8 + $0x58] sm:$0xff]
    %v2734 = vld [vmem:[#allocation8 + $0x60] sm:$0xff]
    %v2735 = vld [vmem:[#allocation8 + $0x68] sm:$0xff]
    %v2736 = vld [vmem:[#allocation8 + $0x70] sm:$0xff]
    %v2737 = vld [vmem:[#allocation8 + $0x78] sm:$0xff]
    %v2738 = vld [vmem:[#allocation8 + $0x80] sm:$0xff]
    %v2739 = vld [vmem:[#allocation8 + $0x88] sm:$0xff]
    %v2740 = vld [vmem:[#allocation8 + $0x90] sm:$0xff]
    %v2741 = vld [vmem:[#allocation8 + $0x98] sm:$0xff]
    %v2742 = vld [vmem:[#allocation8 + $0xa0] sm:$0xff]
    %v2743 = vld [vmem:[#allocation8 + $0xa8] sm:$0xff]
    %v2744 = vld [vmem:[#allocation8 + $0xb0] sm:$0xff]
    %v2745 = vld [vmem:[#allocation8 + $0xb8] sm:$0xff]
    %v2746 = vld [vmem:[#allocation8 + $0xc0] sm:$0xff]
    %v2747 = vld [vmem:[#allocation8 + $0xc8] sm:$0xff]
    %v2748 = vld [vmem:[#allocation8 + $0xd0] sm:$0xff]
    %v2749 = vld [vmem:[#allocation8 + $0xd8] sm:$0xff]
    %v2750 = vld [vmem:[#allocation8 + $0xe0] sm:$0xff]
    %v2751 = vld [vmem:[#allocation8 + $0xe8] sm:$0xff]
    %v2752 = vld [vmem:[#allocation8 + $0xf0] sm:$0xff]
    %v2753 = vld [vmem:[#allocation8 + $0xf8] sm:$0xff]
    %v2754 = vld [vmem:[%s8] sm:$0x3]
    %v2787 = vunpack.c.l.b16 %v2722
    %v2788 = vunpack.c.h.b16 %v2722
    %v2789 = vunpack.c.l.b16 %v2723
    %v2790 = vunpack.c.h.b16 %v2723
    %v2791 = vunpack.c.l.b16 %v2724
    %v2792 = vunpack.c.h.b16 %v2724
    %v2793 = vunpack.c.l.b16 %v2725
    %v2794 = vunpack.c.h.b16 %v2725
    %v2795 = vunpack.c.l.b16 %v2726
    %v2796 = vunpack.c.h.b16 %v2726
    %v2797 = vunpack.c.l.b16 %v2727
    %v2798 = vunpack.c.h.b16 %v2727
    %v2799 = vunpack.c.l.b16 %v2728
    %v2800 = vunpack.c.h.b16 %v2728
    %v2801 = vunpack.c.l.b16 %v2729
    %v2802 = vunpack.c.h.b16 %v2729
    %v2803 = vunpack.c.l.b16 %v2730
    %v2804 = vunpack.c.h.b16 %v2730
    %v2805 = vunpack.c.l.b16 %v2731
    %v2806 = vunpack.c.h.b16 %v2731
    %v2807 = vunpack.c.l.b16 %v2732
    %v2808 = vunpack.c.h.b16 %v2732
    %v2809 = vunpack.c.l.b16 %v2733
    %v2810 = vunpack.c.h.b16 %v2733
    %v2811 = vunpack.c.l.b16 %v2734
    %v2812 = vunpack.c.h.b16 %v2734
    %v2813 = vunpack.c.l.b16 %v2735
    %v2814 = vunpack.c.h.b16 %v2735
    %v2815 = vunpack.c.l.b16 %v2736
    %v2816 = vunpack.c.h.b16 %v2736
    %v2817 = vunpack.c.l.b16 %v2737
    %v2818 = vunpack.c.h.b16 %v2737
    %v2819 = vunpack.c.l.b16 %v2738
    %v2820 = vunpack.c.h.b16 %v2738
    %v2821 = vunpack.c.l.b16 %v2739
    %v2822 = vunpack.c.h.b16 %v2739
    %v2823 = vunpack.c.l.b16 %v2740
    %v2824 = vunpack.c.h.b16 %v2740
    %v2825 = vunpack.c.l.b16 %v2741
    %v2826 = vunpack.c.h.b16 %v2741
    %v2827 = vunpack.c.l.b16 %v2742
    %v2828 = vunpack.c.h.b16 %v2742
    %v2829 = vunpack.c.l.b16 %v2743
    %v2830 = vunpack.c.h.b16 %v2743
    %v2831 = vunpack.c.l.b16 %v2744
    %v2832 = vunpack.c.h.b16 %v2744
    %v2833 = vunpack.c.l.b16 %v2745
    %v2834 = vunpack.c.h.b16 %v2745
    %v2835 = vunpack.c.l.b16 %v2746
    %v2836 = vunpack.c.h.b16 %v2746
    %v2837 = vunpack.c.l.b16 %v2747
    %v2838 = vunpack.c.h.b16 %v2747
    %v2839 = vunpack.c.l.b16 %v2748
    %v2840 = vunpack.c.h.b16 %v2748
    %v2841 = vunpack.c.l.b16 %v2749
    %v2842 = vunpack.c.h.b16 %v2749
    %v2843 = vunpack.c.l.b16 %v2750
    %v2844 = vunpack.c.h.b16 %v2750
    %v2845 = vunpack.c.l.b16 %v2751
    %v2846 = vunpack.c.h.b16 %v2751
    %v2847 = vunpack.c.l.b16 %v2752
    %v2848 = vunpack.c.h.b16 %v2752
    %v2849 = vunpack.c.l.b16 %v2753
    %v2850 = vunpack.c.h.b16 %v2753
    %v2851 = vpack.c.b16 %v2789, %v2787
    %v2852 = vpack.c.b16 %v2790, %v2788
    %v2853 = vpack.c.b16 %v2793, %v2791
    %v2854 = vpack.c.b16 %v2794, %v2792
    %v2855 = vpack.c.b16 %v2797, %v2795
    %v2856 = vpack.c.b16 %v2798, %v2796
    %v2857 = vpack.c.b16 %v2801, %v2799
    %v2858 = vpack.c.b16 %v2802, %v2800
    %v2859 = vpack.c.b16 %v2805, %v2803
    %v2860 = vpack.c.b16 %v2806, %v2804
    %v2861 = vpack.c.b16 %v2809, %v2807
    %v2862 = vpack.c.b16 %v2810, %v2808
    %v2863 = vpack.c.b16 %v2813, %v2811
    %v2864 = vpack.c.b16 %v2814, %v2812
    %v2865 = vpack.c.b16 %v2817, %v2815
    %v2866 = vpack.c.b16 %v2818, %v2816
    %v2867 = vpack.c.b16 %v2821, %v2819
    %v2868 = vpack.c.b16 %v2822, %v2820
    %v2869 = vpack.c.b16 %v2825, %v2823
    %v2870 = vpack.c.b16 %v2826, %v2824
    %v2871 = vpack.c.b16 %v2829, %v2827
    %v2872 = vpack.c.b16 %v2830, %v2828
    %v2873 = vpack.c.b16 %v2833, %v2831
    %v2874 = vpack.c.b16 %v2834, %v2832
    %v2875 = vpack.c.b16 %v2837, %v2835
    %v2876 = vpack.c.b16 %v2838, %v2836
    %v2877 = vpack.c.b16 %v2841, %v2839
    %v2878 = vpack.c.b16 %v2842, %v2840
    %v2879 = vpack.c.b16 %v2845, %v2843
    %v2880 = vpack.c.b16 %v2846, %v2844
    %v2881 = vpack.c.b16 %v2849, %v2847
    %v2882 = vpack.c.b16 %v2850, %v2848
    %v2916 = vlaneseq
    %v2917 = vshrl.u32 %v2916, 7
    %v2918 = vsub.s32 0, %v2917
    %v2919 = vrot.slane %v2754, %v2918
    %v2920 = vlaneseq
    %v2921 = vshrl.u32 %v2920, 7
    %v2922 = vsub.s32 1, %v2921
    %v2923 = vrot.slane %v2754, %v2922
    %2926 = vmatprep.subr.bf16.mxu0 %v2852
    %2927 = vmatpush1.bf16.msra.mxu0 %v2851
    %2928 = vmatprep.subr.bf16.mxu0 %v2854
    %2929 = vmatpush1.bf16.msra.mxu0 %v2853
    %2930 = vmatprep.subr.bf16.mxu0 %v2856
    %2931 = vmatpush1.bf16.msra.mxu0 %v2855
    %2932 = vmatprep.subr.bf16.mxu0 %v2858
    %2933 = vmatpush1.bf16.msra.mxu0 %v2857
    %2934 = vmatprep.subr.bf16.mxu0 %v2860
    %2935 = vmatpush1.bf16.msra.mxu0 %v2859
    %2936 = vmatprep.subr.bf16.mxu0 %v2862
    %2937 = vmatpush1.bf16.msra.mxu0 %v2861
    %2938 = vmatprep.subr.bf16.mxu0 %v2864
    %2939 = vmatpush1.bf16.msra.mxu0 %v2863
    %2940 = vmatprep.subr.bf16.mxu0 %v2866
    %2941 = vmatpush1.bf16.msra.mxu0 %v2865
    %2942 = vmatprep.subr.bf16.mxu0 %v2868
    %2943 = vmatpush1.bf16.msra.mxu0 %v2867
    %2944 = vmatprep.subr.bf16.mxu0 %v2870
    %2945 = vmatpush1.bf16.msra.mxu0 %v2869
    %2946 = vmatprep.subr.bf16.mxu0 %v2872
    %2947 = vmatpush1.bf16.msra.mxu0 %v2871
    %2948 = vmatprep.subr.bf16.mxu0 %v2874
    %2949 = vmatpush1.bf16.msra.mxu0 %v2873
    %2950 = vmatprep.subr.bf16.mxu0 %v2876
    %2951 = vmatpush1.bf16.msra.mxu0 %v2875
    %2952 = vmatprep.subr.bf16.mxu0 %v2878
    %2953 = vmatpush1.bf16.msra.mxu0 %v2877
    %2954 = vmatprep.subr.bf16.mxu0 %v2880
    %2955 = vmatpush1.bf16.msra.mxu0 %v2879
    %2956 = vmatprep.subr.bf16.mxu0 %v2882
    %2957 = vmatpush1.bf16.msra.mxu0 %v2881
    %2958 = vmatprep.mubr.bf16.mxu0 %v2141
    %2959 = vmatmul.mubr.bf16.gmra.mrb[0].mxu0 %v2721
    %v2960 = vpop.f32.mrb[0].mxu0
    %v2961 = vadd.f32 %v2919, %v2960
    %v2962 = vpop.f32.mrb[0].mxu0
    %v2963 = vadd.f32 %v2923, %v2962
    %v2964 = vpop.f32.mrb[0].mxu0
    %v2965 = vpop.f32.mrb[0].mxu0
    %2966 = vdwg.mxu0
    %v2967 = vxor.u32 %v2961, 2147483648
    %v2968 = vmul.f32 %v2967, 1.442695
    %v2969 = vpow.pop %v2968
    %v2970 = vadd.f32 %v2969, 1.0
    %v2971 = vrcp.pop %v2970
    %v2972 = vmul.f32 1.0, %v2971
    %v2973 = vxor.u32 %v2963, 2147483648
    %v2974 = vmul.f32 %v2973, 1.442695
    %v2975 = vpow.pop %v2974
    %v2976 = vadd.f32 %v2975, 1.0
    %v2977 = vrcp.pop %v2976
    %v2978 = vmul.f32 1.0, %v2977
    %v2979 = vld [vmem:[#allocation10] sm:$0xf]
    %v2980 = vld [vmem:[#allocation10 + $0x4] sm:$0xf]
    %v2981 = vld [vmem:[#allocation10 + $0x8] sm:$0xf]
    %v2982 = vld [vmem:[#allocation10 + $0xc] sm:$0xf]
    %v2983 = vld [vmem:[#allocation10 + $0x10] sm:$0xf]
    %v2984 = vld [vmem:[#allocation10 + $0x14] sm:$0xf]
    %v2985 = vld [vmem:[#allocation10 + $0x18] sm:$0xf]
    %v2986 = vld [vmem:[#allocation10 + $0x1c] sm:$0xf]
    %v2987 = vld [vmem:[#allocation10 + $0x20] sm:$0xf]
    %v2988 = vld [vmem:[#allocation10 + $0x24] sm:$0xf]
    %v2989 = vld [vmem:[#allocation10 + $0x28] sm:$0xf]
    %v2990 = vld [vmem:[#allocation10 + $0x2c] sm:$0xf]
    %v2991 = vld [vmem:[#allocation10 + $0x30] sm:$0xf]
    %v2992 = vld [vmem:[#allocation10 + $0x34] sm:$0xf]
    %v2993 = vld [vmem:[#allocation10 + $0x38] sm:$0xf]
    %v2994 = vld [vmem:[#allocation10 + $0x3c] sm:$0xf]
    %v2995 = vld [vmem:[%s10] sm:$0x1]
    %v3012 = vunpack.c.l.b16 %v2979
    %v3013 = vunpack.c.l.b16 %v2980
    %v3014 = vunpack.c.l.b16 %v2981
    %v3015 = vunpack.c.l.b16 %v2982
    %v3016 = vunpack.c.l.b16 %v2983
    %v3017 = vunpack.c.l.b16 %v2984
    %v3018 = vunpack.c.l.b16 %v2985
    %v3019 = vunpack.c.l.b16 %v2986
    %v3020 = vunpack.c.l.b16 %v2987
    %v3021 = vunpack.c.l.b16 %v2988
    %v3022 = vunpack.c.l.b16 %v2989
    %v3023 = vunpack.c.l.b16 %v2990
    %v3024 = vunpack.c.l.b16 %v2991
    %v3025 = vunpack.c.l.b16 %v2992
    %v3026 = vunpack.c.l.b16 %v2993
    %v3027 = vunpack.c.l.b16 %v2994
    %v3028 = vpack.c.b16 %v3013, %v3012
    %v3029 = vpack.c.b16 %v3015, %v3014
    %v3030 = vpack.c.b16 %v3017, %v3016
    %v3031 = vpack.c.b16 %v3019, %v3018
    %v3032 = vpack.c.b16 %v3021, %v3020
    %v3033 = vpack.c.b16 %v3023, %v3022
    %v3034 = vpack.c.b16 %v3025, %v3024
    %v3035 = vpack.c.b16 %v3027, %v3026
    %3044 = vmatprep.subr.bf16.mxu0 0
    %3045 = vmatpush1.bf16.msra.mxu0 %v3028
    %3046 = vmatprep.subr.bf16.mxu0 0
    %3047 = vmatpush1.bf16.msra.mxu0 %v3029
    %3048 = vmatprep.subr.bf16.mxu0 0
    %3049 = vmatpush1.bf16.msra.mxu0 %v3030
    %3050 = vmatprep.subr.bf16.mxu0 0
    %3051 = vmatpush1.bf16.msra.mxu0 %v3031
    %3052 = vmatprep.subr.bf16.mxu0 0
    %3053 = vmatpush1.bf16.msra.mxu0 %v3032
    %3054 = vmatprep.subr.bf16.mxu0 0
    %3055 = vmatpush1.bf16.msra.mxu0 %v3033
    %3056 = vmatprep.subr.bf16.mxu0 0
    %3057 = vmatpush1.bf16.msra.mxu0 %v3034
    %3058 = vmatprep.subr.bf16.mxu0 0
    %3059 = vmatpush1.bf16.msra.mxu0 %v3035
    %3060 = vmatprep.subr.bf16.mxu0 0
    %3061 = vmatpush1.bf16.msra.mxu0 0
    %3062 = vmatprep.subr.bf16.mxu0 0
    %3063 = vmatpush1.bf16.msra.mxu0 0
    %3064 = vmatprep.subr.bf16.mxu0 0
    %3065 = vmatpush1.bf16.msra.mxu0 0
    %3066 = vmatprep.subr.bf16.mxu0 0
    %3067 = vmatpush1.bf16.msra.mxu0 0
    %3068 = vmatprep.subr.bf16.mxu0 0
    %3069 = vmatpush1.bf16.msra.mxu0 0
    %3070 = vmatprep.subr.bf16.mxu0 0
    %3071 = vmatpush1.bf16.msra.mxu0 0
    %3072 = vmatprep.subr.bf16.mxu0 0
    %3073 = vmatpush1.bf16.msra.mxu0 0
    %3074 = vmatprep.subr.bf16.mxu0 0
    %3075 = vmatpush1.bf16.msra.mxu0 0
    %3076 = vmatprep.mubr.bf16.mxu0 0
    %3077 = vmatmul.mubr.bf16.gmra.mrb[0].mxu0 %v2721
    %v3078 = vpop.f32.mrb[0].mxu0
    %v3079 = vadd.f32 %v2995, %v3078
    %v3080 = vpop.f32.mrb[0].mxu0
    %v3081 = vpop.f32.mrb[0].mxu0
    %v3082 = vpop.f32.mrb[0].mxu0
    %3083 = vdwg.mxu0
    %v3084 = vld [vmem:[#allocation11] sm:$0xf]
    %v3085 = vld [vmem:[#allocation11 + $0x4] sm:$0xf]
    %v3086 = vld [vmem:[#allocation11 + $0x8] sm:$0xf]
    %v3087 = vld [vmem:[#allocation11 + $0xc] sm:$0xf]
    %v3088 = vld [vmem:[#allocation11 + $0x10] sm:$0xf]
    %v3089 = vld [vmem:[#allocation11 + $0x14] sm:$0xf]
    %v3090 = vld [vmem:[#allocation11 + $0x18] sm:$0xf]
    %v3091 = vld [vmem:[#allocation11 + $0x1c] sm:$0xf]
    %v3092 = vld [vmem:[#allocation11 + $0x20] sm:$0xf]
    %v3093 = vld [vmem:[#allocation11 + $0x24] sm:$0xf]
    %v3094 = vld [vmem:[#allocation11 + $0x28] sm:$0xf]
    %v3095 = vld [vmem:[#allocation11 + $0x2c] sm:$0xf]
    %v3096 = vld [vmem:[#allocation11 + $0x30] sm:$0xf]
    %v3097 = vld [vmem:[#allocation11 + $0x34] sm:$0xf]
    %v3098 = vld [vmem:[#allocation11 + $0x38] sm:$0xf]
    %v3099 = vld [vmem:[#allocation11 + $0x3c] sm:$0xf]
    %v3100 = vld [vmem:[%s12] sm:$0x1]
    %v3117 = vunpack.c.l.b16 %v3084
    %v3118 = vunpack.c.l.b16 %v3085
    %v3119 = vunpack.c.l.b16 %v3086
    %v3120 = vunpack.c.l.b16 %v3087
    %v3121 = vunpack.c.l.b16 %v3088
    %v3122 = vunpack.c.l.b16 %v3089
    %v3123 = vunpack.c.l.b16 %v3090
    %v3124 = vunpack.c.l.b16 %v3091
    %v3125 = vunpack.c.l.b16 %v3092
    %v3126 = vunpack.c.l.b16 %v3093
    %v3127 = vunpack.c.l.b16 %v3094
    %v3128 = vunpack.c.l.b16 %v3095
    %v3129 = vunpack.c.l.b16 %v3096
    %v3130 = vunpack.c.l.b16 %v3097
    %v3131 = vunpack.c.l.b16 %v3098
    %v3132 = vunpack.c.l.b16 %v3099
    %v3133 = vpack.c.b16 %v3118, %v3117
    %v3134 = vpack.c.b16 %v3120, %v3119
    %v3135 = vpack.c.b16 %v3122, %v3121
    %v3136 = vpack.c.b16 %v3124, %v3123
    %v3137 = vpack.c.b16 %v3126, %v3125
    %v3138 = vpack.c.b16 %v3128, %v3127
    %v3139 = vpack.c.b16 %v3130, %v3129
    %v3140 = vpack.c.b16 %v3132, %v3131
    %3149 = vmatprep.subr.bf16.mxu0 0
    %3150 = vmatpush1.bf16.msra.mxu0 %v3133
    %3151 = vmatprep.subr.bf16.mxu0 0
    %3152 = vmatpush1.bf16.msra.mxu0 %v3134
    %3153 = vmatprep.subr.bf16.mxu0 0
    %3154 = vmatpush1.bf16.msra.mxu0 %v3135
    %3155 = vmatprep.subr.bf16.mxu0 0
    %3156 = vmatpush1.bf16.msra.mxu0 %v3136
    %3157 = vmatprep.subr.bf16.mxu0 0
    %3158 = vmatpush1.bf16.msra.mxu0 %v3137
    %3159 = vmatprep.subr.bf16.mxu0 0
    %3160 = vmatpush1.bf16.msra.mxu0 %v3138
    %3161 = vmatprep.subr.bf16.mxu0 0
    %3162 = vmatpush1.bf16.msra.mxu0 %v3139
    %3163 = vmatprep.subr.bf16.mxu0 0
    %3164 = vmatpush1.bf16.msra.mxu0 %v3140
    %3165 = vmatprep.subr.bf16.mxu0 0
    %3166 = vmatpush1.bf16.msra.mxu0 0
    %3167 = vmatprep.subr.bf16.mxu0 0
    %3168 = vmatpush1.bf16.msra.mxu0 0
    %3169 = vmatprep.subr.bf16.mxu0 0
    %3170 = vmatpush1.bf16.msra.mxu0 0
    %3171 = vmatprep.subr.bf16.mxu0 0
    %3172 = vmatpush1.bf16.msra.mxu0 0
    %3173 = vmatprep.subr.bf16.mxu0 0
    %3174 = vmatpush1.bf16.msra.mxu0 0
    %3175 = vmatprep.subr.bf16.mxu0 0
    %3176 = vmatpush1.bf16.msra.mxu0 0
    %3177 = vmatprep.subr.bf16.mxu0 0
    %3178 = vmatpush1.bf16.msra.mxu0 0
    %3179 = vmatprep.subr.bf16.mxu0 0
    %3180 = vmatpush1.bf16.msra.mxu0 0
    %3181 = vmatprep.mubr.bf16.mxu0 0
    %3182 = vmatmul.mubr.bf16.gmra.mrb[0].mxu0 %v2141
    %v3183 = vpop.f32.mrb[0].mxu0
    %v3184 = vadd.f32 %v3100, %v3183
    %v3185 = vpop.f32.mrb[0].mxu0
    %v3186 = vpop.f32.mrb[0].mxu0
    %v3187 = vpop.f32.mrb[0].mxu0
    %3188 = vdwg.mxu0
    %v3189 = vmul.f32 %v2972, %v3184
    %v3190 = vadd.f32 %v3079, %v3189
    %v3191 = vtanh.pop %v3190
    %v3192 = vsub.f32 1.0, %v2978
    %v3193 = vmul.f32 %v3192, %v3191
    %v3194 = vmul.f32 %v2978, %v2140
    %v3195 = vadd.f32 %v3193, %v3194
    %v3196 = vpack.c.bf16 %v3195, %v3195
    %v3197 = vld [vmem:[#allocation13] sm:$0xf]
    %v3198 = vld [vmem:[#allocation13 + $0x4] sm:$0xf]
    %v3199 = vld [vmem:[#allocation13 + $0x8] sm:$0xf]
    %v3200 = vld [vmem:[#allocation13 + $0xc] sm:$0xf]
    %v3201 = vld [vmem:[#allocation13 + $0x10] sm:$0xf]
    %v3202 = vld [vmem:[#allocation13 + $0x14] sm:$0xf]
    %v3203 = vld [vmem:[#allocation13 + $0x18] sm:$0xf]
    %v3204 = vld [vmem:[#allocation13 + $0x1c] sm:$0xf]
    %v3205 = vld [vmem:[#allocation13 + $0x20] sm:$0xf]
    %v3206 = vld [vmem:[#allocation13 + $0x24] sm:$0xf]
    %v3207 = vld [vmem:[#allocation13 + $0x28] sm:$0xf]
    %v3208 = vld [vmem:[#allocation13 + $0x2c] sm:$0xf]
    %v3209 = vld [vmem:[#allocation13 + $0x30] sm:$0xf]
    %v3210 = vld [vmem:[#allocation13 + $0x34] sm:$0xf]
    %v3211 = vld [vmem:[#allocation13 + $0x38] sm:$0xf]
    %v3212 = vld [vmem:[#allocation13 + $0x3c] sm:$0xf]
    %v3213 = vld [vmem:[%s14] sm:$0x1]
    %v3230 = vunpack.c.l.b16 %v3197
    %v3231 = vunpack.c.l.b16 %v3198
    %v3232 = vunpack.c.l.b16 %v3199
    %v3233 = vunpack.c.l.b16 %v3200
    %v3234 = vunpack.c.l.b16 %v3201
    %v3235 = vunpack.c.l.b16 %v3202
    %v3236 = vunpack.c.l.b16 %v3203
    %v3237 = vunpack.c.l.b16 %v3204
    %v3238 = vunpack.c.l.b16 %v3205
    %v3239 = vunpack.c.l.b16 %v3206
    %v3240 = vunpack.c.l.b16 %v3207
    %v3241 = vunpack.c.l.b16 %v3208
    %v3242 = vunpack.c.l.b16 %v3209
    %v3243 = vunpack.c.l.b16 %v3210
    %v3244 = vunpack.c.l.b16 %v3211
    %v3245 = vunpack.c.l.b16 %v3212
    %v3246 = vpack.c.b16 %v3231, %v3230
    %v3247 = vpack.c.b16 %v3233, %v3232
    %v3248 = vpack.c.b16 %v3235, %v3234
    %v3249 = vpack.c.b16 %v3237, %v3236
    %v3250 = vpack.c.b16 %v3239, %v3238
    %v3251 = vpack.c.b16 %v3241, %v3240
    %v3252 = vpack.c.b16 %v3243, %v3242
    %v3253 = vpack.c.b16 %v3245, %v3244
    %3262 = vmatprep.subr.bf16.mxu0 0
    %3263 = vmatpush1.bf16.msra.mxu0 %v3246
    %3264 = vmatprep.subr.bf16.mxu0 0
    %3265 = vmatpush1.bf16.msra.mxu0 %v3247
    %3266 = vmatprep.subr.bf16.mxu0 0
    %3267 = vmatpush1.bf16.msra.mxu0 %v3248
    %3268 = vmatprep.subr.bf16.mxu0 0
    %3269 = vmatpush1.bf16.msra.mxu0 %v3249
    %3270 = vmatprep.subr.bf16.mxu0 0
    %3271 = vmatpush1.bf16.msra.mxu0 %v3250
    %3272 = vmatprep.subr.bf16.mxu0 0
    %3273 = vmatpush1.bf16.msra.mxu0 %v3251
    %3274 = vmatprep.subr.bf16.mxu0 0
    %3275 = vmatpush1.bf16.msra.mxu0 %v3252
    %3276 = vmatprep.subr.bf16.mxu0 0
    %3277 = vmatpush1.bf16.msra.mxu0 %v3253
    %3278 = vmatprep.subr.bf16.mxu0 0
    %3279 = vmatpush1.bf16.msra.mxu0 0
    %3280 = vmatprep.subr.bf16.mxu0 0
    %3281 = vmatpush1.bf16.msra.mxu0 0
    %3282 = vmatprep.subr.bf16.mxu0 0
    %3283 = vmatpush1.bf16.msra.mxu0 0
    %3284 = vmatprep.subr.bf16.mxu0 0
    %3285 = vmatpush1.bf16.msra.mxu0 0
    %3286 = vmatprep.subr.bf16.mxu0 0
    %3287 = vmatpush1.bf16.msra.mxu0 0
    %3288 = vmatprep.subr.bf16.mxu0 0
    %3289 = vmatpush1.bf16.msra.mxu0 0
    %3290 = vmatprep.subr.bf16.mxu0 0
    %3291 = vmatpush1.bf16.msra.mxu0 0
    %3292 = vmatprep.subr.bf16.mxu0 0
    %3293 = vmatpush1.bf16.msra.mxu0 0
    %3294 = vmatprep.mubr.bf16.mxu0 0
    %3295 = vmatmul.mubr.bf16.gmra.mrb[0].mxu0 %v3196
    %v3296 = vpop.f32.mrb[0].mxu0
    %v3297 = vadd.f32 %v3213, %v3296
    %v3298 = vpop.f32.mrb[0].mxu0
    %v3299 = vpop.f32.mrb[0].mxu0
    %v3300 = vpop.f32.mrb[0].mxu0
    %3301 = vdwg.mxu0
    %v3302 = vsel %vm323, %v3297, -inf
    %3303 = vmax.xlane.f32.xlu0 %v3302
    %v3304 = vpop.xlane.xlu0 %3303
    %v3305 = vsub.f32 %v3297, %v3304
    %v3306 = vmul.f32 %v3305, 1.442695
    %v3307 = vpow.pop %v3306
    %v3308 = vsel %vm323, %v3307, 0.0
    %3309 = vadd.xlane.f32.xlu0 %v3308
    %v3310 = vpop.xlane.xlu0 %3309
    %v3311 = vlog2.pop %v3310
    %v3312 = vmul.f32 %v3311, 0.6931472
    %v3313 = vsub.f32 %v3305, %v3312
    %s3314 = scalar_lea.vmem [#allocation14], 2
    %3315 = vst [vmem:[%s3314] sm:$0x1] %v3313
    %s3316 = scalar_lea.vmem %s0, 3
    %v3317 = vld [vmem:[%s3316] sm:$0x1]
    %v3318 = vld [vmem:[#allocation5] sm:$0xf]
    %v3319 = vld [vmem:[#allocation5 + $0x4] sm:$0xf]
    %v3320 = vld [vmem:[#allocation5 + $0x8] sm:$0xf]
    %v3321 = vld [vmem:[#allocation5 + $0xc] sm:$0xf]
    %v3322 = vld [vmem:[#allocation5 + $0x10] sm:$0xf]
    %v3323 = vld [vmem:[#allocation5 + $0x14] sm:$0xf]
    %v3324 = vld [vmem:[#allocation5 + $0x18] sm:$0xf]
    %v3325 = vld [vmem:[#allocation5 + $0x1c] sm:$0xf]
    %v3326 = vld [vmem:[#allocation5 + $0x20] sm:$0xf]
    %v3327 = vld [vmem:[#allocation5 + $0x24] sm:$0xf]
    %v3328 = vld [vmem:[#allocation5 + $0x28] sm:$0xf]
    %v3329 = vld [vmem:[#allocation5 + $0x2c] sm:$0xf]
    %v3330 = vld [vmem:[#allocation5 + $0x30] sm:$0xf]
    %v3331 = vld [vmem:[#allocation5 + $0x34] sm:$0xf]
    %v3332 = vld [vmem:[#allocation5 + $0x38] sm:$0xf]
    %v3333 = vld [vmem:[#allocation5 + $0x3c] sm:$0xf]
    %v3334 = vld [vmem:[#allocation5 + $0x40] sm:$0xf]
    %v3335 = vld [vmem:[#allocation5 + $0x44] sm:$0xf]
    %v3336 = vld [vmem:[#allocation5 + $0x48] sm:$0xf]
    %v3337 = vld [vmem:[#allocation5 + $0x4c] sm:$0xf]
    %v3338 = vld [vmem:[#allocation5 + $0x50] sm:$0xf]
    %v3339 = vld [vmem:[#allocation5 + $0x54] sm:$0xf]
    %v3340 = vld [vmem:[#allocation5 + $0x58] sm:$0xf]
    %v3341 = vld [vmem:[#allocation5 + $0x5c] sm:$0xf]
    %v3342 = vld [vmem:[#allocation5 + $0x60] sm:$0xf]
    %v3343 = vld [vmem:[#allocation5 + $0x64] sm:$0xf]
    %v3344 = vld [vmem:[#allocation5 + $0x68] sm:$0xf]
    %v3345 = vld [vmem:[#allocation5 + $0x6c] sm:$0xf]
    %v3346 = vld [vmem:[#allocation5 + $0x70] sm:$0xf]
    %v3347 = vld [vmem:[#allocation5 + $0x74] sm:$0xf]
    %v3348 = vld [vmem:[#allocation5 + $0x78] sm:$0xf]
    %v3349 = vld [vmem:[#allocation5 + $0x7c] sm:$0xf]
    %v3350 = vld [vmem:[%s4] sm:$0x1]
    %v3383 = vunpack.c.l.b16 %v3318
    %v3384 = vunpack.c.l.b16 %v3319
    %v3385 = vunpack.c.l.b16 %v3320
    %v3386 = vunpack.c.l.b16 %v3321
    %v3387 = vunpack.c.l.b16 %v3322
    %v3388 = vunpack.c.l.b16 %v3323
    %v3389 = vunpack.c.l.b16 %v3324
    %v3390 = vunpack.c.l.b16 %v3325
    %v3391 = vunpack.c.l.b16 %v3326
    %v3392 = vunpack.c.l.b16 %v3327
    %v3393 = vunpack.c.l.b16 %v3328
    %v3394 = vunpack.c.l.b16 %v3329
    %v3395 = vunpack.c.l.b16 %v3330
    %v3396 = vunpack.c.l.b16 %v3331
    %v3397 = vunpack.c.l.b16 %v3332
    %v3398 = vunpack.c.l.b16 %v3333
    %v3399 = vunpack.c.l.b16 %v3334
    %v3400 = vunpack.c.l.b16 %v3335
    %v3401 = vunpack.c.l.b16 %v3336
    %v3402 = vunpack.c.l.b16 %v3337
    %v3403 = vunpack.c.l.b16 %v3338
    %v3404 = vunpack.c.l.b16 %v3339
    %v3405 = vunpack.c.l.b16 %v3340
    %v3406 = vunpack.c.l.b16 %v3341
    %v3407 = vunpack.c.l.b16 %v3342
    %v3408 = vunpack.c.l.b16 %v3343
    %v3409 = vunpack.c.l.b16 %v3344
    %v3410 = vunpack.c.l.b16 %v3345
    %v3411 = vunpack.c.l.b16 %v3346
    %v3412 = vunpack.c.l.b16 %v3347
    %v3413 = vunpack.c.l.b16 %v3348
    %v3414 = vunpack.c.l.b16 %v3349
    %v3415 = vpack.c.b16 %v3384, %v3383
    %v3416 = vpack.c.b16 %v3386, %v3385
    %v3417 = vpack.c.b16 %v3388, %v3387
    %v3418 = vpack.c.b16 %v3390, %v3389
    %v3419 = vpack.c.b16 %v3392, %v3391
    %v3420 = vpack.c.b16 %v3394, %v3393
    %v3421 = vpack.c.b16 %v3396, %v3395
    %v3422 = vpack.c.b16 %v3398, %v3397
    %v3423 = vpack.c.b16 %v3400, %v3399
    %v3424 = vpack.c.b16 %v3402, %v3401
    %v3425 = vpack.c.b16 %v3404, %v3403
    %v3426 = vpack.c.b16 %v3406, %v3405
    %v3427 = vpack.c.b16 %v3408, %v3407
    %v3428 = vpack.c.b16 %v3410, %v3409
    %v3429 = vpack.c.b16 %v3412, %v3411
    %v3430 = vpack.c.b16 %v3414, %v3413
    %3447 = vmatprep.subr.bf16.mxu0 0
    %3448 = vmatpush1.bf16.msra.mxu0 %v3415
    %3449 = vmatprep.subr.bf16.mxu0 0
    %3450 = vmatpush1.bf16.msra.mxu0 %v3416
    %3451 = vmatprep.subr.bf16.mxu0 0
    %3452 = vmatpush1.bf16.msra.mxu0 %v3417
    %3453 = vmatprep.subr.bf16.mxu0 0
    %3454 = vmatpush1.bf16.msra.mxu0 %v3418
    %3455 = vmatprep.subr.bf16.mxu0 0
    %3456 = vmatpush1.bf16.msra.mxu0 %v3419
    %3457 = vmatprep.subr.bf16.mxu0 0
    %3458 = vmatpush1.bf16.msra.mxu0 %v3420
    %3459 = vmatprep.subr.bf16.mxu0 0
    %3460 = vmatpush1.bf16.msra.mxu0 %v3421
    %3461 = vmatprep.subr.bf16.mxu0 0
    %3462 = vmatpush1.bf16.msra.mxu0 %v3422
    %3463 = vmatprep.subr.bf16.mxu0 0
    %3464 = vmatpush1.bf16.msra.mxu0 %v3423
    %3465 = vmatprep.subr.bf16.mxu0 0
    %3466 = vmatpush1.bf16.msra.mxu0 %v3424
    %3467 = vmatprep.subr.bf16.mxu0 0
    %3468 = vmatpush1.bf16.msra.mxu0 %v3425
    %3469 = vmatprep.subr.bf16.mxu0 0
    %3470 = vmatpush1.bf16.msra.mxu0 %v3426
    %3471 = vmatprep.subr.bf16.mxu0 0
    %3472 = vmatpush1.bf16.msra.mxu0 %v3427
    %3473 = vmatprep.subr.bf16.mxu0 0
    %3474 = vmatpush1.bf16.msra.mxu0 %v3428
    %3475 = vmatprep.subr.bf16.mxu0 0
    %3476 = vmatpush1.bf16.msra.mxu0 %v3429
    %3477 = vmatprep.subr.bf16.mxu0 0
    %3478 = vmatpush1.bf16.msra.mxu0 %v3430
    %3479 = vmatprep.mubr.bf16.mxu0 %v3196
    %3480 = vmatmul.mubr.bf16.gmra.mrb[0].mxu0 %v3317
    %v3481 = vpop.f32.mrb[0].mxu0
    %v3482 = vadd.f32 %v3350, %v3481
    %v3483 = vpop.f32.mrb[0].mxu0
    %v3484 = vpop.f32.mrb[0].mxu0
    %v3485 = vpop.f32.mrb[0].mxu0
    %3486 = vdwg.mxu0
    %v3487 = vsel %vm323, %v3482, -inf
    %3488 = vmax.xlane.f32.xlu0 %v3487
    %v3489 = vpop.xlane.xlu0 %3488
    %v3490 = vsub.f32 %v3482, %v3489
    %v3491 = vmul.f32 %v3490, 1.442695
    %v3492 = vpow.pop %v3491
    %v3493 = vsel %vm323, %v3492, 0.0
    %3494 = vadd.xlane.f32.xlu0 %v3493
    %v3495 = vpop.xlane.xlu0 %3494
    %v3496 = vrcp.pop %v3495
    %v3497 = vmul.f32 %v3492, %v3496
    %s3498 = scalar_lea.vmem [#allocation17], 3
    %3499 = vst [vmem:[%s3498] sm:$0x1] %v3497
    %v3500 = vpack.c.bf16 %v3497, %v3497
    %v3501 = vld [vmem:[#allocation2] sm:$0xf]
    %v3502 = vld [vmem:[#allocation2 + $0x4] sm:$0xf]
    %v3503 = vld [vmem:[#allocation2 + $0x8] sm:$0xf]
    %v3504 = vld [vmem:[#allocation2 + $0xc] sm:$0xf]
    %v3505 = vld [vmem:[#allocation2 + $0x10] sm:$0xf]
    %v3506 = vld [vmem:[#allocation2 + $0x14] sm:$0xf]
    %v3507 = vld [vmem:[#allocation2 + $0x18] sm:$0xf]
    %v3508 = vld [vmem:[#allocation2 + $0x1c] sm:$0xf]
    %v3509 = vld [vmem:[#allocation2 + $0x20] sm:$0xf]
    %v3510 = vld [vmem:[#allocation2 + $0x24] sm:$0xf]
    %v3511 = vld [vmem:[#allocation2 + $0x28] sm:$0xf]
    %v3512 = vld [vmem:[#allocation2 + $0x2c] sm:$0xf]
    %v3513 = vld [vmem:[#allocation2 + $0x30] sm:$0xf]
    %v3514 = vld [vmem:[#allocation2 + $0x34] sm:$0xf]
    %v3515 = vld [vmem:[#allocation2 + $0x38] sm:$0xf]
    %v3516 = vld [vmem:[#allocation2 + $0x3c] sm:$0xf]
    %v3533 = vunpack.c.l.b16 %v3501
    %v3534 = vunpack.c.l.b16 %v3502
    %v3535 = vunpack.c.l.b16 %v3503
    %v3536 = vunpack.c.l.b16 %v3504
    %v3537 = vunpack.c.l.b16 %v3505
    %v3538 = vunpack.c.l.b16 %v3506
    %v3539 = vunpack.c.l.b16 %v3507
    %v3540 = vunpack.c.l.b16 %v3508
    %v3541 = vunpack.c.l.b16 %v3509
    %v3542 = vunpack.c.l.b16 %v3510
    %v3543 = vunpack.c.l.b16 %v3511
    %v3544 = vunpack.c.l.b16 %v3512
    %v3545 = vunpack.c.l.b16 %v3513
    %v3546 = vunpack.c.l.b16 %v3514
    %v3547 = vunpack.c.l.b16 %v3515
    %v3548 = vunpack.c.l.b16 %v3516
    %v3549 = vpack.c.b16 %v3534, %v3533
    %v3550 = vpack.c.b16 %v3536, %v3535
    %v3551 = vpack.c.b16 %v3538, %v3537
    %v3552 = vpack.c.b16 %v3540, %v3539
    %v3553 = vpack.c.b16 %v3542, %v3541
    %v3554 = vpack.c.b16 %v3544, %v3543
    %v3555 = vpack.c.b16 %v3546, %v3545
    %v3556 = vpack.c.b16 %v3548, %v3547
    %3565 = vmatprep.subr.bf16.mxu0 0
    %3566 = vmatpush1.bf16.msra.mxu0 %v3549
    %3567 = vmatprep.subr.bf16.mxu0 0
    %3568 = vmatpush1.bf16.msra.mxu0 %v3550
    %3569 = vmatprep.subr.bf16.mxu0 0
    %3570 = vmatpush1.bf16.msra.mxu0 %v3551
    %3571 = vmatprep.subr.bf16.mxu0 0
    %3572 = vmatpush1.bf16.msra.mxu0 %v3552
    %3573 = vmatprep.subr.bf16.mxu0 0
    %3574 = vmatpush1.bf16.msra.mxu0 %v3553
    %3575 = vmatprep.subr.bf16.mxu0 0
    %3576 = vmatpush1.bf16.msra.mxu0 %v3554
    %3577 = vmatprep.subr.bf16.mxu0 0
    %3578 = vmatpush1.bf16.msra.mxu0 %v3555
    %3579 = vmatprep.subr.bf16.mxu0 0
    %3580 = vmatpush1.bf16.msra.mxu0 %v3556
    %3581 = vmatprep.subr.bf16.mxu0 0
    %3582 = vmatpush1.bf16.msra.mxu0 0
    %3583 = vmatprep.subr.bf16.mxu0 0
    %3584 = vmatpush1.bf16.msra.mxu0 0
    %3585 = vmatprep.subr.bf16.mxu0 0
    %3586 = vmatpush1.bf16.msra.mxu0 0
    %3587 = vmatprep.subr.bf16.mxu0 0
    %3588 = vmatpush1.bf16.msra.mxu0 0
    %3589 = vmatprep.subr.bf16.mxu0 0
    %3590 = vmatpush1.bf16.msra.mxu0 0
    %3591 = vmatprep.subr.bf16.mxu0 0
    %3592 = vmatpush1.bf16.msra.mxu0 0
    %3593 = vmatprep.subr.bf16.mxu0 0
    %3594 = vmatpush1.bf16.msra.mxu0 0
    %3595 = vmatprep.subr.bf16.mxu0 0
    %3596 = vmatpush1.bf16.msra.mxu0 0
    %3597 = vmatprep.mubr.bf16.mxu0 0
    %3598 = vmatmul.mubr.bf16.gmra.mrb[0].mxu0 %v3500
    %v3599 = vpop.f32.mrb[0].mxu0
    %v3600 = vadd.f32 0.0, %v3599
    %v3601 = vpop.f32.mrb[0].mxu0
    %v3602 = vpop.f32.mrb[0].mxu0
    %v3603 = vpop.f32.mrb[0].mxu0
    %3604 = vdwg.mxu0
    %v3605 = vpack.c.bf16 %v3600, %v3600
    %v3606 = vld [vmem:[#allocation7] sm:$0xf]
    %v3607 = vld [vmem:[#allocation7 + $0x4] sm:$0xf]
    %v3608 = vld [vmem:[#allocation7 + $0x8] sm:$0xf]
    %v3609 = vld [vmem:[#allocation7 + $0xc] sm:$0xf]
    %v3610 = vld [vmem:[#allocation7 + $0x10] sm:$0xf]
    %v3611 = vld [vmem:[#allocation7 + $0x14] sm:$0xf]
    %v3612 = vld [vmem:[#allocation7 + $0x18] sm:$0xf]
    %v3613 = vld [vmem:[#allocation7 + $0x1c] sm:$0xf]
    %v3614 = vld [vmem:[#allocation7 + $0x20] sm:$0xf]
    %v3615 = vld [vmem:[#allocation7 + $0x24] sm:$0xf]
    %v3616 = vld [vmem:[#allocation7 + $0x28] sm:$0xf]
    %v3617 = vld [vmem:[#allocation7 + $0x2c] sm:$0xf]
    %v3618 = vld [vmem:[#allocation7 + $0x30] sm:$0xf]
    %v3619 = vld [vmem:[#allocation7 + $0x34] sm:$0xf]
    %v3620 = vld [vmem:[#allocation7 + $0x38] sm:$0xf]
    %v3621 = vld [vmem:[#allocation7 + $0x3c] sm:$0xf]
    %v3622 = vld [vmem:[#allocation7 + $0x40] sm:$0xf]
    %v3623 = vld [vmem:[#allocation7 + $0x44] sm:$0xf]
    %v3624 = vld [vmem:[#allocation7 + $0x48] sm:$0xf]
    %v3625 = vld [vmem:[#allocation7 + $0x4c] sm:$0xf]
    %v3626 = vld [vmem:[#allocation7 + $0x50] sm:$0xf]
    %v3627 = vld [vmem:[#allocation7 + $0x54] sm:$0xf]
    %v3628 = vld [vmem:[#allocation7 + $0x58] sm:$0xf]
    %v3629 = vld [vmem:[#allocation7 + $0x5c] sm:$0xf]
    %v3630 = vld [vmem:[#allocation7 + $0x60] sm:$0xf]
    %v3631 = vld [vmem:[#allocation7 + $0x64] sm:$0xf]
    %v3632 = vld [vmem:[#allocation7 + $0x68] sm:$0xf]
    %v3633 = vld [vmem:[#allocation7 + $0x6c] sm:$0xf]
    %v3634 = vld [vmem:[#allocation7 + $0x70] sm:$0xf]
    %v3635 = vld [vmem:[#allocation7 + $0x74] sm:$0xf]
    %v3636 = vld [vmem:[#allocation7 + $0x78] sm:$0xf]
    %v3637 = vld [vmem:[#allocation7 + $0x7c] sm:$0xf]
    %v3638 = vld [vmem:[%s6] sm:$0x1]
    %v3671 = vunpack.c.l.b16 %v3606
    %v3672 = vunpack.c.l.b16 %v3607
    %v3673 = vunpack.c.l.b16 %v3608
    %v3674 = vunpack.c.l.b16 %v3609
    %v3675 = vunpack.c.l.b16 %v3610
    %v3676 = vunpack.c.l.b16 %v3611
    %v3677 = vunpack.c.l.b16 %v3612
    %v3678 = vunpack.c.l.b16 %v3613
    %v3679 = vunpack.c.l.b16 %v3614
    %v3680 = vunpack.c.l.b16 %v3615
    %v3681 = vunpack.c.l.b16 %v3616
    %v3682 = vunpack.c.l.b16 %v3617
    %v3683 = vunpack.c.l.b16 %v3618
    %v3684 = vunpack.c.l.b16 %v3619
    %v3685 = vunpack.c.l.b16 %v3620
    %v3686 = vunpack.c.l.b16 %v3621
    %v3687 = vunpack.c.l.b16 %v3622
    %v3688 = vunpack.c.l.b16 %v3623
    %v3689 = vunpack.c.l.b16 %v3624
    %v3690 = vunpack.c.l.b16 %v3625
    %v3691 = vunpack.c.l.b16 %v3626
    %v3692 = vunpack.c.l.b16 %v3627
    %v3693 = vunpack.c.l.b16 %v3628
    %v3694 = vunpack.c.l.b16 %v3629
    %v3695 = vunpack.c.l.b16 %v3630
    %v3696 = vunpack.c.l.b16 %v3631
    %v3697 = vunpack.c.l.b16 %v3632
    %v3698 = vunpack.c.l.b16 %v3633
    %v3699 = vunpack.c.l.b16 %v3634
    %v3700 = vunpack.c.l.b16 %v3635
    %v3701 = vunpack.c.l.b16 %v3636
    %v3702 = vunpack.c.l.b16 %v3637
    %v3703 = vpack.c.b16 %v3672, %v3671
    %v3704 = vpack.c.b16 %v3674, %v3673
    %v3705 = vpack.c.b16 %v3676, %v3675
    %v3706 = vpack.c.b16 %v3678, %v3677
    %v3707 = vpack.c.b16 %v3680, %v3679
    %v3708 = vpack.c.b16 %v3682, %v3681
    %v3709 = vpack.c.b16 %v3684, %v3683
    %v3710 = vpack.c.b16 %v3686, %v3685
    %v3711 = vpack.c.b16 %v3688, %v3687
    %v3712 = vpack.c.b16 %v3690, %v3689
    %v3713 = vpack.c.b16 %v3692, %v3691
    %v3714 = vpack.c.b16 %v3694, %v3693
    %v3715 = vpack.c.b16 %v3696, %v3695
    %v3716 = vpack.c.b16 %v3698, %v3697
    %v3717 = vpack.c.b16 %v3700, %v3699
    %v3718 = vpack.c.b16 %v3702, %v3701
    %3735 = vmatprep.subr.bf16.mxu0 0
    %3736 = vmatpush1.bf16.msra.mxu0 %v3703
    %3737 = vmatprep.subr.bf16.mxu0 0
    %3738 = vmatpush1.bf16.msra.mxu0 %v3704
    %3739 = vmatprep.subr.bf16.mxu0 0
    %3740 = vmatpush1.bf16.msra.mxu0 %v3705
    %3741 = vmatprep.subr.bf16.mxu0 0
    %3742 = vmatpush1.bf16.msra.mxu0 %v3706
    %3743 = vmatprep.subr.bf16.mxu0 0
    %3744 = vmatpush1.bf16.msra.mxu0 %v3707
    %3745 = vmatprep.subr.bf16.mxu0 0
    %3746 = vmatpush1.bf16.msra.mxu0 %v3708
    %3747 = vmatprep.subr.bf16.mxu0 0
    %3748 = vmatpush1.bf16.msra.mxu0 %v3709
    %3749 = vmatprep.subr.bf16.mxu0 0
    %3750 = vmatpush1.bf16.msra.mxu0 %v3710
    %3751 = vmatprep.subr.bf16.mxu0 0
    %3752 = vmatpush1.bf16.msra.mxu0 %v3711
    %3753 = vmatprep.subr.bf16.mxu0 0
    %3754 = vmatpush1.bf16.msra.mxu0 %v3712
    %3755 = vmatprep.subr.bf16.mxu0 0
    %3756 = vmatpush1.bf16.msra.mxu0 %v3713
    %3757 = vmatprep.subr.bf16.mxu0 0
    %3758 = vmatpush1.bf16.msra.mxu0 %v3714
    %3759 = vmatprep.subr.bf16.mxu0 0
    %3760 = vmatpush1.bf16.msra.mxu0 %v3715
    %3761 = vmatprep.subr.bf16.mxu0 0
    %3762 = vmatpush1.bf16.msra.mxu0 %v3716
    %3763 = vmatprep.subr.bf16.mxu0 0
    %3764 = vmatpush1.bf16.msra.mxu0 %v3717
    %3765 = vmatprep.subr.bf16.mxu0 0
    %3766 = vmatpush1.bf16.msra.mxu0 %v3718
    %3767 = vmatprep.mubr.bf16.mxu0 %v3605
    %3768 = vmatmul.mubr.bf16.gmra.mrb[0].mxu0 %v3317
    %v3769 = vpop.f32.mrb[0].mxu0
    %v3770 = vadd.f32 %v3638, %v3769
    %v3771 = vpop.f32.mrb[0].mxu0
    %v3772 = vpop.f32.mrb[0].mxu0
    %v3773 = vpop.f32.mrb[0].mxu0
    %3774 = vdwg.mxu0
    %v3775 = vmax.f32 %v3770, 0.0
    %v3776 = vpack.c.bf16 %v3775, %v3775
    %v3777 = vld [vmem:[#allocation8] sm:$0xff]
    %v3778 = vld [vmem:[#allocation8 + $0x8] sm:$0xff]
    %v3779 = vld [vmem:[#allocation8 + $0x10] sm:$0xff]
    %v3780 = vld [vmem:[#allocation8 + $0x18] sm:$0xff]
    %v3781 = vld [vmem:[#allocation8 + $0x20] sm:$0xff]
    %v3782 = vld [vmem:[#allocation8 + $0x28] sm:$0xff]
    %v3783 = vld [vmem:[#allocation8 + $0x30] sm:$0xff]
    %v3784 = vld [vmem:[#allocation8 + $0x38] sm:$0xff]
    %v3785 = vld [vmem:[#allocation8 + $0x40] sm:$0xff]
    %v3786 = vld [vmem:[#allocation8 + $0x48] sm:$0xff]
    %v3787 = vld [vmem:[#allocation8 + $0x50] sm:$0xff]
    %v3788 = vld [vmem:[#allocation8 + $0x58] sm:$0xff]
    %v3789 = vld [vmem:[#allocation8 + $0x60] sm:$0xff]
    %v3790 = vld [vmem:[#allocation8 + $0x68] sm:$0xff]
    %v3791 = vld [vmem:[#allocation8 + $0x70] sm:$0xff]
    %v3792 = vld [vmem:[#allocation8 + $0x78] sm:$0xff]
    %v3793 = vld [vmem:[#allocation8 + $0x80] sm:$0xff]
    %v3794 = vld [vmem:[#allocation8 + $0x88] sm:$0xff]
    %v3795 = vld [vmem:[#allocation8 + $0x90] sm:$0xff]
    %v3796 = vld [vmem:[#allocation8 + $0x98] sm:$0xff]
    %v3797 = vld [vmem:[#allocation8 + $0xa0] sm:$0xff]
    %v3798 = vld [vmem:[#allocation8 + $0xa8] sm:$0xff]
    %v3799 = vld [vmem:[#allocation8 + $0xb0] sm:$0xff]
    %v3800 = vld [vmem:[#allocation8 + $0xb8] sm:$0xff]
    %v3801 = vld [vmem:[#allocation8 + $0xc0] sm:$0xff]
    %v3802 = vld [vmem:[#allocation8 + $0xc8] sm:$0xff]
    %v3803 = vld [vmem:[#allocation8 + $0xd0] sm:$0xff]
    %v3804 = vld [vmem:[#allocation8 + $0xd8] sm:$0xff]
    %v3805 = vld [vmem:[#allocation8 + $0xe0] sm:$0xff]
    %v3806 = vld [vmem:[#allocation8 + $0xe8] sm:$0xff]
    %v3807 = vld [vmem:[#allocation8 + $0xf0] sm:$0xff]
    %v3808 = vld [vmem:[#allocation8 + $0xf8] sm:$0xff]
    %v3809 = vld [vmem:[%s8] sm:$0x3]
    %v3842 = vunpack.c.l.b16 %v3777
    %v3843 = vunpack.c.h.b16 %v3777
    %v3844 = vunpack.c.l.b16 %v3778
    %v3845 = vunpack.c.h.b16 %v3778
    %v3846 = vunpack.c.l.b16 %v3779
    %v3847 = vunpack.c.h.b16 %v3779
    %v3848 = vunpack.c.l.b16 %v3780
    %v3849 = vunpack.c.h.b16 %v3780
    %v3850 = vunpack.c.l.b16 %v3781
    %v3851 = vunpack.c.h.b16 %v3781
    %v3852 = vunpack.c.l.b16 %v3782
    %v3853 = vunpack.c.h.b16 %v3782
    %v3854 = vunpack.c.l.b16 %v3783
    %v3855 = vunpack.c.h.b16 %v3783
    %v3856 = vunpack.c.l.b16 %v3784
    %v3857 = vunpack.c.h.b16 %v3784
    %v3858 = vunpack.c.l.b16 %v3785
    %v3859 = vunpack.c.h.b16 %v3785
    %v3860 = vunpack.c.l.b16 %v3786
    %v3861 = vunpack.c.h.b16 %v3786
    %v3862 = vunpack.c.l.b16 %v3787
    %v3863 = vunpack.c.h.b16 %v3787
    %v3864 = vunpack.c.l.b16 %v3788
    %v3865 = vunpack.c.h.b16 %v3788
    %v3866 = vunpack.c.l.b16 %v3789
    %v3867 = vunpack.c.h.b16 %v3789
    %v3868 = vunpack.c.l.b16 %v3790
    %v3869 = vunpack.c.h.b16 %v3790
    %v3870 = vunpack.c.l.b16 %v3791
    %v3871 = vunpack.c.h.b16 %v3791
    %v3872 = vunpack.c.l.b16 %v3792
    %v3873 = vunpack.c.h.b16 %v3792
    %v3874 = vunpack.c.l.b16 %v3793
    %v3875 = vunpack.c.h.b16 %v3793
    %v3876 = vunpack.c.l.b16 %v3794
    %v3877 = vunpack.c.h.b16 %v3794
    %v3878 = vunpack.c.l.b16 %v3795
    %v3879 = vunpack.c.h.b16 %v3795
    %v3880 = vunpack.c.l.b16 %v3796
    %v3881 = vunpack.c.h.b16 %v3796
    %v3882 = vunpack.c.l.b16 %v3797
    %v3883 = vunpack.c.h.b16 %v3797
    %v3884 = vunpack.c.l.b16 %v3798
    %v3885 = vunpack.c.h.b16 %v3798
    %v3886 = vunpack.c.l.b16 %v3799
    %v3887 = vunpack.c.h.b16 %v3799
    %v3888 = vunpack.c.l.b16 %v3800
    %v3889 = vunpack.c.h.b16 %v3800
    %v3890 = vunpack.c.l.b16 %v3801
    %v3891 = vunpack.c.h.b16 %v3801
    %v3892 = vunpack.c.l.b16 %v3802
    %v3893 = vunpack.c.h.b16 %v3802
    %v3894 = vunpack.c.l.b16 %v3803
    %v3895 = vunpack.c.h.b16 %v3803
    %v3896 = vunpack.c.l.b16 %v3804
    %v3897 = vunpack.c.h.b16 %v3804
    %v3898 = vunpack.c.l.b16 %v3805
    %v3899 = vunpack.c.h.b16 %v3805
    %v3900 = vunpack.c.l.b16 %v3806
    %v3901 = vunpack.c.h.b16 %v3806
    %v3902 = vunpack.c.l.b16 %v3807
    %v3903 = vunpack.c.h.b16 %v3807
    %v3904 = vunpack.c.l.b16 %v3808
    %v3905 = vunpack.c.h.b16 %v3808
    %v3906 = vpack.c.b16 %v3844, %v3842
    %v3907 = vpack.c.b16 %v3845, %v3843
    %v3908 = vpack.c.b16 %v3848, %v3846
    %v3909 = vpack.c.b16 %v3849, %v3847
    %v3910 = vpack.c.b16 %v3852, %v3850
    %v3911 = vpack.c.b16 %v3853, %v3851
    %v3912 = vpack.c.b16 %v3856, %v3854
    %v3913 = vpack.c.b16 %v3857, %v3855
    %v3914 = vpack.c.b16 %v3860, %v3858
    %v3915 = vpack.c.b16 %v3861, %v3859
    %v3916 = vpack.c.b16 %v3864, %v3862
    %v3917 = vpack.c.b16 %v3865, %v3863
    %v3918 = vpack.c.b16 %v3868, %v3866
    %v3919 = vpack.c.b16 %v3869, %v3867
    %v3920 = vpack.c.b16 %v3872, %v3870
    %v3921 = vpack.c.b16 %v3873, %v3871
    %v3922 = vpack.c.b16 %v3876, %v3874
    %v3923 = vpack.c.b16 %v3877, %v3875
    %v3924 = vpack.c.b16 %v3880, %v3878
    %v3925 = vpack.c.b16 %v3881, %v3879
    %v3926 = vpack.c.b16 %v3884, %v3882
    %v3927 = vpack.c.b16 %v3885, %v3883
    %v3928 = vpack.c.b16 %v3888, %v3886
    %v3929 = vpack.c.b16 %v3889, %v3887
    %v3930 = vpack.c.b16 %v3892, %v3890
    %v3931 = vpack.c.b16 %v3893, %v3891
    %v3932 = vpack.c.b16 %v3896, %v3894
    %v3933 = vpack.c.b16 %v3897, %v3895
    %v3934 = vpack.c.b16 %v3900, %v3898
    %v3935 = vpack.c.b16 %v3901, %v3899
    %v3936 = vpack.c.b16 %v3904, %v3902
    %v3937 = vpack.c.b16 %v3905, %v3903
    %v3971 = vlaneseq
    %v3972 = vshrl.u32 %v3971, 7
    %v3973 = vsub.s32 0, %v3972
    %v3974 = vrot.slane %v3809, %v3973
    %v3975 = vlaneseq
    %v3976 = vshrl.u32 %v3975, 7
    %v3977 = vsub.s32 1, %v3976
    %v3978 = vrot.slane %v3809, %v3977
    %3981 = vmatprep.subr.bf16.mxu0 %v3907
    %3982 = vmatpush1.bf16.msra.mxu0 %v3906
    %3983 = vmatprep.subr.bf16.mxu0 %v3909
    %3984 = vmatpush1.bf16.msra.mxu0 %v3908
    %3985 = vmatprep.subr.bf16.mxu0 %v3911
    %3986 = vmatpush1.bf16.msra.mxu0 %v3910
    %3987 = vmatprep.subr.bf16.mxu0 %v3913
    %3988 = vmatpush1.bf16.msra.mxu0 %v3912
    %3989 = vmatprep.subr.bf16.mxu0 %v3915
    %3990 = vmatpush1.bf16.msra.mxu0 %v3914
    %3991 = vmatprep.subr.bf16.mxu0 %v3917
    %3992 = vmatpush1.bf16.msra.mxu0 %v3916
    %3993 = vmatprep.subr.bf16.mxu0 %v3919
    %3994 = vmatpush1.bf16.msra.mxu0 %v3918
    %3995 = vmatprep.subr.bf16.mxu0 %v3921
    %3996 = vmatpush1.bf16.msra.mxu0 %v3920
    %3997 = vmatprep.subr.bf16.mxu0 %v3923
    %3998 = vmatpush1.bf16.msra.mxu0 %v3922
    %3999 = vmatprep.subr.bf16.mxu0 %v3925
    %4000 = vmatpush1.bf16.msra.mxu0 %v3924
    %4001 = vmatprep.subr.bf16.mxu0 %v3927
    %4002 = vmatpush1.bf16.msra.mxu0 %v3926
    %4003 = vmatprep.subr.bf16.mxu0 %v3929
    %4004 = vmatpush1.bf16.msra.mxu0 %v3928
    %4005 = vmatprep.subr.bf16.mxu0 %v3931
    %4006 = vmatpush1.bf16.msra.mxu0 %v3930
    %4007 = vmatprep.subr.bf16.mxu0 %v3933
    %4008 = vmatpush1.bf16.msra.mxu0 %v3932
    %4009 = vmatprep.subr.bf16.mxu0 %v3935
    %4010 = vmatpush1.bf16.msra.mxu0 %v3934
    %4011 = vmatprep.subr.bf16.mxu0 %v3937
    %4012 = vmatpush1.bf16.msra.mxu0 %v3936
    %4013 = vmatprep.mubr.bf16.mxu0 %v3196
    %4014 = vmatmul.mubr.bf16.gmra.mrb[0].mxu0 %v3776
    %v4015 = vpop.f32.mrb[0].mxu0
    %v4016 = vadd.f32 %v3974, %v4015
    %v4017 = vpop.f32.mrb[0].mxu0
    %v4018 = vadd.f32 %v3978, %v4017
    %v4019 = vpop.f32.mrb[0].mxu0
    %v4020 = vpop.f32.mrb[0].mxu0
    %4021 = vdwg.mxu0
    %v4022 = vxor.u32 %v4016, 2147483648
    %v4023 = vmul.f32 %v4022, 1.442695
    %v4024 = vpow.pop %v4023
    %v4025 = vadd.f32 %v4024, 1.0
    %v4026 = vrcp.pop %v4025
    %v4027 = vmul.f32 1.0, %v4026
    %v4028 = vxor.u32 %v4018, 2147483648
    %v4029 = vmul.f32 %v4028, 1.442695
    %v4030 = vpow.pop %v4029
    %v4031 = vadd.f32 %v4030, 1.0
    %v4032 = vrcp.pop %v4031
    %v4033 = vmul.f32 1.0, %v4032
    %v4034 = vld [vmem:[#allocation10] sm:$0xf]
    %v4035 = vld [vmem:[#allocation10 + $0x4] sm:$0xf]
    %v4036 = vld [vmem:[#allocation10 + $0x8] sm:$0xf]
    %v4037 = vld [vmem:[#allocation10 + $0xc] sm:$0xf]
    %v4038 = vld [vmem:[#allocation10 + $0x10] sm:$0xf]
    %v4039 = vld [vmem:[#allocation10 + $0x14] sm:$0xf]
    %v4040 = vld [vmem:[#allocation10 + $0x18] sm:$0xf]
    %v4041 = vld [vmem:[#allocation10 + $0x1c] sm:$0xf]
    %v4042 = vld [vmem:[#allocation10 + $0x20] sm:$0xf]
    %v4043 = vld [vmem:[#allocation10 + $0x24] sm:$0xf]
    %v4044 = vld [vmem:[#allocation10 + $0x28] sm:$0xf]
    %v4045 = vld [vmem:[#allocation10 + $0x2c] sm:$0xf]
    %v4046 = vld [vmem:[#allocation10 + $0x30] sm:$0xf]
    %v4047 = vld [vmem:[#allocation10 + $0x34] sm:$0xf]
    %v4048 = vld [vmem:[#allocation10 + $0x38] sm:$0xf]
    %v4049 = vld [vmem:[#allocation10 + $0x3c] sm:$0xf]
    %v4050 = vld [vmem:[%s10] sm:$0x1]
    %v4067 = vunpack.c.l.b16 %v4034
    %v4068 = vunpack.c.l.b16 %v4035
    %v4069 = vunpack.c.l.b16 %v4036
    %v4070 = vunpack.c.l.b16 %v4037
    %v4071 = vunpack.c.l.b16 %v4038
    %v4072 = vunpack.c.l.b16 %v4039
    %v4073 = vunpack.c.l.b16 %v4040
    %v4074 = vunpack.c.l.b16 %v4041
    %v4075 = vunpack.c.l.b16 %v4042
    %v4076 = vunpack.c.l.b16 %v4043
    %v4077 = vunpack.c.l.b16 %v4044
    %v4078 = vunpack.c.l.b16 %v4045
    %v4079 = vunpack.c.l.b16 %v4046
    %v4080 = vunpack.c.l.b16 %v4047
    %v4081 = vunpack.c.l.b16 %v4048
    %v4082 = vunpack.c.l.b16 %v4049
    %v4083 = vpack.c.b16 %v4068, %v4067
    %v4084 = vpack.c.b16 %v4070, %v4069
    %v4085 = vpack.c.b16 %v4072, %v4071
    %v4086 = vpack.c.b16 %v4074, %v4073
    %v4087 = vpack.c.b16 %v4076, %v4075
    %v4088 = vpack.c.b16 %v4078, %v4077
    %v4089 = vpack.c.b16 %v4080, %v4079
    %v4090 = vpack.c.b16 %v4082, %v4081
    %4099 = vmatprep.subr.bf16.mxu0 0
    %4100 = vmatpush1.bf16.msra.mxu0 %v4083
    %4101 = vmatprep.subr.bf16.mxu0 0
    %4102 = vmatpush1.bf16.msra.mxu0 %v4084
    %4103 = vmatprep.subr.bf16.mxu0 0
    %4104 = vmatpush1.bf16.msra.mxu0 %v4085
    %4105 = vmatprep.subr.bf16.mxu0 0
    %4106 = vmatpush1.bf16.msra.mxu0 %v4086
    %4107 = vmatprep.subr.bf16.mxu0 0
    %4108 = vmatpush1.bf16.msra.mxu0 %v4087
    %4109 = vmatprep.subr.bf16.mxu0 0
    %4110 = vmatpush1.bf16.msra.mxu0 %v4088
    %4111 = vmatprep.subr.bf16.mxu0 0
    %4112 = vmatpush1.bf16.msra.mxu0 %v4089
    %4113 = vmatprep.subr.bf16.mxu0 0
    %4114 = vmatpush1.bf16.msra.mxu0 %v4090
    %4115 = vmatprep.subr.bf16.mxu0 0
    %4116 = vmatpush1.bf16.msra.mxu0 0
    %4117 = vmatprep.subr.bf16.mxu0 0
    %4118 = vmatpush1.bf16.msra.mxu0 0
    %4119 = vmatprep.subr.bf16.mxu0 0
    %4120 = vmatpush1.bf16.msra.mxu0 0
    %4121 = vmatprep.subr.bf16.mxu0 0
    %4122 = vmatpush1.bf16.msra.mxu0 0
    %4123 = vmatprep.subr.bf16.mxu0 0
    %4124 = vmatpush1.bf16.msra.mxu0 0
    %4125 = vmatprep.subr.bf16.mxu0 0
    %4126 = vmatpush1.bf16.msra.mxu0 0
    %4127 = vmatprep.subr.bf16.mxu0 0
    %4128 = vmatpush1.bf16.msra.mxu0 0
    %4129 = vmatprep.subr.bf16.mxu0 0
    %4130 = vmatpush1.bf16.msra.mxu0 0
    %4131 = vmatprep.mubr.bf16.mxu0 0
    %4132 = vmatmul.mubr.bf16.gmra.mrb[0].mxu0 %v3776
    %v4133 = vpop.f32.mrb[0].mxu0
    %v4134 = vadd.f32 %v4050, %v4133
    %v4135 = vpop.f32.mrb[0].mxu0
    %v4136 = vpop.f32.mrb[0].mxu0
    %v4137 = vpop.f32.mrb[0].mxu0
    %4138 = vdwg.mxu0
    %v4139 = vld [vmem:[#allocation11] sm:$0xf]
    %v4140 = vld [vmem:[#allocation11 + $0x4] sm:$0xf]
    %v4141 = vld [vmem:[#allocation11 + $0x8] sm:$0xf]
    %v4142 = vld [vmem:[#allocation11 + $0xc] sm:$0xf]
    %v4143 = vld [vmem:[#allocation11 + $0x10] sm:$0xf]
    %v4144 = vld [vmem:[#allocation11 + $0x14] sm:$0xf]
    %v4145 = vld [vmem:[#allocation11 + $0x18] sm:$0xf]
    %v4146 = vld [vmem:[#allocation11 + $0x1c] sm:$0xf]
    %v4147 = vld [vmem:[#allocation11 + $0x20] sm:$0xf]
    %v4148 = vld [vmem:[#allocation11 + $0x24] sm:$0xf]
    %v4149 = vld [vmem:[#allocation11 + $0x28] sm:$0xf]
    %v4150 = vld [vmem:[#allocation11 + $0x2c] sm:$0xf]
    %v4151 = vld [vmem:[#allocation11 + $0x30] sm:$0xf]
    %v4152 = vld [vmem:[#allocation11 + $0x34] sm:$0xf]
    %v4153 = vld [vmem:[#allocation11 + $0x38] sm:$0xf]
    %v4154 = vld [vmem:[#allocation11 + $0x3c] sm:$0xf]
    %v4155 = vld [vmem:[%s12] sm:$0x1]
    %v4172 = vunpack.c.l.b16 %v4139
    %v4173 = vunpack.c.l.b16 %v4140
    %v4174 = vunpack.c.l.b16 %v4141
    %v4175 = vunpack.c.l.b16 %v4142
    %v4176 = vunpack.c.l.b16 %v4143
    %v4177 = vunpack.c.l.b16 %v4144
    %v4178 = vunpack.c.l.b16 %v4145
    %v4179 = vunpack.c.l.b16 %v4146
    %v4180 = vunpack.c.l.b16 %v4147
    %v4181 = vunpack.c.l.b16 %v4148
    %v4182 = vunpack.c.l.b16 %v4149
    %v4183 = vunpack.c.l.b16 %v4150
    %v4184 = vunpack.c.l.b16 %v4151
    %v4185 = vunpack.c.l.b16 %v4152
    %v4186 = vunpack.c.l.b16 %v4153
    %v4187 = vunpack.c.l.b16 %v4154
    %v4188 = vpack.c.b16 %v4173, %v4172
    %v4189 = vpack.c.b16 %v4175, %v4174
    %v4190 = vpack.c.b16 %v4177, %v4176
    %v4191 = vpack.c.b16 %v4179, %v4178
    %v4192 = vpack.c.b16 %v4181, %v4180
    %v4193 = vpack.c.b16 %v4183, %v4182
    %v4194 = vpack.c.b16 %v4185, %v4184
    %v4195 = vpack.c.b16 %v4187, %v4186
    %4204 = vmatprep.subr.bf16.mxu0 0
    %4205 = vmatpush1.bf16.msra.mxu0 %v4188
    %4206 = vmatprep.subr.bf16.mxu0 0
    %4207 = vmatpush1.bf16.msra.mxu0 %v4189
    %4208 = vmatprep.subr.bf16.mxu0 0
    %4209 = vmatpush1.bf16.msra.mxu0 %v4190
    %4210 = vmatprep.subr.bf16.mxu0 0
    %4211 = vmatpush1.bf16.msra.mxu0 %v4191
    %4212 = vmatprep.subr.bf16.mxu0 0
    %4213 = vmatpush1.bf16.msra.mxu0 %v4192
    %4214 = vmatprep.subr.bf16.mxu0 0
    %4215 = vmatpush1.bf16.msra.mxu0 %v4193
    %4216 = vmatprep.subr.bf16.mxu0 0
    %4217 = vmatpush1.bf16.msra.mxu0 %v4194
    %4218 = vmatprep.subr.bf16.mxu0 0
    %4219 = vmatpush1.bf16.msra.mxu0 %v4195
    %4220 = vmatprep.subr.bf16.mxu0 0
    %4221 = vmatpush1.bf16.msra.mxu0 0
    %4222 = vmatprep.subr.bf16.mxu0 0
    %4223 = vmatpush1.bf16.msra.mxu0 0
    %4224 = vmatprep.subr.bf16.mxu0 0
    %4225 = vmatpush1.bf16.msra.mxu0 0
    %4226 = vmatprep.subr.bf16.mxu0 0
    %4227 = vmatpush1.bf16.msra.mxu0 0
    %4228 = vmatprep.subr.bf16.mxu0 0
    %4229 = vmatpush1.bf16.msra.mxu0 0
    %4230 = vmatprep.subr.bf16.mxu0 0
    %4231 = vmatpush1.bf16.msra.mxu0 0
    %4232 = vmatprep.subr.bf16.mxu0 0
    %4233 = vmatpush1.bf16.msra.mxu0 0
    %4234 = vmatprep.subr.bf16.mxu0 0
    %4235 = vmatpush1.bf16.msra.mxu0 0
    %4236 = vmatprep.mubr.bf16.mxu0 0
    %4237 = vmatmul.mubr.bf16.gmra.mrb[0].mxu0 %v3196
    %v4238 = vpop.f32.mrb[0].mxu0
    %v4239 = vadd.f32 %v4155, %v4238
    %v4240 = vpop.f32.mrb[0].mxu0
    %v4241 = vpop.f32.mrb[0].mxu0
    %v4242 = vpop.f32.mrb[0].mxu0
    %4243 = vdwg.mxu0
    %v4244 = vmul.f32 %v4027, %v4239
    %v4245 = vadd.f32 %v4134, %v4244
    %v4246 = vtanh.pop %v4245
    %v4247 = vsub.f32 1.0, %v4033
    %v4248 = vmul.f32 %v4247, %v4246
    %v4249 = vmul.f32 %v4033, %v3195
    %v4250 = vadd.f32 %v4248, %v4249
    %v4251 = vpack.c.bf16 %v4250, %v4250
    %v4252 = vld [vmem:[#allocation13] sm:$0xf]
    %v4253 = vld [vmem:[#allocation13 + $0x4] sm:$0xf]
    %v4254 = vld [vmem:[#allocation13 + $0x8] sm:$0xf]
    %v4255 = vld [vmem:[#allocation13 + $0xc] sm:$0xf]
    %v4256 = vld [vmem:[#allocation13 + $0x10] sm:$0xf]
    %v4257 = vld [vmem:[#allocation13 + $0x14] sm:$0xf]
    %v4258 = vld [vmem:[#allocation13 + $0x18] sm:$0xf]
    %v4259 = vld [vmem:[#allocation13 + $0x1c] sm:$0xf]
    %v4260 = vld [vmem:[#allocation13 + $0x20] sm:$0xf]
    %v4261 = vld [vmem:[#allocation13 + $0x24] sm:$0xf]
    %v4262 = vld [vmem:[#allocation13 + $0x28] sm:$0xf]
    %v4263 = vld [vmem:[#allocation13 + $0x2c] sm:$0xf]
    %v4264 = vld [vmem:[#allocation13 + $0x30] sm:$0xf]
    %v4265 = vld [vmem:[#allocation13 + $0x34] sm:$0xf]
    %v4266 = vld [vmem:[#allocation13 + $0x38] sm:$0xf]
    %v4267 = vld [vmem:[#allocation13 + $0x3c] sm:$0xf]
    %v4268 = vld [vmem:[%s14] sm:$0x1]
    %v4285 = vunpack.c.l.b16 %v4252
    %v4286 = vunpack.c.l.b16 %v4253
    %v4287 = vunpack.c.l.b16 %v4254
    %v4288 = vunpack.c.l.b16 %v4255
    %v4289 = vunpack.c.l.b16 %v4256
    %v4290 = vunpack.c.l.b16 %v4257
    %v4291 = vunpack.c.l.b16 %v4258
    %v4292 = vunpack.c.l.b16 %v4259
    %v4293 = vunpack.c.l.b16 %v4260
    %v4294 = vunpack.c.l.b16 %v4261
    %v4295 = vunpack.c.l.b16 %v4262
    %v4296 = vunpack.c.l.b16 %v4263
    %v4297 = vunpack.c.l.b16 %v4264
    %v4298 = vunpack.c.l.b16 %v4265
    %v4299 = vunpack.c.l.b16 %v4266
    %v4300 = vunpack.c.l.b16 %v4267
    %v4301 = vpack.c.b16 %v4286, %v4285
    %v4302 = vpack.c.b16 %v4288, %v4287
    %v4303 = vpack.c.b16 %v4290, %v4289
    %v4304 = vpack.c.b16 %v4292, %v4291
    %v4305 = vpack.c.b16 %v4294, %v4293
    %v4306 = vpack.c.b16 %v4296, %v4295
    %v4307 = vpack.c.b16 %v4298, %v4297
    %v4308 = vpack.c.b16 %v4300, %v4299
    %4317 = vmatprep.subr.bf16.mxu0 0
    %4318 = vmatpush1.bf16.msra.mxu0 %v4301
    %4319 = vmatprep.subr.bf16.mxu0 0
    %4320 = vmatpush1.bf16.msra.mxu0 %v4302
    %4321 = vmatprep.subr.bf16.mxu0 0
    %4322 = vmatpush1.bf16.msra.mxu0 %v4303
    %4323 = vmatprep.subr.bf16.mxu0 0
    %4324 = vmatpush1.bf16.msra.mxu0 %v4304
    %4325 = vmatprep.subr.bf16.mxu0 0
    %4326 = vmatpush1.bf16.msra.mxu0 %v4305
    %4327 = vmatprep.subr.bf16.mxu0 0
    %4328 = vmatpush1.bf16.msra.mxu0 %v4306
    %4329 = vmatprep.subr.bf16.mxu0 0
    %4330 = vmatpush1.bf16.msra.mxu0 %v4307
    %4331 = vmatprep.subr.bf16.mxu0 0
    %4332 = vmatpush1.bf16.msra.mxu0 %v4308
    %4333 = vmatprep.subr.bf16.mxu0 0
    %4334 = vmatpush1.bf16.msra.mxu0 0
    %4335 = vmatprep.subr.bf16.mxu0 0
    %4336 = vmatpush1.bf16.msra.mxu0 0
    %4337 = vmatprep.subr.bf16.mxu0 0
    %4338 = vmatpush1.bf16.msra.mxu0 0
    %4339 = vmatprep.subr.bf16.mxu0 0
    %4340 = vmatpush1.bf16.msra.mxu0 0
    %4341 = vmatprep.subr.bf16.mxu0 0
    %4342 = vmatpush1.bf16.msra.mxu0 0
    %4343 = vmatprep.subr.bf16.mxu0 0
    %4344 = vmatpush1.bf16.msra.mxu0 0
    %4345 = vmatprep.subr.bf16.mxu0 0
    %4346 = vmatpush1.bf16.msra.mxu0 0
    %4347 = vmatprep.subr.bf16.mxu0 0
    %4348 = vmatpush1.bf16.msra.mxu0 0
    %4349 = vmatprep.mubr.bf16.mxu0 0
    %4350 = vmatmul.mubr.bf16.gmra.mrb[0].mxu0 %v4251
    %v4351 = vpop.f32.mrb[0].mxu0
    %v4352 = vadd.f32 %v4268, %v4351
    %v4353 = vpop.f32.mrb[0].mxu0
    %v4354 = vpop.f32.mrb[0].mxu0
    %v4355 = vpop.f32.mrb[0].mxu0
    %4356 = vdwg.mxu0
    %v4357 = vsel %vm323, %v4352, -inf
    %4358 = vmax.xlane.f32.xlu0 %v4357
    %v4359 = vpop.xlane.xlu0 %4358
    %v4360 = vsub.f32 %v4352, %v4359
    %v4361 = vmul.f32 %v4360, 1.442695
    %v4362 = vpow.pop %v4361
    %v4363 = vsel %vm323, %v4362, 0.0
    %4364 = vadd.xlane.f32.xlu0 %v4363
    %v4365 = vpop.xlane.xlu0 %4364
    %v4366 = vlog2.pop %v4365
    %v4367 = vmul.f32 %v4366, 0.6931472
    %v4368 = vsub.f32 %v4360, %v4367
    %s4369 = scalar_lea.vmem [#allocation14], 3
    %4370 = vst [vmem:[%s4369] sm:$0x1] %v4368
    %4371 = vst [vmem:[#allocation15] sm:$0x1] %v4250
    // Predicated region
    $region90: #{tpu_custom_call.1} parent=1 // pred_check
      _
    $region91: #{tpu_custom_call.1} parent=1 // pred_check_branch
      %4373 = sbr.rel (0) target = $region93
    $region92: #{tpu_custom_call.1} parent=1 // pred_region
      %s4375 = ssub.s32 64, 64
      %4376 = vsyncadd [#allocation4], %s4375
      %s4377 = sshll.u32 [#allocation14], 4
      %s4378 = int_to_ptr.vmem [resolvable:$true] %s4377
      %4383 = dma.vmem_to_hbm [thread:$0]  %s4378, 64, %s15, [#allocation4], 16, 16, 1
    $region93: #{tpu_custom_call.1} parent=1 // pred_fallthru
      _
    // Predicated region
    $region94: #{tpu_custom_call.1} parent=1 // pred_check
      _
    $region95: #{tpu_custom_call.1} parent=1 // pred_check_branch
      %4385 = sbr.rel (0) target = $region97
    $region96: #{tpu_custom_call.1} parent=1 // pred_region
      %s4387 = ssub.s32 16, 16
      %4388 = vsyncadd [#allocation16], %s4387
      %s4390 = sshll.u32 [#allocation15], 4
      %s4391 = int_to_ptr.vmem [resolvable:$true] %s4390
      %4393 = dma.vmem_to_hbm [thread:$0]  %s4391, 16, %s16, [#allocation16]
    $region97: #{tpu_custom_call.1} parent=1 // pred_fallthru
      _
    // Predicated region
    $region98: #{tpu_custom_call.1} parent=1 // pred_check
      _
    $region99: #{tpu_custom_call.1} parent=1 // pred_check_branch
      %4395 = sbr.rel (0) target = $region101
    $region100: #{tpu_custom_call.1} parent=1 // pred_region
      %s4397 = ssub.s32 64, 64
      %4398 = vsyncadd [#allocation16], %s4397
      %s4399 = sshll.u32 [#allocation17], 4
      %s4400 = int_to_ptr.vmem [resolvable:$true] %s4399
      %4405 = dma.vmem_to_hbm [thread:$0]  %s4400, 64, %s17, [#allocation16], 16, 16, 1
    $region101: #{tpu_custom_call.1} parent=1 // pred_fallthru
      _
    // Predicated region
    $region102: #{tpu_custom_call.1} parent=1 // pred_check
      _
    $region103: #{tpu_custom_call.1} parent=1 // pred_check_branch
      %4407 = sbr.rel (0) target = $region105
    $region104: #{tpu_custom_call.1} parent=1 // pred_region
      %4408 = dma.done [#allocation4], 64
    $region105: #{tpu_custom_call.1} parent=1 // pred_fallthru
      _
    // Predicated region
    $region106: #{tpu_custom_call.1} parent=1 // pred_check
      _
    $region107: #{tpu_custom_call.1} parent=1 // pred_check_branch
      %4410 = sbr.rel (0) target = $region109
    $region108: #{tpu_custom_call.1} parent=1 // pred_region
      %4411 = dma.done [#allocation16], 16
    $region109: #{tpu_custom_call.1} parent=1 // pred_fallthru
      _
    // Predicated region
    $region110: #{tpu_custom_call.1} parent=1 // pred_check
      _
    $region111: #{tpu_custom_call.1} parent=1 // pred_check_branch
      %4413 = sbr.rel (0) target = $region113
    $region112: #{tpu_custom_call.1} parent=1 // pred_region
      %4414 = dma.done [#allocation16], 64
    $region113: #{tpu_custom_call.1} parent=1 // pred_fallthru
      _
    %4415 = vsyncpa [#allocation3], 1
    %4416 = vsyncpa [#allocation6], 1
    %4417 = vsyncpa [#allocation9], 1
    %4418 = vsyncpa [#allocation12], 1
    %4419 = vsyncpa [#allocation4], 1
    %4420 = vsyncpa [#allocation16], 1

</llo_original>
